<compile_context>
chip_gen: v7x
topology: tpu7x:2x2x1
jax: 0.10.0
libtpu: 0.0.40
codegen_flags: <defaults>
</compile_context>

<pallas_src>
import jax
import jax.numpy as jnp
import numpy as np
from jax.experimental import pallas as pl
from jax.experimental.pallas import tpu as pltpu

LAYER_NB = 6
SUBLAYER_NB = 4
BN_EPS = 1e-5
_LANES = 128  # lane width of every packed weight / bias / activation buffer


# ============================================================================
# Host-side (build-time) weight packing: every conv becomes one MXU matrix.
# ============================================================================
def _toeplitz_np(w_oihw, w_in, stride, pad, bn_scale, col_perm=None):
    """Lane-space Toeplitz matrix [k*_LANES, wo*cout]: the W taps, W zero padding,
    output-W stride and the BN scale are folded in.  Row block kh (height _LANES,
    zero past w_in*cin) corresponds to H-tap kh, so the kernel feeds k lane-concatenated
    128-wide row-shifted input slabs straight into one matmul."""
    wt = np.asarray(w_oihw, np.float32)                      # [cout, cin, k, k]
    cout, cin, k, _ = wt.shape
    assert w_in * cin <= _LANES
    wo = (w_in + 2 * pad - k) // stride + 1
    B = np.zeros((k, _LANES, wo * cout), np.float32)
    for kh in range(k):
        for o in range(wo):
            for kw in range(k):
                wi = stride * o - pad + kw
                if 0 <= wi < w_in:
                    B[kh, wi * cin:(wi + 1) * cin, o * cout:(o + 1) * cout] = wt[:, :, kh, kw].T
    B *= np.tile(np.asarray(bn_scale, np.float32), wo)[None, None, :]
    B = B.reshape(k * _LANES, wo * cout)
    if col_perm is not None:
        B = B[:, col_perm]
    return B, wo


def _bias_np(bn_shift, wo, col_perm=None):
    b = np.tile(np.asarray(bn_shift, np.float32), wo)
    if col_perm is not None:
        b = b[col_perm]
    return b


class _WeightPacker:
    """All Toeplitz matrices go into ONE bf16 [R,128] buffer and all BN-shift rows into
    ONE f32 [NB,128] buffer; the kernel gets 2 weight inputs instead of ~25 tiny ones."""

    def __init__(self):
        self._mats, self._biases, self._rows = [], [], 0

    def add(self, B, bias):
        rows, cols = B.shape
        assert rows % _LANES == 0 and cols <= _LANES
        buf = np.zeros((rows, _LANES), np.float32)
        buf[:, :cols] = B
        off = self._rows
        self._mats.append(buf)
        self._rows += rows
        brow = np.zeros((_LANES,), np.float32)
        brow[:cols] = bias
        self._biases.append(brow)
        return off, len(self._biases) - 1

    def finalize(self):
        return (jnp.asarray(np.concatenate(self._mats, 0), jnp.bfloat16),
                jnp.asarray(np.stack(self._biases, 0), jnp.float32))


def prepare_pallas_config(features, n, h, w, cin):
    """Walk the truncated child list, fold BN into every conv, permute the stem output
    columns for the half/half maxpool, and pack everything into two big buffers."""
    kinds = [k for k, _ in features]
    assert kinds[:4] == ["conv", "bn", "relu", "maxpool"], kinds[:4]
    packer = _WeightPacker()

    # --- stem: conv 3x3/s2/p1 + BN + ReLU + maxpool 2x2/s2 ---
    w_stem = features[0][1]
    bn_scale, bn_shift = features[1][1]
    cout = int(w_stem.shape[0])
    hc, wc = (h - 1) // 2 + 1, (w - 1) // 2 + 1
    assert hc % 2 == 0 and wc % 2 == 0
    hp, wp = hc // 2, wc // 2
    # Permute conv-output columns: even-w outputs -> lanes [0, wp*cout), odd-w ->
    # [wp*cout, 2*wp*cout).  W-maxpool becomes one aligned half/half lane max.
    cols = np.arange(wc * cout).reshape(wc, cout)
    perm = np.concatenate([cols[0::2].reshape(-1), cols[1::2].reshape(-1)])
    B, wo_c = _toeplitz_np(w_stem, w, 2, 1, bn_scale, col_perm=perm)
    b_off, b_idx = packer.add(B, _bias_np(bn_shift, wo_c, col_perm=perm))
    stem = dict(h=h, w=w, cin=cin, cout=cout, hc=hc, hp=hp,
                in_lanes=w * cin, conv_lanes=wc * cout, pool_lanes=wp * cout,
                b_off=b_off, bias_idx=b_idx)
    h, w, cin = hp, wp, cout

    # --- BasicBlocks ---
    blocks = []
    for kind, payload in features[4:]:
        assert kind == "stage", kind
        for blk in payload:
            s = int(blk["stride"])
            cout = int(blk["w1"].shape[0])
            ho, wo = (h - 1) // s + 1, (w - 1) // s + 1
            B1, wo1 = _toeplitz_np(blk["w1"], w, s, 1, blk["bn1"][0])
            b1_off, b1_idx = packer.add(B1, _bias_np(blk["bn1"][1], wo1))
            B2, _ = _toeplitz_np(blk["w2"], wo1, 1, 1, blk["bn2"][0])
            b2_off, b2_idx = packer.add(B2, _bias_np(blk["bn2"][1], wo1))
            prm = dict(h=h, stride=s, ho=ho, in_lanes=w * cin, out_lanes=wo * cout,
                       has_ds=("wd" in blk),
                       b1_off=b1_off, bias1_idx=b1_idx,
                       b2_off=b2_off, bias2_idx=b2_idx)
            if "wd" in blk:
                Bd, _ = _toeplitz_np(blk["wd"], w, s, 0, blk["bnd"][0])
                prm["bd_off"], prm["biasd_idx"] = packer.add(Bd, _bias_np(blk["bnd"][1], wo))
            blocks.append(prm)
            h, w, cin = ho, wo, cout

    B_packed, bias_packed = packer.finalize()
    cfg = dict(n=n, stem=stem, blocks=blocks,
               h_out=h, w_out=w, c_out=cin, out_lanes=w * cin,
               act_rows=max(stem["hp"], *[b["h"] for b in blocks]) + 2)
    return cfg, B_packed, bias_packed


# ============================================================================
# The single fused kernel (whole truncated network, one image per grid step)
# ============================================================================
def _make_fused_kernel(cfg):
    stem, blocks = cfg["stem"], cfg["blocks"]
    h0, in_lanes0 = stem["h"], stem["in_lanes"]
    h_out, out_lanes = cfg["h_out"], cfg["out_lanes"]

    def conv(src_ref, ho, k, stride, pad, b_off, out_cols, b_ref):
        """One conv = ONE MXU matmul: lane-concat the k row-shifted 128-wide taps of the
        H-padded source and multiply against the stacked Toeplitz matrix."""
        assert (k, pad) in ((3, 1), (1, 0))
        taps = []
        for kh in range(k):
            start = kh if pad == 1 else 1            # padded-row coords (data at rows 1..h)
            if stride == 1:
                taps.append(src_ref[start:start + ho, :])
            else:
                taps.append(src_ref[pl.ds(start, ho, stride), :])
        rows = taps[0] if k == 1 else jnp.concatenate(taps, axis=-1)
        return jnp.dot(rows.astype(jnp.bfloat16),
                       b_ref[b_off:b_off + k * _LANES, :out_cols],
                       preferred_element_type=jnp.float32)

    def kernel(x_ref, b_ref, bias_ref, o_ref, xpad, stm, act, mid):
        # Zero the padded scratches once per image: guarantees the H-pad rows and the
        # unused upper lanes stay zero for every tap read below.
        xpad[...] = jnp.zeros(xpad.shape, jnp.float32)
        act[...] = jnp.zeros(act.shape, jnp.float32)
        mid[...] = jnp.zeros(mid.shape, jnp.float32)
        zrow = jnp.zeros((1, _LANES), jnp.float32)

        # ---- stem: conv 3x3/s2/p1 + BN + ReLU (single matmul) ----
        xpad[1:1 + h0, :in_lanes0] = x_ref[...]
        c = conv(xpad, stem["hc"], 3, 2, 1, stem["b_off"], stem["conv_lanes"], b_ref)
        stm[...] = jnp.maximum(
            c + bias_ref[stem["bias_idx"]:stem["bias_idx"] + 1, :stem["conv_lanes"]], 0.0)

        # ---- maxpool 2x2/s2: H via strided row pairs, W via permuted half/half max ----
        hp, half = stem["hp"], stem["pool_lanes"]
        hm = jnp.maximum(stm[pl.ds(0, hp, 2), :], stm[pl.ds(1, hp, 2), :])
        act[1:1 + hp, :half] = jnp.maximum(hm[:, :half], hm[:, half:2 * half])

        # ---- BasicBlocks: every activation stays resident in VMEM ----
        for blk in blocks:
            h, s, ho, lo = blk["h"], blk["stride"], blk["ho"], blk["out_lanes"]
            # conv1 + BN + ReLU
            a1 = conv(act, ho, 3, s, 1, blk["b1_off"], lo, b_ref)
            a1 = jnp.maximum(a1 + bias_ref[blk["bias1_idx"]:blk["bias1_idx"] + 1, :lo], 0.0)
            mid[1:1 + ho, :lo] = a1
            mid[1 + ho:2 + ho, :] = zrow              # keep the bottom H-pad row zero
            # residual branch: identity, or fused 1x1-conv + BN downsample
            if blk["has_ds"]:
                res = conv(act, ho, 1, s, 0, blk["bd_off"], lo, b_ref)
                res = res + bias_ref[blk["biasd_idx"]:blk["biasd_idx"] + 1, :lo]
            else:
                res = act[1:1 + h, :blk["in_lanes"]]
            # conv2 + BN + residual + ReLU -> next block input (written back padded)
            a2 = conv(mid, ho, 3, 1, 1, blk["b2_off"], lo, b_ref)
            out = jnp.maximum(
                a2 + bias_ref[blk["bias2_idx"]:blk["bias2_idx"] + 1, :lo] + res, 0.0)
            act[1:1 + ho, :lo] = out
            act[1 + ho:2 + ho, :] = zrow              # keep the bottom H-pad row zero

        o_ref[...] = act[1:1 + h_out, :out_lanes]

    return kernel


def build_forward(features, n, h, w, cin):
    cfg, B_packed, bias_packed = prepare_pallas_config(features, n, h, w, cin)
    kernel = _make_fused_kernel(cfg)
    stem = cfg["stem"]
    h0, in_lanes0 = stem["h"], stem["in_lanes"]
    h_out, w_out, c_out = cfg["h_out"], cfg["w_out"], cfg["c_out"]
    out_lanes, act_rows = cfg["out_lanes"], cfg["act_rows"]

    fused = pl.pallas_call(
        kernel,
        out_shape=jax.ShapeDtypeStruct((n, h_out, out_lanes), jnp.float32),
        grid=(n,),                                          # one image per grid step
        in_specs=[
            pl.BlockSpec((None, h0, in_lanes0), lambda i: (i, 0, 0)),   # one image slab
            pl.BlockSpec(B_packed.shape, lambda i: (0, 0)),             # all conv matrices
            pl.BlockSpec(bias_packed.shape, lambda i: (0, 0)),          # all bias rows
        ],
        out_specs=pl.BlockSpec((None, h_out, out_lanes), lambda i: (i, 0, 0)),
        scratch_shapes=[
            pltpu.VMEM((h0 + 2, _LANES), jnp.float32),                  # H-padded input
            pltpu.VMEM((stem["hc"], stem["conv_lanes"]), jnp.float32),  # stem conv output
            pltpu.VMEM((act_rows, _LANES), jnp.float32),                # H-padded activation
            pltpu.VMEM((act_rows, _LANES), jnp.float32),                # H-padded conv1 out
        ],
        compiler_params=pltpu.CompilerParams(
            dimension_semantics=("parallel",)),   # batch axis -> 2nd TensorCore on v7x
    )

    def forward(x_nchw):
        assert x_nchw.shape == (n, cin, h, w), x_nchw.shape
        x3d = jnp.transpose(x_nchw, (0, 2, 3, 1)).astype(jnp.float32).reshape(n, h, w * cin)
        y = fused(x3d, B_packed, bias_packed)
        y = y.reshape(n, h_out, w_out, c_out)
        return jnp.transpose(y, (0, 3, 1, 2))               # NHWC -> NCHW

    return forward


# ============================================================================
# Synthetic ResNet-style backbone (deterministic params) + FeatExtract_mid truncation
# ============================================================================
def _init_conv(key, cout, cin, k):
    fan_in = cin * k * k
    return (jax.random.normal(key, (cout, cin, k, k), jnp.float32) /
            np.sqrt(fan_in)).astype(jnp.float32)


def _init_bn(key, c):
    k1, k2, k3, k4 = jax.random.split(key, 4)
    gamma = 1.0 + 0.1 * jax.random.normal(k1, (c,), jnp.float32)
    beta = 0.1 * jax.random.normal(k2, (c,), jnp.float32)
    mean = 0.1 * jax.random.normal(k3, (c,), jnp.float32)
    var = 1.0 + 0.1 * jax.random.uniform(k4, (c,), jnp.float32)
    scale = gamma / jnp.sqrt(var + BN_EPS)
    shift = beta - mean * scale
    return scale, shift


def _make_block(key, cin, cout, stride):
    ks = jax.random.split(key, 6)
    p = {"w1": _init_conv(ks[0], cout, cin, 3), "bn1": _init_bn(ks[1], cout),
         "w2": _init_conv(ks[2], cout, cout, 3), "bn2": _init_bn(ks[3], cout),
         "stride": stride}
    if stride != 1 or cin != cout:
        p["wd"] = _init_conv(ks[4], cout, cin, 1)
        p["bnd"] = _init_bn(ks[5], cout)
    return p


def build_children(key):
    ks = jax.random.split(key, 20)
    c0, c1, c2, c3 = 8, 16, 32, 64
    return [
        ("conv", _init_conv(ks[0], c0, 3, 3)),     # 0: stem conv 3x3 s2 p1
        ("bn", _init_bn(ks[1], c0)),               # 1
        ("relu", None),                            # 2
        ("maxpool", None),                         # 3: 2x2 s2
        ("stage", [_make_block(ks[2], c0, c0, 1), _make_block(ks[3], c0, c0, 1)]),
        ("stage", [_make_block(ks[4], c0, c1, 2), _make_block(ks[5], c1, c1, 1)]),
        ("stage", [_make_block(ks[6], c1, c2, 2)] +
                  [_make_block(ks[7 + i], c2, c2, 1) for i in range(5)]),  # child 6
        ("stage", [_make_block(ks[13], c2, c3, 2), _make_block(ks[14], c3, c3, 1)]),
        ("avgpool", None),                         # dropped by the truncation
    ]


def feat_extract_mid_features(children):
    """Mirror FeatExtract_mid.__init__ truncation exactly."""
    children = list(children)
    kind, blocks = children[LAYER_NB]
    children[LAYER_NB] = (kind, blocks[:SUBLAYER_NB + 1])
    return children[:LAYER_NB + 1]


# ============================================================================
# Pure-JAX reference (independent path: lax conv / reduce_window), for validation
# ============================================================================
def reference_forward(x_nchw, features):
    x = jnp.transpose(x_nchw, (0, 2, 3, 1)).astype(jnp.float32)

    def conv(v, wt, s, p):
        return jax.lax.conv_general_dilated(
            v, jnp.transpose(wt, (2, 3, 1, 0)), (s, s), [(p, p), (p, p)],
            dimension_numbers=("NHWC", "HWIO", "NHWC"))

    def bn(v, prm):
        sc, sh = prm
        return v * sc.reshape(1, 1, 1, -1) + sh.reshape(1, 1, 1, -1)

    for kind, payload in features:
        if kind == "conv":
            x = conv(x, payload, 2, 1)
        elif kind == "bn":
            x = bn(x, payload)
        elif kind == "relu":
            x = jax.nn.relu(x)
        elif kind == "maxpool":
            x = jax.lax.reduce_window(x, -jnp.inf, jax.lax.max,
                                      (1, 2, 2, 1), (1, 2, 2, 1), "VALID")
        elif kind == "stage":
            for blk in payload:
                idn = x
                out = jax.nn.relu(bn(conv(x, blk["w1"], blk["stride"], 1), blk["bn1"]))
                if "wd" in blk:
                    idn = bn(conv(x, blk["wd"], blk["stride"], 0), blk["bnd"])
                x = jax.nn.relu(bn(conv(out, blk["w2"], 1, 1), blk["bn2"]) + idn)
        else:
            raise NotImplementedError(kind)
    return jnp.transpose(x, (0, 3, 1, 2))


if __name__ == "__main__":
    key = jax.random.PRNGKey(0)
    k_params, k_x = jax.random.split(key)
    children = build_children(k_params)
    features = feat_extract_mid_features(children)

    x = jax.random.normal(k_x, (2, 3, 32, 32), jnp.float32)   # NCHW, like PyTorch

    forward = build_forward(features, n=2, h=32, w=32, cin=3)
    run = jax.jit(forward)
    out = run(x)
    jax.block_until_ready(out)

    assert out.shape == (2, 32, 2, 2), out.shape
    assert bool(jnp.all(jnp.isfinite(out)))

    # Independent pure-JAX (f32, lax conv) reference.  The Pallas path runs its matmuls in
    # bf16 (f32 accumulation) across ~19 stacked convs, so tolerance is expressed relative
    # to the output scale (~2% of max|ref|): tight enough to catch any layout / indexing
    # bug (which shows up at O(scale)) without false bf16-rounding failures.
    ref = reference_forward(x, features)
    ref_np, out_np = np.asarray(ref), np.asarray(out)
    scale = float(np.max(np.abs(ref_np)))
    np.testing.assert_allclose(out_np, ref_np, rtol=5e-2, atol=2e-2 * scale)

    print("KERNEL_OK")
</pallas_src>

<mosaic_0001>
module attributes {stable_mosaic.version = 11 : i64} {
  func.func @kernel(%arg0: i32, %arg1: memref<1x32x96xf32, #tpu.memory_space<vmem>>, %arg2: memref<7552x128xbf16, #tpu.memory_space<vmem>>, %arg3: memref<21x128xf32, #tpu.memory_space<vmem>>, %arg4: memref<1x2x64xf32, #tpu.memory_space<vmem>>, %arg5: memref<34x128xf32, #tpu.memory_space<vmem>>, %arg6: memref<16x128xf32, #tpu.memory_space<vmem>>, %arg7: memref<10x128xf32, #tpu.memory_space<vmem>>, %arg8: memref<10x128xf32, #tpu.memory_space<vmem>>) attributes {dimension_semantics = [#tpu.dimension_semantics<parallel>], iteration_bounds = array<i64: 2>, scalar_prefetch = 0 : i64, scratch_operands = 4 : i64, tpu.core_type = #tpu.core_type<tc>, window_params = [{transform_indices = @transform_0, window_bounds = array<i64: 1, 32, 96>}, {pipeline_mode = #tpu.pipeline_mode<synchronous>, transform_indices = @transform_1, window_bounds = array<i64: 7552, 128>}, {pipeline_mode = #tpu.pipeline_mode<synchronous>, transform_indices = @transform_2, window_bounds = array<i64: 21, 128>}, {transform_indices = @transform_3, window_bounds = array<i64: 1, 2, 64>}]} {
    %cst = arith.constant 0.000000e+00 : f32
    %0 = vector.broadcast %cst : f32 to vector<34x128xf32>
    %c0 = arith.constant 0 : index
    %c0_0 = arith.constant 0 : index
    %1 = vector.load %arg5[%c0, %c0_0] : memref<34x128xf32, #tpu.memory_space<vmem>>, vector<34x128xf32>
    tpu.vector_store %arg5[%c0, %c0_0], %0 {strides = array<i32>} : memref<34x128xf32, #tpu.memory_space<vmem>>, vector<34x128xf32>,
    %cst_1 = arith.constant 0.000000e+00 : f32
    %2 = vector.broadcast %cst_1 : f32 to vector<10x128xf32>
    %c0_2 = arith.constant 0 : index
    %c0_3 = arith.constant 0 : index
    %3 = vector.load %arg7[%c0_2, %c0_3] : memref<10x128xf32, #tpu.memory_space<vmem>>, vector<10x128xf32>
    tpu.vector_store %arg7[%c0_2, %c0_3], %2 {strides = array<i32>} : memref<10x128xf32, #tpu.memory_space<vmem>>, vector<10x128xf32>,
    %cst_4 = arith.constant 0.000000e+00 : f32
    %4 = vector.broadcast %cst_4 : f32 to vector<10x128xf32>
    %c0_5 = arith.constant 0 : index
    %c0_6 = arith.constant 0 : index
    %5 = vector.load %arg8[%c0_5, %c0_6] : memref<10x128xf32, #tpu.memory_space<vmem>>, vector<10x128xf32>
    tpu.vector_store %arg8[%c0_5, %c0_6], %4 {strides = array<i32>} : memref<10x128xf32, #tpu.memory_space<vmem>>, vector<10x128xf32>,
    %cst_7 = arith.constant 0.000000e+00 : f32
    %6 = vector.broadcast %cst_7 : f32 to vector<1x128xf32>
    %c0_8 = arith.constant 0 : index
    %c0_9 = arith.constant 0 : index
    %c0_10 = arith.constant 0 : index
    %7 = vector.load %arg1[%c0_8, %c0_9, %c0_10] : memref<1x32x96xf32, #tpu.memory_space<vmem>>, vector<1x32x96xf32>
    %8 = vector.shape_cast %7 : vector<1x32x96xf32> to vector<32x96xf32>
    %c1 = arith.constant 1 : index
    %c0_11 = arith.constant 0 : index
    %9 = vector.load %arg5[%c1, %c0_11] : memref<34x128xf32, #tpu.memory_space<vmem>>, vector<32x96xf32>
    tpu.vector_store %arg5[%c1, %c0_11], %8 {strides = array<i32>} : memref<34x128xf32, #tpu.memory_space<vmem>>, vector<32x96xf32>,
    %c0_12 = arith.constant 0 : index
    %c0_13 = arith.constant 0 : index
    %10 = tpu.strided_load %arg5[%c0_12, %c0_13] {strides = array<i32: 2, 1>} : memref<34x128xf32, #tpu.memory_space<vmem>>, vector<16x128xf32>
    %c1_14 = arith.constant 1 : index
    %c0_15 = arith.constant 0 : index
    %11 = tpu.strided_load %arg5[%c1_14, %c0_15] {strides = array<i32: 2, 1>} : memref<34x128xf32, #tpu.memory_space<vmem>>, vector<16x128xf32>
    %c2 = arith.constant 2 : index
    %c0_16 = arith.constant 0 : index
    %12 = tpu.strided_load %arg5[%c2, %c0_16] {strides = array<i32: 2, 1>} : memref<34x128xf32, #tpu.memory_space<vmem>>, vector<16x128xf32>
    %13 = tpu.concatenate %10, %11, %12 in 1 : vector<16x128xf32>, vector<16x128xf32>, vector<16x128xf32> -> vector<16x384xf32>
    %14 = arith.truncf %13 : vector<16x384xf32> to vector<16x384xbf16>
    %c0_17 = arith.constant 0 : index
    %c0_18 = arith.constant 0 : index
    %15 = vector.load %arg2[%c0_17, %c0_18] : memref<7552x128xbf16, #tpu.memory_space<vmem>>, vector<384x128xbf16>
    %cst_19 = arith.constant dense<0.000000e+00> : vector<16x128xf32>
    %16 = tpu.matmul %14, %15, %cst_19 {dimension_numbers = #tpu.dot_dimension_numbers<[1], [0], [0], [1], [0, 0, 1, 1], [], []>} : vector<16x384xbf16>, vector<384x128xbf16>, vector<16x128xf32> -> vector<16x128xf32>
    %c0_20 = arith.constant 0 : index
    %c0_21 = arith.constant 0 : index
    %17 = vector.load %arg3[%c0_20, %c0_21] : memref<21x128xf32, #tpu.memory_space<vmem>>, vector<1x128xf32>
    %18 = vector.broadcast %17 : vector<1x128xf32> to vector<16x128xf32>
    %19 = arith.addf %16, %18 : vector<16x128xf32>
    %cst_22 = arith.constant 0.000000e+00 : f32
    %20 = vector.broadcast %cst_22 : f32 to vector<16x128xf32>
    %21 = arith.maximumf %19, %20 : vector<16x128xf32>
    %c0_23 = arith.constant 0 : index
    %c0_24 = arith.constant 0 : index
    %22 = vector.load %arg6[%c0_23, %c0_24] : memref<16x128xf32, #tpu.memory_space<vmem>>, vector<16x128xf32>
    tpu.vector_store %arg6[%c0_23, %c0_24], %21 {strides = array<i32>} : memref<16x128xf32, #tpu.memory_space<vmem>>, vector<16x128xf32>,
    %c0_25 = arith.constant 0 : index
    %c0_26 = arith.constant 0 : index
    %23 = tpu.strided_load %arg6[%c0_25, %c0_26] {strides = array<i32: 2, 1>} : memref<16x128xf32, #tpu.memory_space<vmem>>, vector<8x128xf32>
    %c1_27 = arith.constant 1 : index
    %c0_28 = arith.constant 0 : index
    %24 = tpu.strided_load %arg6[%c1_27, %c0_28] {strides = array<i32: 2, 1>} : memref<16x128xf32, #tpu.memory_space<vmem>>, vector<8x128xf32>
    %25 = arith.maximumf %23, %24 : vector<8x128xf32>
    %26 = vector.extract_strided_slice %25 {offsets = [0, 0], sizes = [8, 64], strides = [1, 1]} : vector<8x128xf32> to vector<8x64xf32>
    %27 = vector.extract_strided_slice %25 {offsets = [0, 64], sizes = [8, 64], strides = [1, 1]} : vector<8x128xf32> to vector<8x64xf32>
    %28 = arith.maximumf %26, %27 : vector<8x64xf32>
    %c1_29 = arith.constant 1 : index
    %c0_30 = arith.constant 0 : index
    %29 = vector.load %arg7[%c1_29, %c0_30] : memref<10x128xf32, #tpu.memory_space<vmem>>, vector<8x64xf32>
    tpu.vector_store %arg7[%c1_29, %c0_30], %28 {strides = array<i32>} : memref<10x128xf32, #tpu.memory_space<vmem>>, vector<8x64xf32>,
    %c0_31 = arith.constant 0 : index
    %c0_32 = arith.constant 0 : index
    %30 = vector.load %arg7[%c0_31, %c0_32] : memref<10x128xf32, #tpu.memory_space<vmem>>, vector<8x128xf32>
    %c1_33 = arith.constant 1 : index
    %c0_34 = arith.constant 0 : index
    %31 = vector.load %arg7[%c1_33, %c0_34] : memref<10x128xf32, #tpu.memory_space<vmem>>, vector<8x128xf32>
    %c2_35 = arith.constant 2 : index
    %c0_36 = arith.constant 0 : index
    %32 = vector.load %arg7[%c2_35, %c0_36] : memref<10x128xf32, #tpu.memory_space<vmem>>, vector<8x128xf32>
    %33 = tpu.concatenate %30, %31, %32 in 1 : vector<8x128xf32>, vector<8x128xf32>, vector<8x128xf32> -> vector<8x384xf32>
    %34 = arith.truncf %33 : vector<8x384xf32> to vector<8x384xbf16>
    %c384 = arith.constant 384 : index
    %c0_37 = arith.constant 0 : index
    %35 = vector.load %arg2[%c384, %c0_37] : memref<7552x128xbf16, #tpu.memory_space<vmem>>, vector<384x64xbf16>
    %cst_38 = arith.constant dense<0.000000e+00> : vector<8x64xf32>
    %36 = tpu.matmul %34, %35, %cst_38 {dimension_numbers = #tpu.dot_dimension_numbers<[1], [0], [0], [1], [0, 0, 1, 1], [], []>} : vector<8x384xbf16>, vector<384x64xbf16>, vector<8x64xf32> -> vector<8x64xf32>
    %c1_39 = arith.constant 1 : index
    %c0_40 = arith.constant 0 : index
    %37 = vector.load %arg3[%c1_39, %c0_40] : memref<21x128xf32, #tpu.memory_space<vmem>>, vector<1x64xf32>
    %38 = vector.broadcast %37 : vector<1x64xf32> to vector<8x64xf32>
    %39 = arith.addf %36, %38 : vector<8x64xf32>
    %cst_41 = arith.constant 0.000000e+00 : f32
    %40 = vector.broadcast %cst_41 : f32 to vector<8x64xf32>
    %41 = arith.maximumf %39, %40 : vector<8x64xf32>
    %c1_42 = arith.constant 1 : index
    %c0_43 = arith.constant 0 : index
    %42 = vector.load %arg8[%c1_42, %c0_43] : memref<10x128xf32, #tpu.memory_space<vmem>>, vector<8x64xf32>
    tpu.vector_store %arg8[%c1_42, %c0_43], %41 {strides = array<i32>} : memref<10x128xf32, #tpu.memory_space<vmem>>, vector<8x64xf32>,
    %c9 = arith.constant 9 : index
    %c0_44 = arith.constant 0 : index
    %43 = vector.load %arg8[%c9, %c0_44] : memref<10x128xf32, #tpu.memory_space<vmem>>, vector<1x128xf32>
    tpu.vector_store %arg8[%c9, %c0_44], %6 {strides = array<i32>} : memref<10x128xf32, #tpu.memory_space<vmem>>, vector<1x128xf32>,
    %c1_45 = arith.constant 1 : index
    %c0_46 = arith.constant 0 : index
    %44 = vector.load %arg7[%c1_45, %c0_46] : memref<10x128xf32, #tpu.memory_space<vmem>>, vector<8x64xf32>
    %c0_47 = arith.constant 0 : index
    %c0_48 = arith.constant 0 : index
    %45 = vector.load %arg8[%c0_47, %c0_48] : memref<10x128xf32, #tpu.memory_space<vmem>>, vector<8x128xf32>
    %c1_49 = arith.constant 1 : index
    %c0_50 = arith.constant 0 : index
    %46 = vector.load %arg8[%c1_49, %c0_50] : memref<10x128xf32, #tpu.memory_space<vmem>>, vector<8x128xf32>
    %c2_51 = arith.constant 2 : index
    %c0_52 = arith.constant 0 : index
    %47 = vector.load %arg8[%c2_51, %c0_52] : memref<10x128xf32, #tpu.memory_space<vmem>>, vector<8x128xf32>
    %48 = tpu.concatenate %45, %46, %47 in 1 : vector<8x128xf32>, vector<8x128xf32>, vector<8x128xf32> -> vector<8x384xf32>
    %49 = arith.truncf %48 : vector<8x384xf32> to vector<8x384xbf16>
    %c768 = arith.constant 768 : index
    %c0_53 = arith.constant 0 : index
    %50 = vector.load %arg2[%c768, %c0_53] : memref<7552x128xbf16, #tpu.memory_space<vmem>>, vector<384x64xbf16>
    %cst_54 = arith.constant dense<0.000000e+00> : vector<8x64xf32>
    %51 = tpu.matmul %49, %50, %cst_54 {dimension_numbers = #tpu.dot_dimension_numbers<[1], [0], [0], [1], [0, 0, 1, 1], [], []>} : vector<8x384xbf16>, vector<384x64xbf16>, vector<8x64xf32> -> vector<8x64xf32>
    %c2_55 = arith.constant 2 : index
    %c0_56 = arith.constant 0 : index
    %52 = vector.load %arg3[%c2_55, %c0_56] : memref<21x128xf32, #tpu.memory_space<vmem>>, vector<1x64xf32>
    %53 = vector.broadcast %52 : vector<1x64xf32> to vector<8x64xf32>
    %54 = arith.addf %51, %53 : vector<8x64xf32>
    %55 = arith.addf %54, %44 : vector<8x64xf32>
    %cst_57 = arith.constant 0.000000e+00 : f32
    %56 = vector.broadcast %cst_57 : f32 to vector<8x64xf32>
    %57 = arith.maximumf %55, %56 : vector<8x64xf32>
    %c1_58 = arith.constant 1 : index
    %c0_59 = arith.constant 0 : index
    %58 = vector.load %arg7[%c1_58, %c0_59] : memref<10x128xf32, #tpu.memory_space<vmem>>, vector<8x64xf32>
    tpu.vector_store %arg7[%c1_58, %c0_59], %57 {strides = array<i32>} : memref<10x128xf32, #tpu.memory_space<vmem>>, vector<8x64xf32>,
    %c9_60 = arith.constant 9 : index
    %c0_61 = arith.constant 0 : index
    %59 = vector.load %arg7[%c9_60, %c0_61] : memref<10x128xf32, #tpu.memory_space<vmem>>, vector<1x128xf32>
    tpu.vector_store %arg7[%c9_60, %c0_61], %6 {strides = array<i32>} : memref<10x128xf32, #tpu.memory_space<vmem>>, vector<1x128xf32>,
    %c0_62 = arith.constant 0 : index
    %c0_63 = arith.constant 0 : index
    %60 = vector.load %arg7[%c0_62, %c0_63] : memref<10x128xf32, #tpu.memory_space<vmem>>, vector<8x128xf32>
    %c1_64 = arith.constant 1 : index
    %c0_65 = arith.constant 0 : index
    %61 = vector.load %arg7[%c1_64, %c0_65] : memref<10x128xf32, #tpu.memory_space<vmem>>, vector<8x128xf32>
    %c2_66 = arith.constant 2 : index
    %c0_67 = arith.constant 0 : index
    %62 = vector.load %arg7[%c2_66, %c0_67] : memref<10x128xf32, #tpu.memory_space<vmem>>, vector<8x128xf32>
    %63 = tpu.concatenate %60, %61, %62 in 1 : vector<8x128xf32>, vector<8x128xf32>, vector<8x128xf32> -> vector<8x384xf32>
    %64 = arith.truncf %63 : vector<8x384xf32> to vector<8x384xbf16>
    %c1152 = arith.constant 1152 : index
    %c0_68 = arith.constant 0 : index
    %65 = vector.load %arg2[%c1152, %c0_68] : memref<7552x128xbf16, #tpu.memory_space<vmem>>, vector<384x64xbf16>
    %cst_69 = arith.constant dense<0.000000e+00> : vector<8x64xf32>
    %66 = tpu.matmul %64, %65, %cst_69 {dimension_numbers = #tpu.dot_dimension_numbers<[1], [0], [0], [1], [0, 0, 1, 1], [], []>} : vector<8x384xbf16>, vector<384x64xbf16>, vector<8x64xf32> -> vector<8x64xf32>
    %c3 = arith.constant 3 : index
    %c0_70 = arith.constant 0 : index
    %67 = vector.load %arg3[%c3, %c0_70] : memref<21x128xf32, #tpu.memory_space<vmem>>, vector<1x64xf32>
    %68 = vector.broadcast %67 : vector<1x64xf32> to vector<8x64xf32>
    %69 = arith.addf %66, %68 : vector<8x64xf32>
    %cst_71 = arith.constant 0.000000e+00 : f32
    %70 = vector.broadcast %cst_71 : f32 to vector<8x64xf32>
    %71 = arith.maximumf %69, %70 : vector<8x64xf32>
    %c1_72 = arith.constant 1 : index
    %c0_73 = arith.constant 0 : index
    %72 = vector.load %arg8[%c1_72, %c0_73] : memref<10x128xf32, #tpu.memory_space<vmem>>, vector<8x64xf32>
    tpu.vector_store %arg8[%c1_72, %c0_73], %71 {strides = array<i32>} : memref<10x128xf32, #tpu.memory_space<vmem>>, vector<8x64xf32>,
    %c9_74 = arith.constant 9 : index
    %c0_75 = arith.constant 0 : index
    %73 = vector.load %arg8[%c9_74, %c0_75] : memref<10x128xf32, #tpu.memory_space<vmem>>, vector<1x128xf32>
    tpu.vector_store %arg8[%c9_74, %c0_75], %6 {strides = array<i32>} : memref<10x128xf32, #tpu.memory_space<vmem>>, vector<1x128xf32>,
    %c1_76 = arith.constant 1 : index
    %c0_77 = arith.constant 0 : index
    %74 = vector.load %arg7[%c1_76, %c0_77] : memref<10x128xf32, #tpu.memory_space<vmem>>, vector<8x64xf32>
    %c0_78 = arith.constant 0 : index
    %c0_79 = arith.constant 0 : index
    %75 = vector.load %arg8[%c0_78, %c0_79] : memref<10x128xf32, #tpu.memory_space<vmem>>, vector<8x128xf32>
    %c1_80 = arith.constant 1 : index
    %c0_81 = arith.constant 0 : index
    %76 = vector.load %arg8[%c1_80, %c0_81] : memref<10x128xf32, #tpu.memory_space<vmem>>, vector<8x128xf32>
    %c2_82 = arith.constant 2 : index
    %c0_83 = arith.constant 0 : index
    %77 = vector.load %arg8[%c2_82, %c0_83] : memref<10x128xf32, #tpu.memory_space<vmem>>, vector<8x128xf32>
    %78 = tpu.concatenate %75, %76, %77 in 1 : vector<8x128xf32>, vector<8x128xf32>, vector<8x128xf32> -> vector<8x384xf32>
    %79 = arith.truncf %78 : vector<8x384xf32> to vector<8x384xbf16>
    %c1536 = arith.constant 1536 : index
    %c0_84 = arith.constant 0 : index
    %80 = vector.load %arg2[%c1536, %c0_84] : memref<7552x128xbf16, #tpu.memory_space<vmem>>, vector<384x64xbf16>
    %cst_85 = arith.constant dense<0.000000e+00> : vector<8x64xf32>
    %81 = tpu.matmul %79, %80, %cst_85 {dimension_numbers = #tpu.dot_dimension_numbers<[1], [0], [0], [1], [0, 0, 1, 1], [], []>} : vector<8x384xbf16>, vector<384x64xbf16>, vector<8x64xf32> -> vector<8x64xf32>
    %c4 = arith.constant 4 : index
    %c0_86 = arith.constant 0 : index
    %82 = vector.load %arg3[%c4, %c0_86] : memref<21x128xf32, #tpu.memory_space<vmem>>, vector<1x64xf32>
    %83 = vector.broadcast %82 : vector<1x64xf32> to vector<8x64xf32>
    %84 = arith.addf %81, %83 : vector<8x64xf32>
    %85 = arith.addf %84, %74 : vector<8x64xf32>
    %cst_87 = arith.constant 0.000000e+00 : f32
    %86 = vector.broadcast %cst_87 : f32 to vector<8x64xf32>
    %87 = arith.maximumf %85, %86 : vector<8x64xf32>
    %c1_88 = arith.constant 1 : index
    %c0_89 = arith.constant 0 : index
    %88 = vector.load %arg7[%c1_88, %c0_89] : memref<10x128xf32, #tpu.memory_space<vmem>>, vector<8x64xf32>
    tpu.vector_store %arg7[%c1_88, %c0_89], %87 {strides = array<i32>} : memref<10x128xf32, #tpu.memory_space<vmem>>, vector<8x64xf32>,
    %c9_90 = arith.constant 9 : index
    %c0_91 = arith.constant 0 : index
    %89 = vector.load %arg7[%c9_90, %c0_91] : memref<10x128xf32, #tpu.memory_space<vmem>>, vector<1x128xf32>
    tpu.vector_store %arg7[%c9_90, %c0_91], %6 {strides = array<i32>} : memref<10x128xf32, #tpu.memory_space<vmem>>, vector<1x128xf32>,
    %c0_92 = arith.constant 0 : index
    %c0_93 = arith.constant 0 : index
    %90 = tpu.strided_load %arg7[%c0_92, %c0_93] {strides = array<i32: 2, 1>} : memref<10x128xf32, #tpu.memory_space<vmem>>, vector<4x128xf32>
    %c1_94 = arith.constant 1 : index
    %c0_95 = arith.constant 0 : index
    %91 = tpu.strided_load %arg7[%c1_94, %c0_95] {strides = array<i32: 2, 1>} : memref<10x128xf32, #tpu.memory_space<vmem>>, vector<4x128xf32>
    %c2_96 = arith.constant 2 : index
    %c0_97 = arith.constant 0 : index
    %92 = tpu.strided_load %arg7[%c2_96, %c0_97] {strides = array<i32: 2, 1>} : memref<10x128xf32, #tpu.memory_space<vmem>>, vector<4x128xf32>
    %93 = tpu.concatenate %90, %91, %92 in 1 : vector<4x128xf32>, vector<4x128xf32>, vector<4x128xf32> -> vector<4x384xf32>
    %94 = arith.truncf %93 : vector<4x384xf32> to vector<4x384xbf16>
    %c1920 = arith.constant 1920 : index
    %c0_98 = arith.constant 0 : index
    %95 = vector.load %arg2[%c1920, %c0_98] : memref<7552x128xbf16, #tpu.memory_space<vmem>>, vector<384x64xbf16>
    %cst_99 = arith.constant dense<0.000000e+00> : vector<4x64xf32>
    %96 = tpu.matmul %94, %95, %cst_99 {dimension_numbers = #tpu.dot_dimension_numbers<[1], [0], [0], [1], [0, 0, 1, 1], [], []>} : vector<4x384xbf16>, vector<384x64xbf16>, vector<4x64xf32> -> vector<4x64xf32>
    %c5 = arith.constant 5 : index
    %c0_100 = arith.constant 0 : index
    %97 = vector.load %arg3[%c5, %c0_100] : memref<21x128xf32, #tpu.memory_space<vmem>>, vector<1x64xf32>
    %98 = vector.broadcast %97 : vector<1x64xf32> to vector<4x64xf32>
    %99 = arith.addf %96, %98 : vector<4x64xf32>
    %cst_101 = arith.constant 0.000000e+00 : f32
    %100 = vector.broadcast %cst_101 : f32 to vector<4x64xf32>
    %101 = arith.maximumf %99, %100 : vector<4x64xf32>
    %c1_102 = arith.constant 1 : index
    %c0_103 = arith.constant 0 : index
    %102 = vector.load %arg8[%c1_102, %c0_103] : memref<10x128xf32, #tpu.memory_space<vmem>>, vector<4x64xf32>
    tpu.vector_store %arg8[%c1_102, %c0_103], %101 {strides = array<i32>} : memref<10x128xf32, #tpu.memory_space<vmem>>, vector<4x64xf32>,
    %c5_104 = arith.constant 5 : index
    %c0_105 = arith.constant 0 : index
    %103 = vector.load %arg8[%c5_104, %c0_105] : memref<10x128xf32, #tpu.memory_space<vmem>>, vector<1x128xf32>
    tpu.vector_store %arg8[%c5_104, %c0_105], %6 {strides = array<i32>} : memref<10x128xf32, #tpu.memory_space<vmem>>, vector<1x128xf32>,
    %c1_106 = arith.constant 1 : index
    %c0_107 = arith.constant 0 : index
    %104 = tpu.strided_load %arg7[%c1_106, %c0_107] {strides = array<i32: 2, 1>} : memref<10x128xf32, #tpu.memory_space<vmem>>, vector<4x128xf32>
    %105 = arith.truncf %104 : vector<4x128xf32> to vector<4x128xbf16>
    %c2688 = arith.constant 2688 : index
    %c0_108 = arith.constant 0 : index
    %106 = vector.load %arg2[%c2688, %c0_108] : memref<7552x128xbf16, #tpu.memory_space<vmem>>, vector<128x64xbf16>
    %cst_109 = arith.constant dense<0.000000e+00> : vector<4x64xf32>
    %107 = tpu.matmul %105, %106, %cst_109 {dimension_numbers = #tpu.dot_dimension_numbers<[1], [0], [0], [1], [0, 0, 1, 1], [], []>} : vector<4x128xbf16>, vector<128x64xbf16>, vector<4x64xf32> -> vector<4x64xf32>
    %c7 = arith.constant 7 : index
    %c0_110 = arith.constant 0 : index
    %108 = vector.load %arg3[%c7, %c0_110] : memref<21x128xf32, #tpu.memory_space<vmem>>, vector<1x64xf32>
    %109 = vector.broadcast %108 : vector<1x64xf32> to vector<4x64xf32>
    %110 = arith.addf %107, %109 : vector<4x64xf32>
    %c0_111 = arith.constant 0 : index
    %c0_112 = arith.constant 0 : index
    %111 = vector.load %arg8[%c0_111, %c0_112] : memref<10x128xf32, #tpu.memory_space<vmem>>, vector<4x128xf32>
    %c1_113 = arith.constant 1 : index
    %c0_114 = arith.constant 0 : index
    %112 = vector.load %arg8[%c1_113, %c0_114] : memref<10x128xf32, #tpu.memory_space<vmem>>, vector<4x128xf32>
    %c2_115 = arith.constant 2 : index
    %c0_116 = arith.constant 0 : index
    %113 = vector.load %arg8[%c2_115, %c0_116] : memref<10x128xf32, #tpu.memory_space<vmem>>, vector<4x128xf32>
    %114 = tpu.concatenate %111, %112, %113 in 1 : vector<4x128xf32>, vector<4x128xf32>, vector<4x128xf32> -> vector<4x384xf32>
    %115 = arith.truncf %114 : vector<4x384xf32> to vector<4x384xbf16>
    %c2304 = arith.constant 2304 : index
    %c0_117 = arith.constant 0 : index
    %116 = vector.load %arg2[%c2304, %c0_117] : memref<7552x128xbf16, #tpu.memory_space<vmem>>, vector<384x64xbf16>
    %cst_118 = arith.constant dense<0.000000e+00> : vector<4x64xf32>
    %117 = tpu.matmul %115, %116, %cst_118 {dimension_numbers = #tpu.dot_dimension_numbers<[1], [0], [0], [1], [0, 0, 1, 1], [], []>} : vector<4x384xbf16>, vector<384x64xbf16>, vector<4x64xf32> -> vector<4x64xf32>
    %c6 = arith.constant 6 : index
    %c0_119 = arith.constant 0 : index
    %118 = vector.load %arg3[%c6, %c0_119] : memref<21x128xf32, #tpu.memory_space<vmem>>, vector<1x64xf32>
    %119 = vector.broadcast %118 : vector<1x64xf32> to vector<4x64xf32>
    %120 = arith.addf %117, %119 : vector<4x64xf32>
    %121 = arith.addf %120, %110 : vector<4x64xf32>
    %cst_120 = arith.constant 0.000000e+00 : f32
    %122 = vector.broadcast %cst_120 : f32 to vector<4x64xf32>
    %123 = arith.maximumf %121, %122 : vector<4x64xf32>
    %c1_121 = arith.constant 1 : index
    %c0_122 = arith.constant 0 : index
    %124 = vector.load %arg7[%c1_121, %c0_122] : memref<10x128xf32, #tpu.memory_space<vmem>>, vector<4x64xf32>
    tpu.vector_store %arg7[%c1_121, %c0_122], %123 {strides = array<i32>} : memref<10x128xf32, #tpu.memory_space<vmem>>, vector<4x64xf32>,
    %c5_123 = arith.constant 5 : index
    %c0_124 = arith.constant 0 : index
    %125 = vector.load %arg7[%c5_123, %c0_124] : memref<10x128xf32, #tpu.memory_space<vmem>>, vector<1x128xf32>
    tpu.vector_store %arg7[%c5_123, %c0_124], %6 {strides = array<i32>} : memref<10x128xf32, #tpu.memory_space<vmem>>, vector<1x128xf32>,
    %c0_125 = arith.constant 0 : index
    %c0_126 = arith.constant 0 : index
    %126 = vector.load %arg7[%c0_125, %c0_126] : memref<10x128xf32, #tpu.memory_space<vmem>>, vector<4x128xf32>
    %c1_127 = arith.constant 1 : index
    %c0_128 = arith.constant 0 : index
    %127 = vector.load %arg7[%c1_127, %c0_128] : memref<10x128xf32, #tpu.memory_space<vmem>>, vector<4x128xf32>
    %c2_129 = arith.constant 2 : index
    %c0_130 = arith.constant 0 : index
    %128 = vector.load %arg7[%c2_129, %c0_130] : memref<10x128xf32, #tpu.memory_space<vmem>>, vector<4x128xf32>
    %129 = tpu.concatenate %126, %127, %128 in 1 : vector<4x128xf32>, vector<4x128xf32>, vector<4x128xf32> -> vector<4x384xf32>
    %130 = arith.truncf %129 : vector<4x384xf32> to vector<4x384xbf16>
    %c2816 = arith.constant 2816 : index
    %c0_131 = arith.constant 0 : index
    %131 = vector.load %arg2[%c2816, %c0_131] : memref<7552x128xbf16, #tpu.memory_space<vmem>>, vector<384x64xbf16>
    %cst_132 = arith.constant dense<0.000000e+00> : vector<4x64xf32>
    %132 = tpu.matmul %130, %131, %cst_132 {dimension_numbers = #tpu.dot_dimension_numbers<[1], [0], [0], [1], [0, 0, 1, 1], [], []>} : vector<4x384xbf16>, vector<384x64xbf16>, vector<4x64xf32> -> vector<4x64xf32>
    %c8 = arith.constant 8 : index
    %c0_133 = arith.constant 0 : index
    %133 = vector.load %arg3[%c8, %c0_133] : memref<21x128xf32, #tpu.memory_space<vmem>>, vector<1x64xf32>
    %134 = vector.broadcast %133 : vector<1x64xf32> to vector<4x64xf32>
    %135 = arith.addf %132, %134 : vector<4x64xf32>
    %cst_134 = arith.constant 0.000000e+00 : f32
    %136 = vector.broadcast %cst_134 : f32 to vector<4x64xf32>
    %137 = arith.maximumf %135, %136 : vector<4x64xf32>
    %c1_135 = arith.constant 1 : index
    %c0_136 = arith.constant 0 : index
    %138 = vector.load %arg8[%c1_135, %c0_136] : memref<10x128xf32, #tpu.memory_space<vmem>>, vector<4x64xf32>
    tpu.vector_store %arg8[%c1_135, %c0_136], %137 {strides = array<i32>} : memref<10x128xf32, #tpu.memory_space<vmem>>, vector<4x64xf32>,
    %c5_137 = arith.constant 5 : index
    %c0_138 = arith.constant 0 : index
    %139 = vector.load %arg8[%c5_137, %c0_138] : memref<10x128xf32, #tpu.memory_space<vmem>>, vector<1x128xf32>
    tpu.vector_store %arg8[%c5_137, %c0_138], %6 {strides = array<i32>} : memref<10x128xf32, #tpu.memory_space<vmem>>, vector<1x128xf32>,
    %c1_139 = arith.constant 1 : index
    %c0_140 = arith.constant 0 : index
    %140 = vector.load %arg7[%c1_139, %c0_140] : memref<10x128xf32, #tpu.memory_space<vmem>>, vector<4x64xf32>
    %c0_141 = arith.constant 0 : index
    %c0_142 = arith.constant 0 : index
    %141 = vector.load %arg8[%c0_141, %c0_142] : memref<10x128xf32, #tpu.memory_space<vmem>>, vector<4x128xf32>
    %c1_143 = arith.constant 1 : index
    %c0_144 = arith.constant 0 : index
    %142 = vector.load %arg8[%c1_143, %c0_144] : memref<10x128xf32, #tpu.memory_space<vmem>>, vector<4x128xf32>
    %c2_145 = arith.constant 2 : index
    %c0_146 = arith.constant 0 : index
    %143 = vector.load %arg8[%c2_145, %c0_146] : memref<10x128xf32, #tpu.memory_space<vmem>>, vector<4x128xf32>
    %144 = tpu.concatenate %141, %142, %143 in 1 : vector<4x128xf32>, vector<4x128xf32>, vector<4x128xf32> -> vector<4x384xf32>
    %145 = arith.truncf %144 : vector<4x384xf32> to vector<4x384xbf16>
    %c3200 = arith.constant 3200 : index
    %c0_147 = arith.constant 0 : index
    %146 = vector.load %arg2[%c3200, %c0_147] : memref<7552x128xbf16, #tpu.memory_space<vmem>>, vector<384x64xbf16>
    %cst_148 = arith.constant dense<0.000000e+00> : vector<4x64xf32>
    %147 = tpu.matmul %145, %146, %cst_148 {dimension_numbers = #tpu.dot_dimension_numbers<[1], [0], [0], [1], [0, 0, 1, 1], [], []>} : vector<4x384xbf16>, vector<384x64xbf16>, vector<4x64xf32> -> vector<4x64xf32>
    %c9_149 = arith.constant 9 : index
    %c0_150 = arith.constant 0 : index
    %148 = vector.load %arg3[%c9_149, %c0_150] : memref<21x128xf32, #tpu.memory_space<vmem>>, vector<1x64xf32>
    %149 = vector.broadcast %148 : vector<1x64xf32> to vector<4x64xf32>
    %150 = arith.addf %147, %149 : vector<4x64xf32>
    %151 = arith.addf %150, %140 : vector<4x64xf32>
    %cst_151 = arith.constant 0.000000e+00 : f32
    %152 = vector.broadcast %cst_151 : f32 to vector<4x64xf32>
    %153 = arith.maximumf %151, %152 : vector<4x64xf32>
    %c1_152 = arith.constant 1 : index
    %c0_153 = arith.constant 0 : index
    %154 = vector.load %arg7[%c1_152, %c0_153] : memref<10x128xf32, #tpu.memory_space<vmem>>, vector<4x64xf32>
    tpu.vector_store %arg7[%c1_152, %c0_153], %153 {strides = array<i32>} : memref<10x128xf32, #tpu.memory_space<vmem>>, vector<4x64xf32>,
    %c5_154 = arith.constant 5 : index
    %c0_155 = arith.constant 0 : index
    %155 = vector.load %arg7[%c5_154, %c0_155] : memref<10x128xf32, #tpu.memory_space<vmem>>, vector<1x128xf32>
    tpu.vector_store %arg7[%c5_154, %c0_155], %6 {strides = array<i32>} : memref<10x128xf32, #tpu.memory_space<vmem>>, vector<1x128xf32>,
    %c0_156 = arith.constant 0 : index
    %c0_157 = arith.constant 0 : index
    %156 = tpu.strided_load %arg7[%c0_156, %c0_157] {strides = array<i32: 2, 1>} : memref<10x128xf32, #tpu.memory_space<vmem>>, vector<2x128xf32>
    %c1_158 = arith.constant 1 : index
    %c0_159 = arith.constant 0 : index
    %157 = tpu.strided_load %arg7[%c1_158, %c0_159] {strides = array<i32: 2, 1>} : memref<10x128xf32, #tpu.memory_space<vmem>>, vector<2x128xf32>
    %c2_160 = arith.constant 2 : index
    %c0_161 = arith.constant 0 : index
    %158 = tpu.strided_load %arg7[%c2_160, %c0_161] {strides = array<i32: 2, 1>} : memref<10x128xf32, #tpu.memory_space<vmem>>, vector<2x128xf32>
    %159 = tpu.concatenate %156, %157, %158 in 1 : vector<2x128xf32>, vector<2x128xf32>, vector<2x128xf32> -> vector<2x384xf32>
    %160 = arith.truncf %159 : vector<2x384xf32> to vector<2x384xbf16>
    %c3584 = arith.constant 3584 : index
    %c0_162 = arith.constant 0 : index
    %161 = vector.load %arg2[%c3584, %c0_162] : memref<7552x128xbf16, #tpu.memory_space<vmem>>, vector<384x64xbf16>
    %cst_163 = arith.constant dense<0.000000e+00> : vector<2x64xf32>
    %162 = tpu.matmul %160, %161, %cst_163 {dimension_numbers = #tpu.dot_dimension_numbers<[1], [0], [0], [1], [0, 0, 1, 1], [], []>} : vector<2x384xbf16>, vector<384x64xbf16>, vector<2x64xf32> -> vector<2x64xf32>
    %c10 = arith.constant 10 : index
    %c0_164 = arith.constant 0 : index
    %163 = vector.load %arg3[%c10, %c0_164] : memref<21x128xf32, #tpu.memory_space<vmem>>, vector<1x64xf32>
    %164 = vector.broadcast %163 : vector<1x64xf32> to vector<2x64xf32>
    %165 = arith.addf %162, %164 : vector<2x64xf32>
    %cst_165 = arith.constant 0.000000e+00 : f32
    %166 = vector.broadcast %cst_165 : f32 to vector<2x64xf32>
    %167 = arith.maximumf %165, %166 : vector<2x64xf32>
    %c1_166 = arith.constant 1 : index
    %c0_167 = arith.constant 0 : index
    %168 = vector.load %arg8[%c1_166, %c0_167] : memref<10x128xf32, #tpu.memory_space<vmem>>, vector<2x64xf32>
    tpu.vector_store %arg8[%c1_166, %c0_167], %167 {strides = array<i32>} : memref<10x128xf32, #tpu.memory_space<vmem>>, vector<2x64xf32>,
    %c3_168 = arith.constant 3 : index
    %c0_169 = arith.constant 0 : index
    %169 = vector.load %arg8[%c3_168, %c0_169] : memref<10x128xf32, #tpu.memory_space<vmem>>, vector<1x128xf32>
    tpu.vector_store %arg8[%c3_168, %c0_169], %6 {strides = array<i32>} : memref<10x128xf32, #tpu.memory_space<vmem>>, vector<1x128xf32>,
    %c1_170 = arith.constant 1 : index
    %c0_171 = arith.constant 0 : index
    %170 = tpu.strided_load %arg7[%c1_170, %c0_171] {strides = array<i32: 2, 1>} : memref<10x128xf32, #tpu.memory_space<vmem>>, vector<2x128xf32>
    %171 = arith.truncf %170 : vector<2x128xf32> to vector<2x128xbf16>
    %c4352 = arith.constant 4352 : index
    %c0_172 = arith.constant 0 : index
    %172 = vector.load %arg2[%c4352, %c0_172] : memref<7552x128xbf16, #tpu.memory_space<vmem>>, vector<128x64xbf16>
    %cst_173 = arith.constant dense<0.000000e+00> : vector<2x64xf32>
    %173 = tpu.matmul %171, %172, %cst_173 {dimension_numbers = #tpu.dot_dimension_numbers<[1], [0], [0], [1], [0, 0, 1, 1], [], []>} : vector<2x128xbf16>, vector<128x64xbf16>, vector<2x64xf32> -> vector<2x64xf32>
    %c12 = arith.constant 12 : index
    %c0_174 = arith.constant 0 : index
    %174 = vector.load %arg3[%c12, %c0_174] : memref<21x128xf32, #tpu.memory_space<vmem>>, vector<1x64xf32>
    %175 = vector.broadcast %174 : vector<1x64xf32> to vector<2x64xf32>
    %176 = arith.addf %173, %175 : vector<2x64xf32>
    %c0_175 = arith.constant 0 : index
    %c0_176 = arith.constant 0 : index
    %177 = vector.load %arg8[%c0_175, %c0_176] : memref<10x128xf32, #tpu.memory_space<vmem>>, vector<2x128xf32>
    %c1_177 = arith.constant 1 : index
    %c0_178 = arith.constant 0 : index
    %178 = vector.load %arg8[%c1_177, %c0_178] : memref<10x128xf32, #tpu.memory_space<vmem>>, vector<2x128xf32>
    %c2_179 = arith.constant 2 : index
    %c0_180 = arith.constant 0 : index
    %179 = vector.load %arg8[%c2_179, %c0_180] : memref<10x128xf32, #tpu.memory_space<vmem>>, vector<2x128xf32>
    %180 = tpu.concatenate %177, %178, %179 in 1 : vector<2x128xf32>, vector<2x128xf32>, vector<2x128xf32> -> vector<2x384xf32>
    %181 = arith.truncf %180 : vector<2x384xf32> to vector<2x384xbf16>
    %c3968 = arith.constant 3968 : index
    %c0_181 = arith.constant 0 : index
    %182 = vector.load %arg2[%c3968, %c0_181] : memref<7552x128xbf16, #tpu.memory_space<vmem>>, vector<384x64xbf16>
    %cst_182 = arith.constant dense<0.000000e+00> : vector<2x64xf32>
    %183 = tpu.matmul %181, %182, %cst_182 {dimension_numbers = #tpu.dot_dimension_numbers<[1], [0], [0], [1], [0, 0, 1, 1], [], []>} : vector<2x384xbf16>, vector<384x64xbf16>, vector<2x64xf32> -> vector<2x64xf32>
    %c11 = arith.constant 11 : index
    %c0_183 = arith.constant 0 : index
    %184 = vector.load %arg3[%c11, %c0_183] : memref<21x128xf32, #tpu.memory_space<vmem>>, vector<1x64xf32>
    %185 = vector.broadcast %184 : vector<1x64xf32> to vector<2x64xf32>
    %186 = arith.addf %183, %185 : vector<2x64xf32>
    %187 = arith.addf %186, %176 : vector<2x64xf32>
    %cst_184 = arith.constant 0.000000e+00 : f32
    %188 = vector.broadcast %cst_184 : f32 to vector<2x64xf32>
    %189 = arith.maximumf %187, %188 : vector<2x64xf32>
    %c1_185 = arith.constant 1 : index
    %c0_186 = arith.constant 0 : index
    %190 = vector.load %arg7[%c1_185, %c0_186] : memref<10x128xf32, #tpu.memory_space<vmem>>, vector<2x64xf32>
    tpu.vector_store %arg7[%c1_185, %c0_186], %189 {strides = array<i32>} : memref<10x128xf32, #tpu.memory_space<vmem>>, vector<2x64xf32>,
    %c3_187 = arith.constant 3 : index
    %c0_188 = arith.constant 0 : index
    %191 = vector.load %arg7[%c3_187, %c0_188] : memref<10x128xf32, #tpu.memory_space<vmem>>, vector<1x128xf32>
    tpu.vector_store %arg7[%c3_187, %c0_188], %6 {strides = array<i32>} : memref<10x128xf32, #tpu.memory_space<vmem>>, vector<1x128xf32>,
    %c0_189 = arith.constant 0 : index
    %c0_190 = arith.constant 0 : index
    %192 = vector.load %arg7[%c0_189, %c0_190] : memref<10x128xf32, #tpu.memory_space<vmem>>, vector<2x128xf32>
    %c1_191 = arith.constant 1 : index
    %c0_192 = arith.constant 0 : index
    %193 = vector.load %arg7[%c1_191, %c0_192] : memref<10x128xf32, #tpu.memory_space<vmem>>, vector<2x128xf32>
    %c2_193 = arith.constant 2 : index
    %c0_194 = arith.constant 0 : index
    %194 = vector.load %arg7[%c2_193, %c0_194] : memref<10x128xf32, #tpu.memory_space<vmem>>, vector<2x128xf32>
    %195 = tpu.concatenate %192, %193, %194 in 1 : vector<2x128xf32>, vector<2x128xf32>, vector<2x128xf32> -> vector<2x384xf32>
    %196 = arith.truncf %195 : vector<2x384xf32> to vector<2x384xbf16>
    %c4480 = arith.constant 4480 : index
    %c0_195 = arith.constant 0 : index
    %197 = vector.load %arg2[%c4480, %c0_195] : memref<7552x128xbf16, #tpu.memory_space<vmem>>, vector<384x64xbf16>
    %cst_196 = arith.constant dense<0.000000e+00> : vector<2x64xf32>
    %198 = tpu.matmul %196, %197, %cst_196 {dimension_numbers = #tpu.dot_dimension_numbers<[1], [0], [0], [1], [0, 0, 1, 1], [], []>} : vector<2x384xbf16>, vector<384x64xbf16>, vector<2x64xf32> -> vector<2x64xf32>
    %c13 = arith.constant 13 : index
    %c0_197 = arith.constant 0 : index
    %199 = vector.load %arg3[%c13, %c0_197] : memref<21x128xf32, #tpu.memory_space<vmem>>, vector<1x64xf32>
    %200 = vector.broadcast %199 : vector<1x64xf32> to vector<2x64xf32>
    %201 = arith.addf %198, %200 : vector<2x64xf32>
    %cst_198 = arith.constant 0.000000e+00 : f32
    %202 = vector.broadcast %cst_198 : f32 to vector<2x64xf32>
    %203 = arith.maximumf %201, %202 : vector<2x64xf32>
    %c1_199 = arith.constant 1 : index
    %c0_200 = arith.constant 0 : index
    %204 = vector.load %arg8[%c1_199, %c0_200] : memref<10x128xf32, #tpu.memory_space<vmem>>, vector<2x64xf32>
    tpu.vector_store %arg8[%c1_199, %c0_200], %203 {strides = array<i32>} : memref<10x128xf32, #tpu.memory_space<vmem>>, vector<2x64xf32>,
    %c3_201 = arith.constant 3 : index
    %c0_202 = arith.constant 0 : index
    %205 = vector.load %arg8[%c3_201, %c0_202] : memref<10x128xf32, #tpu.memory_space<vmem>>, vector<1x128xf32>
    tpu.vector_store %arg8[%c3_201, %c0_202], %6 {strides = array<i32>} : memref<10x128xf32, #tpu.memory_space<vmem>>, vector<1x128xf32>,
    %c1_203 = arith.constant 1 : index
    %c0_204 = arith.constant 0 : index
    %206 = vector.load %arg7[%c1_203, %c0_204] : memref<10x128xf32, #tpu.memory_space<vmem>>, vector<2x64xf32>
    %c0_205 = arith.constant 0 : index
    %c0_206 = arith.constant 0 : index
    %207 = vector.load %arg8[%c0_205, %c0_206] : memref<10x128xf32, #tpu.memory_space<vmem>>, vector<2x128xf32>
    %c1_207 = arith.constant 1 : index
    %c0_208 = arith.constant 0 : index
    %208 = vector.load %arg8[%c1_207, %c0_208] : memref<10x128xf32, #tpu.memory_space<vmem>>, vector<2x128xf32>
    %c2_209 = arith.constant 2 : index
    %c0_210 = arith.constant 0 : index
    %209 = vector.load %arg8[%c2_209, %c0_210] : memref<10x128xf32, #tpu.memory_space<vmem>>, vector<2x128xf32>
    %210 = tpu.concatenate %207, %208, %209 in 1 : vector<2x128xf32>, vector<2x128xf32>, vector<2x128xf32> -> vector<2x384xf32>
    %211 = arith.truncf %210 : vector<2x384xf32> to vector<2x384xbf16>
    %c4864 = arith.constant 4864 : index
    %c0_211 = arith.constant 0 : index
    %212 = vector.load %arg2[%c4864, %c0_211] : memref<7552x128xbf16, #tpu.memory_space<vmem>>, vector<384x64xbf16>
    %cst_212 = arith.constant dense<0.000000e+00> : vector<2x64xf32>
    %213 = tpu.matmul %211, %212, %cst_212 {dimension_numbers = #tpu.dot_dimension_numbers<[1], [0], [0], [1], [0, 0, 1, 1], [], []>} : vector<2x384xbf16>, vector<384x64xbf16>, vector<2x64xf32> -> vector<2x64xf32>
    %c14 = arith.constant 14 : index
    %c0_213 = arith.constant 0 : index
    %214 = vector.load %arg3[%c14, %c0_213] : memref<21x128xf32, #tpu.memory_space<vmem>>, vector<1x64xf32>
    %215 = vector.broadcast %214 : vector<1x64xf32> to vector<2x64xf32>
    %216 = arith.addf %213, %215 : vector<2x64xf32>
    %217 = arith.addf %216, %206 : vector<2x64xf32>
    %cst_214 = arith.constant 0.000000e+00 : f32
    %218 = vector.broadcast %cst_214 : f32 to vector<2x64xf32>
    %219 = arith.maximumf %217, %218 : vector<2x64xf32>
    %c1_215 = arith.constant 1 : index
    %c0_216 = arith.constant 0 : index
    %220 = vector.load %arg7[%c1_215, %c0_216] : memref<10x128xf32, #tpu.memory_space<vmem>>, vector<2x64xf32>
    tpu.vector_store %arg7[%c1_215, %c0_216], %219 {strides = array<i32>} : memref<10x128xf32, #tpu.memory_space<vmem>>, vector<2x64xf32>,
    %c3_217 = arith.constant 3 : index
    %c0_218 = arith.constant 0 : index
    %221 = vector.load %arg7[%c3_217, %c0_218] : memref<10x128xf32, #tpu.memory_space<vmem>>, vector<1x128xf32>
    tpu.vector_store %arg7[%c3_217, %c0_218], %6 {strides = array<i32>} : memref<10x128xf32, #tpu.memory_space<vmem>>, vector<1x128xf32>,
    %c0_219 = arith.constant 0 : index
    %c0_220 = arith.constant 0 : index
    %222 = vector.load %arg7[%c0_219, %c0_220] : memref<10x128xf32, #tpu.memory_space<vmem>>, vector<2x128xf32>
    %c1_221 = arith.constant 1 : index
    %c0_222 = arith.constant 0 : index
    %223 = vector.load %arg7[%c1_221, %c0_222] : memref<10x128xf32, #tpu.memory_space<vmem>>, vector<2x128xf32>
    %c2_223 = arith.constant 2 : index
    %c0_224 = arith.constant 0 : index
    %224 = vector.load %arg7[%c2_223, %c0_224] : memref<10x128xf32, #tpu.memory_space<vmem>>, vector<2x128xf32>
    %225 = tpu.concatenate %222, %223, %224 in 1 : vector<2x128xf32>, vector<2x128xf32>, vector<2x128xf32> -> vector<2x384xf32>
    %226 = arith.truncf %225 : vector<2x384xf32> to vector<2x384xbf16>
    %c5248 = arith.constant 5248 : index
    %c0_225 = arith.constant 0 : index
    %227 = vector.load %arg2[%c5248, %c0_225] : memref<7552x128xbf16, #tpu.memory_space<vmem>>, vector<384x64xbf16>
    %cst_226 = arith.constant dense<0.000000e+00> : vector<2x64xf32>
    %228 = tpu.matmul %226, %227, %cst_226 {dimension_numbers = #tpu.dot_dimension_numbers<[1], [0], [0], [1], [0, 0, 1, 1], [], []>} : vector<2x384xbf16>, vector<384x64xbf16>, vector<2x64xf32> -> vector<2x64xf32>
    %c15 = arith.constant 15 : index
    %c0_227 = arith.constant 0 : index
    %229 = vector.load %arg3[%c15, %c0_227] : memref<21x128xf32, #tpu.memory_space<vmem>>, vector<1x64xf32>
    %230 = vector.broadcast %229 : vector<1x64xf32> to vector<2x64xf32>
    %231 = arith.addf %228, %230 : vector<2x64xf32>
    %cst_228 = arith.constant 0.000000e+00 : f32
    %232 = vector.broadcast %cst_228 : f32 to vector<2x64xf32>
    %233 = arith.maximumf %231, %232 : vector<2x64xf32>
    %c1_229 = arith.constant 1 : index
    %c0_230 = arith.constant 0 : index
    %234 = vector.load %arg8[%c1_229, %c0_230] : memref<10x128xf32, #tpu.memory_space<vmem>>, vector<2x64xf32>
    tpu.vector_store %arg8[%c1_229, %c0_230], %233 {strides = array<i32>} : memref<10x128xf32, #tpu.memory_space<vmem>>, vector<2x64xf32>,
    %c3_231 = arith.constant 3 : index
    %c0_232 = arith.constant 0 : index
    %235 = vector.load %arg8[%c3_231, %c0_232] : memref<10x128xf32, #tpu.memory_space<vmem>>, vector<1x128xf32>
    tpu.vector_store %arg8[%c3_231, %c0_232], %6 {strides = array<i32>} : memref<10x128xf32, #tpu.memory_space<vmem>>, vector<1x128xf32>,
    %c1_233 = arith.constant 1 : index
    %c0_234 = arith.constant 0 : index
    %236 = vector.load %arg7[%c1_233, %c0_234] : memref<10x128xf32, #tpu.memory_space<vmem>>, vector<2x64xf32>
    %c0_235 = arith.constant 0 : index
    %c0_236 = arith.constant 0 : index
    %237 = vector.load %arg8[%c0_235, %c0_236] : memref<10x128xf32, #tpu.memory_space<vmem>>, vector<2x128xf32>
    %c1_237 = arith.constant 1 : index
    %c0_238 = arith.constant 0 : index
    %238 = vector.load %arg8[%c1_237, %c0_238] : memref<10x128xf32, #tpu.memory_space<vmem>>, vector<2x128xf32>
    %c2_239 = arith.constant 2 : index
    %c0_240 = arith.constant 0 : index
    %239 = vector.load %arg8[%c2_239, %c0_240] : memref<10x128xf32, #tpu.memory_space<vmem>>, vector<2x128xf32>
    %240 = tpu.concatenate %237, %238, %239 in 1 : vector<2x128xf32>, vector<2x128xf32>, vector<2x128xf32> -> vector<2x384xf32>
    %241 = arith.truncf %240 : vector<2x384xf32> to vector<2x384xbf16>
    %c5632 = arith.constant 5632 : index
    %c0_241 = arith.constant 0 : index
    %242 = vector.load %arg2[%c5632, %c0_241] : memref<7552x128xbf16, #tpu.memory_space<vmem>>, vector<384x64xbf16>
    %cst_242 = arith.constant dense<0.000000e+00> : vector<2x64xf32>
    %243 = tpu.matmul %241, %242, %cst_242 {dimension_numbers = #tpu.dot_dimension_numbers<[1], [0], [0], [1], [0, 0, 1, 1], [], []>} : vector<2x384xbf16>, vector<384x64xbf16>, vector<2x64xf32> -> vector<2x64xf32>
    %c16 = arith.constant 16 : index
    %c0_243 = arith.constant 0 : index
    %244 = vector.load %arg3[%c16, %c0_243] : memref<21x128xf32, #tpu.memory_space<vmem>>, vector<1x64xf32>
    %245 = vector.broadcast %244 : vector<1x64xf32> to vector<2x64xf32>
    %246 = arith.addf %243, %245 : vector<2x64xf32>
    %247 = arith.addf %246, %236 : vector<2x64xf32>
    %cst_244 = arith.constant 0.000000e+00 : f32
    %248 = vector.broadcast %cst_244 : f32 to vector<2x64xf32>
    %249 = arith.maximumf %247, %248 : vector<2x64xf32>
    %c1_245 = arith.constant 1 : index
    %c0_246 = arith.constant 0 : index
    %250 = vector.load %arg7[%c1_245, %c0_246] : memref<10x128xf32, #tpu.memory_space<vmem>>, vector<2x64xf32>
    tpu.vector_store %arg7[%c1_245, %c0_246], %249 {strides = array<i32>} : memref<10x128xf32, #tpu.memory_space<vmem>>, vector<2x64xf32>,
    %c3_247 = arith.constant 3 : index
    %c0_248 = arith.constant 0 : index
    %251 = vector.load %arg7[%c3_247, %c0_248] : memref<10x128xf32, #tpu.memory_space<vmem>>, vector<1x128xf32>
    tpu.vector_store %arg7[%c3_247, %c0_248], %6 {strides = array<i32>} : memref<10x128xf32, #tpu.memory_space<vmem>>, vector<1x128xf32>,
    %c0_249 = arith.constant 0 : index
    %c0_250 = arith.constant 0 : index
    %252 = vector.load %arg7[%c0_249, %c0_250] : memref<10x128xf32, #tpu.memory_space<vmem>>, vector<2x128xf32>
    %c1_251 = arith.constant 1 : index
    %c0_252 = arith.constant 0 : index
    %253 = vector.load %arg7[%c1_251, %c0_252] : memref<10x128xf32, #tpu.memory_space<vmem>>, vector<2x128xf32>
    %c2_253 = arith.constant 2 : index
    %c0_254 = arith.constant 0 : index
    %254 = vector.load %arg7[%c2_253, %c0_254] : memref<10x128xf32, #tpu.memory_space<vmem>>, vector<2x128xf32>
    %255 = tpu.concatenate %252, %253, %254 in 1 : vector<2x128xf32>, vector<2x128xf32>, vector<2x128xf32> -> vector<2x384xf32>
    %256 = arith.truncf %255 : vector<2x384xf32> to vector<2x384xbf16>
    %c6016 = arith.constant 6016 : index
    %c0_255 = arith.constant 0 : index
    %257 = vector.load %arg2[%c6016, %c0_255] : memref<7552x128xbf16, #tpu.memory_space<vmem>>, vector<384x64xbf16>
    %cst_256 = arith.constant dense<0.000000e+00> : vector<2x64xf32>
    %258 = tpu.matmul %256, %257, %cst_256 {dimension_numbers = #tpu.dot_dimension_numbers<[1], [0], [0], [1], [0, 0, 1, 1], [], []>} : vector<2x384xbf16>, vector<384x64xbf16>, vector<2x64xf32> -> vector<2x64xf32>
    %c17 = arith.constant 17 : index
    %c0_257 = arith.constant 0 : index
    %259 = vector.load %arg3[%c17, %c0_257] : memref<21x128xf32, #tpu.memory_space<vmem>>, vector<1x64xf32>
    %260 = vector.broadcast %259 : vector<1x64xf32> to vector<2x64xf32>
    %261 = arith.addf %258, %260 : vector<2x64xf32>
    %cst_258 = arith.constant 0.000000e+00 : f32
    %262 = vector.broadcast %cst_258 : f32 to vector<2x64xf32>
    %263 = arith.maximumf %261, %262 : vector<2x64xf32>
    %c1_259 = arith.constant 1 : index
    %c0_260 = arith.constant 0 : index
    %264 = vector.load %arg8[%c1_259, %c0_260] : memref<10x128xf32, #tpu.memory_space<vmem>>, vector<2x64xf32>
    tpu.vector_store %arg8[%c1_259, %c0_260], %263 {strides = array<i32>} : memref<10x128xf32, #tpu.memory_space<vmem>>, vector<2x64xf32>,
    %c3_261 = arith.constant 3 : index
    %c0_262 = arith.constant 0 : index
    %265 = vector.load %arg8[%c3_261, %c0_262] : memref<10x128xf32, #tpu.memory_space<vmem>>, vector<1x128xf32>
    tpu.vector_store %arg8[%c3_261, %c0_262], %6 {strides = array<i32>} : memref<10x128xf32, #tpu.memory_space<vmem>>, vector<1x128xf32>,
    %c1_263 = arith.constant 1 : index
    %c0_264 = arith.constant 0 : index
    %266 = vector.load %arg7[%c1_263, %c0_264] : memref<10x128xf32, #tpu.memory_space<vmem>>, vector<2x64xf32>
    %c0_265 = arith.constant 0 : index
    %c0_266 = arith.constant 0 : index
    %267 = vector.load %arg8[%c0_265, %c0_266] : memref<10x128xf32, #tpu.memory_space<vmem>>, vector<2x128xf32>
    %c1_267 = arith.constant 1 : index
    %c0_268 = arith.constant 0 : index
    %268 = vector.load %arg8[%c1_267, %c0_268] : memref<10x128xf32, #tpu.memory_space<vmem>>, vector<2x128xf32>
    %c2_269 = arith.constant 2 : index
    %c0_270 = arith.constant 0 : index
    %269 = vector.load %arg8[%c2_269, %c0_270] : memref<10x128xf32, #tpu.memory_space<vmem>>, vector<2x128xf32>
    %270 = tpu.concatenate %267, %268, %269 in 1 : vector<2x128xf32>, vector<2x128xf32>, vector<2x128xf32> -> vector<2x384xf32>
    %271 = arith.truncf %270 : vector<2x384xf32> to vector<2x384xbf16>
    %c6400 = arith.constant 6400 : index
    %c0_271 = arith.constant 0 : index
    %272 = vector.load %arg2[%c6400, %c0_271] : memref<7552x128xbf16, #tpu.memory_space<vmem>>, vector<384x64xbf16>
    %cst_272 = arith.constant dense<0.000000e+00> : vector<2x64xf32>
    %273 = tpu.matmul %271, %272, %cst_272 {dimension_numbers = #tpu.dot_dimension_numbers<[1], [0], [0], [1], [0, 0, 1, 1], [], []>} : vector<2x384xbf16>, vector<384x64xbf16>, vector<2x64xf32> -> vector<2x64xf32>
    %c18 = arith.constant 18 : index
    %c0_273 = arith.constant 0 : index
    %274 = vector.load %arg3[%c18, %c0_273] : memref<21x128xf32, #tpu.memory_space<vmem>>, vector<1x64xf32>
    %275 = vector.broadcast %274 : vector<1x64xf32> to vector<2x64xf32>
    %276 = arith.addf %273, %275 : vector<2x64xf32>
    %277 = arith.addf %276, %266 : vector<2x64xf32>
    %cst_274 = arith.constant 0.000000e+00 : f32
    %278 = vector.broadcast %cst_274 : f32 to vector<2x64xf32>
    %279 = arith.maximumf %277, %278 : vector<2x64xf32>
    %c1_275 = arith.constant 1 : index
    %c0_276 = arith.constant 0 : index
    %280 = vector.load %arg7[%c1_275, %c0_276] : memref<10x128xf32, #tpu.memory_space<vmem>>, vector<2x64xf32>
    tpu.vector_store %arg7[%c1_275, %c0_276], %279 {strides = array<i32>} : memref<10x128xf32, #tpu.memory_space<vmem>>, vector<2x64xf32>,
    %c3_277 = arith.constant 3 : index
    %c0_278 = arith.constant 0 : index
    %281 = vector.load %arg7[%c3_277, %c0_278] : memref<10x128xf32, #tpu.memory_space<vmem>>, vector<1x128xf32>
    tpu.vector_store %arg7[%c3_277, %c0_278], %6 {strides = array<i32>} : memref<10x128xf32, #tpu.memory_space<vmem>>, vector<1x128xf32>,
    %c0_279 = arith.constant 0 : index
    %c0_280 = arith.constant 0 : index
    %282 = vector.load %arg7[%c0_279, %c0_280] : memref<10x128xf32, #tpu.memory_space<vmem>>, vector<2x128xf32>
    %c1_281 = arith.constant 1 : index
    %c0_282 = arith.constant 0 : index
    %283 = vector.load %arg7[%c1_281, %c0_282] : memref<10x128xf32, #tpu.memory_space<vmem>>, vector<2x128xf32>
    %c2_283 = arith.constant 2 : index
    %c0_284 = arith.constant 0 : index
    %284 = vector.load %arg7[%c2_283, %c0_284] : memref<10x128xf32, #tpu.memory_space<vmem>>, vector<2x128xf32>
    %285 = tpu.concatenate %282, %283, %284 in 1 : vector<2x128xf32>, vector<2x128xf32>, vector<2x128xf32> -> vector<2x384xf32>
    %286 = arith.truncf %285 : vector<2x384xf32> to vector<2x384xbf16>
    %c6784 = arith.constant 6784 : index
    %c0_285 = arith.constant 0 : index
    %287 = vector.load %arg2[%c6784, %c0_285] : memref<7552x128xbf16, #tpu.memory_space<vmem>>, vector<384x64xbf16>
    %cst_286 = arith.constant dense<0.000000e+00> : vector<2x64xf32>
    %288 = tpu.matmul %286, %287, %cst_286 {dimension_numbers = #tpu.dot_dimension_numbers<[1], [0], [0], [1], [0, 0, 1, 1], [], []>} : vector<2x384xbf16>, vector<384x64xbf16>, vector<2x64xf32> -> vector<2x64xf32>
    %c19 = arith.constant 19 : index
    %c0_287 = arith.constant 0 : index
    %289 = vector.load %arg3[%c19, %c0_287] : memref<21x128xf32, #tpu.memory_space<vmem>>, vector<1x64xf32>
    %290 = vector.broadcast %289 : vector<1x64xf32> to vector<2x64xf32>
    %291 = arith.addf %288, %290 : vector<2x64xf32>
    %cst_288 = arith.constant 0.000000e+00 : f32
    %292 = vector.broadcast %cst_288 : f32 to vector<2x64xf32>
    %293 = arith.maximumf %291, %292 : vector<2x64xf32>
    %c1_289 = arith.constant 1 : index
    %c0_290 = arith.constant 0 : index
    %294 = vector.load %arg8[%c1_289, %c0_290] : memref<10x128xf32, #tpu.memory_space<vmem>>, vector<2x64xf32>
    tpu.vector_store %arg8[%c1_289, %c0_290], %293 {strides = array<i32>} : memref<10x128xf32, #tpu.memory_space<vmem>>, vector<2x64xf32>,
    %c3_291 = arith.constant 3 : index
    %c0_292 = arith.constant 0 : index
    %295 = vector.load %arg8[%c3_291, %c0_292] : memref<10x128xf32, #tpu.memory_space<vmem>>, vector<1x128xf32>
    tpu.vector_store %arg8[%c3_291, %c0_292], %6 {strides = array<i32>} : memref<10x128xf32, #tpu.memory_space<vmem>>, vector<1x128xf32>,
    %c1_293 = arith.constant 1 : index
    %c0_294 = arith.constant 0 : index
    %296 = vector.load %arg7[%c1_293, %c0_294] : memref<10x128xf32, #tpu.memory_space<vmem>>, vector<2x64xf32>
    %c0_295 = arith.constant 0 : index
    %c0_296 = arith.constant 0 : index
    %297 = vector.load %arg8[%c0_295, %c0_296] : memref<10x128xf32, #tpu.memory_space<vmem>>, vector<2x128xf32>
    %c1_297 = arith.constant 1 : index
    %c0_298 = arith.constant 0 : index
    %298 = vector.load %arg8[%c1_297, %c0_298] : memref<10x128xf32, #tpu.memory_space<vmem>>, vector<2x128xf32>
    %c2_299 = arith.constant 2 : index
    %c0_300 = arith.constant 0 : index
    %299 = vector.load %arg8[%c2_299, %c0_300] : memref<10x128xf32, #tpu.memory_space<vmem>>, vector<2x128xf32>
    %300 = tpu.concatenate %297, %298, %299 in 1 : vector<2x128xf32>, vector<2x128xf32>, vector<2x128xf32> -> vector<2x384xf32>
    %301 = arith.truncf %300 : vector<2x384xf32> to vector<2x384xbf16>
    %c7168 = arith.constant 7168 : index
    %c0_301 = arith.constant 0 : index
    %302 = vector.load %arg2[%c7168, %c0_301] : memref<7552x128xbf16, #tpu.memory_space<vmem>>, vector<384x64xbf16>
    %cst_302 = arith.constant dense<0.000000e+00> : vector<2x64xf32>
    %303 = tpu.matmul %301, %302, %cst_302 {dimension_numbers = #tpu.dot_dimension_numbers<[1], [0], [0], [1], [0, 0, 1, 1], [], []>} : vector<2x384xbf16>, vector<384x64xbf16>, vector<2x64xf32> -> vector<2x64xf32>
    %c20 = arith.constant 20 : index
    %c0_303 = arith.constant 0 : index
    %304 = vector.load %arg3[%c20, %c0_303] : memref<21x128xf32, #tpu.memory_space<vmem>>, vector<1x64xf32>
    %305 = vector.broadcast %304 : vector<1x64xf32> to vector<2x64xf32>
    %306 = arith.addf %303, %305 : vector<2x64xf32>
    %307 = arith.addf %306, %296 : vector<2x64xf32>
    %cst_304 = arith.constant 0.000000e+00 : f32
    %308 = vector.broadcast %cst_304 : f32 to vector<2x64xf32>
    %309 = arith.maximumf %307, %308 : vector<2x64xf32>
    %c1_305 = arith.constant 1 : index
    %c0_306 = arith.constant 0 : index
    %310 = vector.load %arg7[%c1_305, %c0_306] : memref<10x128xf32, #tpu.memory_space<vmem>>, vector<2x64xf32>
    tpu.vector_store %arg7[%c1_305, %c0_306], %309 {strides = array<i32>} : memref<10x128xf32, #tpu.memory_space<vmem>>, vector<2x64xf32>,
    %c3_307 = arith.constant 3 : index
    %c0_308 = arith.constant 0 : index
    %311 = vector.load %arg7[%c3_307, %c0_308] : memref<10x128xf32, #tpu.memory_space<vmem>>, vector<1x128xf32>
    tpu.vector_store %arg7[%c3_307, %c0_308], %6 {strides = array<i32>} : memref<10x128xf32, #tpu.memory_space<vmem>>, vector<1x128xf32>,
    %c1_309 = arith.constant 1 : index
    %c0_310 = arith.constant 0 : index
    %312 = vector.load %arg7[%c1_309, %c0_310] : memref<10x128xf32, #tpu.memory_space<vmem>>, vector<2x64xf32>
    %c0_311 = arith.constant 0 : index
    %c0_312 = arith.constant 0 : index
    %c0_313 = arith.constant 0 : index
    %313 = vector.load %arg4[%c0_311, %c0_312, %c0_313] : memref<1x2x64xf32, #tpu.memory_space<vmem>>, vector<1x2x64xf32>
    %314 = vector.shape_cast %313 : vector<1x2x64xf32> to vector<2x64xf32>
    %315 = vector.shape_cast %312 : vector<2x64xf32> to vector<1x2x64xf32>
    tpu.vector_store %arg4[%c0_311, %c0_312, %c0_313], %315 {strides = array<i32>} : memref<1x2x64xf32, #tpu.memory_space<vmem>>, vector<1x2x64xf32>,
    return
  }
  func.func @transform_0(%arg0: i32) -> (i32, i32, i32) {
    %c0_i32 = arith.constant 0 : i32
    %c0_i32_0 = arith.constant 0 : i32
    %c0_i32_1 = arith.constant 0 : i32
    return %arg0, %c0_i32, %c0_i32_0 : i32, i32, i32
  }
  func.func @transform_1(%arg0: i32) -> (i32, i32) {
    %c0_i32 = arith.constant 0 : i32
    %c0_i32_0 = arith.constant 0 : i32
    %c0_i32_1 = arith.constant 0 : i32
    return %c0_i32, %c0_i32_0 : i32, i32
  }
  func.func @transform_2(%arg0: i32) -> (i32, i32) {
    %c0_i32 = arith.constant 0 : i32
    %c0_i32_0 = arith.constant 0 : i32
    %c0_i32_1 = arith.constant 0 : i32
    return %c0_i32, %c0_i32_0 : i32, i32
  }
  func.func @transform_3(%arg0: i32) -> (i32, i32, i32) {
    %c0_i32 = arith.constant 0 : i32
    %c0_i32_0 = arith.constant 0 : i32
    %c0_i32_1 = arith.constant 0 : i32
    return %arg0, %c0_i32, %c0_i32_0 : i32, i32, i32
  }
}

</mosaic_0001>

<llo_original>
// kernel: forward.1
$region0: #{forward.1}
  #allocation0 [shape = 'u32[]', space=smem, size = 0x4, offset = 0x4, fixed_abs, tag = 'smem constant byte address 0x4 - core index']
  #allocation1 [shape = 'u32[144,128]{1,0:T(1,128)}', space=vmem, size = 0x12000, scoped, tag = 'internal scratch']
  #allocation2 [shape = 'f32[34,128]{1,0:T(8,128)}', space=vmem, size = 0x5000, scoped, tag = 'scratch operand']
  #allocation3 [shape = 'f32[16,128]{1,0:T(8,128)}', space=vmem, size = 0x2000, scoped, tag = 'scratch operand']
  #allocation4 [shape = 'f32[10,128]{1,0:T(8,128)}', space=vmem, size = 0x2000, scoped, tag = 'scratch operand']
  #allocation5 [shape = 'f32[10,128]{1,0:T(8,128)}', space=vmem, size = 0x2000, scoped, tag = 'scratch operand']
  %s0 = inlined_call_operand.vmem [shape: f32[2,32,96], index: 0, kind: input, shape index: {}]
  %s1 = inlined_call_operand.hbm [shape: bf16[7552,128], index: 1, kind: input, shape index: {}]
  %s2 = inlined_call_operand.hbm [shape: f32[21,128], index: 2, kind: input, shape index: {}]
  %s3 = inlined_call_operand.vmem [shape: f32[2,2,64], index: 3, kind: output, shape index: {}]
  %s4 = sld [smem:[#allocation0]]
  $region53: #{forward.1} parent=0
    _
  %s6 = ssub.s32 1, %s4
  %s7 = scalar_select 0, %s6, %s4
  $region1: #{forward.1} parent=0
    #allocation6 [shape = 'u8[1933312]{0}', space=vmem, size = 0x1d8000, scoped, tag = 'input window, operand 1, single buffered']
    #allocation7 [shape = 's32[2]{0}', space=sflag, size = 0x8, scoped, tag = 'scoped memory for forward.1']
    #allocation8 [shape = 'u8[12288]{0}', space=vmem, size = 0x3000, scoped, tag = 'input window, operand 2, single buffered']
    #allocation9 [shape = 's32[1]{0}', space=sflag, size = 0x4, scoped, tag = 'scoped memory for forward.1']
    %8 = vsyncpa [#allocation7], 0
    %9 = vsyncpa [#allocation9], 0
    loop: start=0, step=1, limit=4
    $region2: #{forward.1} parent=1 // loop_pre_header
      _
    $region3: #{forward.1} parent=1 // loop_header
      %s11 = sphi 0, %s15
      %p12 = scmp.ge.s32.totalorder %s11, 4
      %s21 = sphi 0, %s23
      %s24 = sphi 0, %s21
      %s25 = sphi 0, %s24
      %s41 = sphi 0, %s25
      %s45 = sphi 0, %s45
      %s47 = sphi 0, %s45
      %s48 = sphi 0, %s47
      %s62 = sphi 0, %s48
      %s66 = sphi 0, %s66
      %s68 = sphi 0, %s66
      %s69 = sphi 0, %s68
      %s83 = sphi 0, %s69
      %s89 = sphi 0, %s91
      %s92 = sphi 0, %s89
      %s93 = sphi 0, %s92
      %s109 = sphi 0, %s93
    $region4: #{forward.1} parent=1 // loop_header_branch
      %14 = sbr.rel (%p12) target = $region8
    $region5: #{forward.1} parent=1 // loop_body
      %s16 = ssub.s32 %s11, 1
      %s17 = ssub.s32 %s11, 2
      %s18 = sadd.s32 %s11, 1
      %s19 = ssub.s32 %s11, %s18
      %p20 = scmp.eq.s32.totalorder %s19, 0
      %s22 = sadd.s32 %s21, 1
      %s23 = scalar_select %p20, %s21, %s22
      %p26 = pneg %p20
      %p27 = scmp.eq.s32.totalorder %s11, 1
      %p28 = por %p26, %p27
      %p29 = scmp.ne.s32.totalorder %s21, %s24
      %p30 = scmp.eq.s32.totalorder %s11, 0
      %p31 = por %p29, %p30
      %p32 = scmp.ne.s32.totalorder %s21, %s24
      %p33 = scmp.eq.s32.totalorder %s16, 1
      %p34 = por %p32, %p33
      %p35 = scmp.ne.s32.totalorder %s24, %s25
      %p36 = scmp.eq.s32.totalorder %s16, 0
      %p37 = por %p35, %p36
      %p38 = scmp.ne.s32.totalorder %s24, %s25
      %p39 = scmp.eq.s32.totalorder %s17, 1
      %p40 = por %p38, %p39
      %p42 = scmp.ne.s32.totalorder %s25, %s41
      %p43 = scmp.eq.s32.totalorder %s17, 0
      %p44 = por %p42, %p43
      %s46 = sadd.s32 %s45, 1
      %p49 = scmp.eq.s32.totalorder %s11, 1
      %p50 = scmp.ne.s32.totalorder %s45, %s47
      %p51 = scmp.eq.s32.totalorder %s11, 0
      %p52 = por %p50, %p51
      %p53 = scmp.ne.s32.totalorder %s45, %s47
      %p54 = scmp.eq.s32.totalorder %s16, 1
      %p55 = por %p53, %p54
      %p56 = scmp.ne.s32.totalorder %s47, %s48
      %p57 = scmp.eq.s32.totalorder %s16, 0
      %p58 = por %p56, %p57
      %p59 = scmp.ne.s32.totalorder %s47, %s48
      %p60 = scmp.eq.s32.totalorder %s17, 1
      %p61 = por %p59, %p60
      %p63 = scmp.ne.s32.totalorder %s48, %s62
      %p64 = scmp.eq.s32.totalorder %s17, 0
      %p65 = por %p63, %p64
      %s67 = sadd.s32 %s66, 1
      %p70 = scmp.eq.s32.totalorder %s11, 1
      %p71 = scmp.ne.s32.totalorder %s66, %s68
      %p72 = scmp.eq.s32.totalorder %s11, 0
      %p73 = por %p71, %p72
      %p74 = scmp.ne.s32.totalorder %s66, %s68
      %p75 = scmp.eq.s32.totalorder %s16, 1
      %p76 = por %p74, %p75
      %p77 = scmp.ne.s32.totalorder %s68, %s69
      %p78 = scmp.eq.s32.totalorder %s16, 0
      %p79 = por %p77, %p78
      %p80 = scmp.ne.s32.totalorder %s68, %s69
      %p81 = scmp.eq.s32.totalorder %s17, 1
      %p82 = por %p80, %p81
      %p84 = scmp.ne.s32.totalorder %s69, %s83
      %p85 = scmp.eq.s32.totalorder %s17, 0
      %p86 = por %p84, %p85
      %s87 = ssub.s32 %s11, %s18
      %p88 = scmp.eq.s32.totalorder %s87, 0
      %s90 = sadd.s32 %s89, 1
      %s91 = scalar_select %p88, %s89, %s90
      %p94 = pneg %p88
      %p95 = scmp.eq.s32.totalorder %s11, 1
      %p96 = por %p94, %p95
      %p97 = scmp.ne.s32.totalorder %s89, %s92
      %p98 = scmp.eq.s32.totalorder %s11, 0
      %p99 = por %p97, %p98
      %p100 = scmp.ne.s32.totalorder %s89, %s92
      %p101 = scmp.eq.s32.totalorder %s16, 1
      %p102 = por %p100, %p101
      %p103 = scmp.ne.s32.totalorder %s92, %s93
      %p104 = scmp.eq.s32.totalorder %s16, 0
      %p105 = por %p103, %p104
      %p106 = scmp.ne.s32.totalorder %s92, %s93
      %p107 = scmp.eq.s32.totalorder %s17, 1
      %p108 = por %p106, %p107
      %p110 = scmp.ne.s32.totalorder %s93, %s109
      %p111 = scmp.eq.s32.totalorder %s17, 0
      %p112 = por %p110, %p111
      %p113 = scmp.le.s32.totalorder 1, %s11
      %p114 = scmp.lt.s32.totalorder %s11, 3
      %p115 = pnand %p113, %p114
      %p116 = pneg %p115
      // Predicated region
      $region9: #{forward.1} parent=5 // pred_check
        _
      $region10: #{forward.1} parent=5 // pred_check_branch
        %118 = sbr.rel (%p115) target = $region12
      $region11: #{forward.1} parent=5 // pred_region
        %s119 = ssub.s32 %s11, 1
        // Predicated region
        $region13: #{forward.1} parent=11 // pred_check
          %p120 = pneg %p58
        $region14: #{forward.1} parent=11 // pred_check_branch
          %122 = sbr.rel (%p120) target = $region16
        $region15: #{forward.1} parent=11 // pred_region
          %s124 = ssub.s32 60416, 60416
          %125 = vsyncadd [#allocation7], %s124
          %s126 = sshll.u32 [#allocation6], 4
          %s127 = int_to_ptr.vmem [resolvable:$true] %s126
          %132 = dma.hbm_to_vmem [thread:$0]  %s1, 60416, %s127, [#allocation7], 64, 64, 4
        $region16: #{forward.1} parent=11 // pred_fallthru
          _
        // Predicated region
        $region17: #{forward.1} parent=11 // pred_check
          %p133 = pneg %p79
        $region18: #{forward.1} parent=11 // pred_check_branch
          %135 = sbr.rel (%p133) target = $region20
        $region19: #{forward.1} parent=11 // pred_region
          %s137 = ssub.s32 384, 384
          %138 = vsyncadd [#allocation9], %s137
          %s139 = sshll.u32 [#allocation8], 4
          %s140 = int_to_ptr.vmem [resolvable:$true] %s139
          %145 = dma.hbm_to_vmem [thread:$0]  %s2, 384, %s140, [#allocation9], 128, 128, 8
        $region20: #{forward.1} parent=11 // pred_fallthru
          _
      $region12: #{forward.1} parent=5 // pred_fallthru
        _
      %p146 = scmp.lt.s32.totalorder %s11, 2
      // Predicated region
      $region21: #{forward.1} parent=5 // pred_check
        %p147 = pneg %p146
      $region22: #{forward.1} parent=5 // pred_check_branch
        %149 = sbr.rel (%p147) target = $region24
      $region23: #{forward.1} parent=5 // pred_region
        // Predicated region
        $region25: #{forward.1} parent=23 // pred_check
          %p150 = pneg %p31
        $region26: #{forward.1} parent=23 // pred_check_branch
          %152 = sbr.rel (%p150) target = $region28
        $region27: #{forward.1} parent=23 // pred_region
          %p153 = scmp.lt.s32.totalorder %s11, 1
          %s154 = scalar_select %p153, %s11, 1
          %s155 = smul.addr %s154, 4
          %s156 = smul.addr %s155, 8
          %s157 = scalar_lea.vmem %s0, %s156
        $region28: #{forward.1} parent=23 // pred_fallthru
          _
      $region24: #{forward.1} parent=5 // pred_fallthru
        _
      %p158 = scmp.le.s32.totalorder 1, %s11
      %p159 = scmp.lt.s32.totalorder %s11, 3
      %p160 = pnand %p158, %p159
      %p161 = pneg %p160
      // Predicated region
      $region29: #{forward.1} parent=5 // pred_check
        _
      $region30: #{forward.1} parent=5 // pred_check_branch
        %163 = sbr.rel (%p160) target = $region32
      $region31: #{forward.1} parent=5 // pred_region
        %s164 = ssub.s32 %s11, 1
        // Predicated region
        $region33: #{forward.1} parent=31 // pred_check
          %p165 = pneg %p58
        $region34: #{forward.1} parent=31 // pred_check_branch
          %167 = sbr.rel (%p165) target = $region36
        $region35: #{forward.1} parent=31 // pred_region
          %168 = dma.done [#allocation7], 60416
        $region36: #{forward.1} parent=31 // pred_fallthru
          _
        // Predicated region
        $region37: #{forward.1} parent=31 // pred_check
          %p169 = pneg %p79
        $region38: #{forward.1} parent=31 // pred_check_branch
          %171 = sbr.rel (%p169) target = $region40
        $region39: #{forward.1} parent=31 // pred_region
          %172 = dma.done [#allocation9], 384
        $region40: #{forward.1} parent=31 // pred_fallthru
          _
        %p173 = scmp.lt.s32.totalorder %s16, 1
        %s174 = scalar_select %p173, %s16, 1
        %s175 = smul.addr %s174, 4
        %s176 = smul.addr %s175, 8
        %s177 = scalar_lea.vmem %s0, %s176
        %p178 = pneg %p37
        %p179 = pneg %p34
        %p180 = pneg %p58
        %p181 = pneg %p55
        %p182 = pneg %p79
        %p183 = pneg %p76
        %p184 = pneg %p105
        %p185 = pneg %p102
        %p186 = scmp.lt.s32.totalorder %s16, 1
        %s187 = scalar_select %p186, %s16, 1
        %s188 = smul.addr %s187, 2
        %s189 = scalar_lea.vmem %s3, %s188
        %p190 = scmp.lt.s32.totalorder %s16, 1
        %s191 = scalar_select %p190, %s16, 1
        %s192 = smul.addr %s191, 4
        %s193 = smul.addr %s192, 8
        %s194 = scalar_lea.vmem %s0, %s193
        %p195 = scmp.lt.s32.totalorder %s16, 1
        %s196 = scalar_select %p195, %s16, 1
        %s197 = smul.addr %s196, 2
        %s198 = scalar_lea.vmem %s3, %s197
        %200 = vst [vmem:[#allocation2] sm:$0xff] 0.0
        %201 = vst [vmem:[#allocation2 + $0x8] sm:$0xff] 0.0
        %202 = vst [vmem:[#allocation2 + $0x10] sm:$0xff] 0.0
        %203 = vst [vmem:[#allocation2 + $0x18] sm:$0xff] 0.0
        %204 = vst [vmem:[#allocation2 + $0x20] sm:$0x3] 0.0
        %205 = vst [vmem:[#allocation4] sm:$0xff] 0.0
        %206 = vst [vmem:[#allocation4 + $0x8] sm:$0x3] 0.0
        %207 = vst [vmem:[#allocation5] sm:$0xff] 0.0
        %208 = vst [vmem:[#allocation5 + $0x8] sm:$0x3] 0.0
        %v209 = vld [vmem:[%s194] sm:$0xff]
        %v210 = vld [vmem:[%s194 + $0x8] sm:$0xff]
        %v211 = vld [vmem:[%s194 + $0x10] sm:$0xff]
        %v212 = vld [vmem:[%s194 + $0x18] sm:$0xff]
        %vm213 = vcmask 785408
        %214 = vst.msk [vmem:[#allocation2 + $0x1] sm:$0xff] %vm213, %v209
        %215 = vst.msk [vmem:[#allocation2 + $0x9] sm:$0xff] %vm213, %v210
        %216 = vst.msk [vmem:[#allocation2 + $0x11] sm:$0xff] %vm213, %v211
        %217 = vst.msk [vmem:[#allocation2 + $0x19] sm:$0xff] %vm213, %v212
        %v218 = vld [vmem:[#allocation2] ss:$2 sm:$0xff]
        %s219 = scalar_lea.vmem [#allocation2], 16
        %v220 = vld [vmem:[%s219] ss:$2 sm:$0xff]
        %s221 = scalar_lea.vmem [#allocation2], 1
        %v222 = vld [vmem:[%s221] ss:$2 sm:$0xff]
        %s223 = scalar_lea.vmem [#allocation2], 17
        %v224 = vld [vmem:[%s223] ss:$2 sm:$0xff]
        %s225 = scalar_lea.vmem [#allocation2], 2
        %v226 = vld [vmem:[%s225] ss:$2 sm:$0xff]
        %s227 = scalar_lea.vmem [#allocation2], 18
        %v228 = vld [vmem:[%s227] ss:$2 sm:$0xff]
        %v229 = vpack.c.bf16 %v220, %v218
        %v230 = vpack.c.bf16 %v224, %v222
        %v231 = vpack.c.bf16 %v228, %v226
        %v232 = vld [vmem:[#allocation6] sm:$0xf]
        %v233 = vld [vmem:[#allocation6 + $0x4] sm:$0xf]
        %v234 = vld [vmem:[#allocation6 + $0x8] sm:$0xf]
        %v235 = vld [vmem:[#allocation6 + $0xc] sm:$0xf]
        %v236 = vld [vmem:[#allocation6 + $0x10] sm:$0xf]
        %v237 = vld [vmem:[#allocation6 + $0x14] sm:$0xf]
        %v238 = vld [vmem:[#allocation6 + $0x18] sm:$0xf]
        %v239 = vld [vmem:[#allocation6 + $0x1c] sm:$0xf]
        %v240 = vld [vmem:[#allocation6 + $0x20] sm:$0xf]
        %v241 = vld [vmem:[#allocation6 + $0x24] sm:$0xf]
        %v242 = vld [vmem:[#allocation6 + $0x28] sm:$0xf]
        %v243 = vld [vmem:[#allocation6 + $0x2c] sm:$0xf]
        %v244 = vld [vmem:[#allocation6 + $0x30] sm:$0xf]
        %v245 = vld [vmem:[#allocation6 + $0x34] sm:$0xf]
        %v246 = vld [vmem:[#allocation6 + $0x38] sm:$0xf]
        %v247 = vld [vmem:[#allocation6 + $0x3c] sm:$0xf]
        %v248 = vld [vmem:[#allocation6 + $0x40] sm:$0xf]
        %v249 = vld [vmem:[#allocation6 + $0x44] sm:$0xf]
        %v250 = vld [vmem:[#allocation6 + $0x48] sm:$0xf]
        %v251 = vld [vmem:[#allocation6 + $0x4c] sm:$0xf]
        %v252 = vld [vmem:[#allocation6 + $0x50] sm:$0xf]
        %v253 = vld [vmem:[#allocation6 + $0x54] sm:$0xf]
        %v254 = vld [vmem:[#allocation6 + $0x58] sm:$0xf]
        %v255 = vld [vmem:[#allocation6 + $0x5c] sm:$0xf]
        %v256 = vld [vmem:[#allocation6 + $0x60] sm:$0xf]
        %v257 = vld [vmem:[#allocation6 + $0x64] sm:$0xf]
        %v258 = vld [vmem:[#allocation6 + $0x68] sm:$0xf]
        %v259 = vld [vmem:[#allocation6 + $0x6c] sm:$0xf]
        %v260 = vld [vmem:[#allocation6 + $0x70] sm:$0xf]
        %v261 = vld [vmem:[#allocation6 + $0x74] sm:$0xf]
        %v262 = vld [vmem:[#allocation6 + $0x78] sm:$0xf]
        %v263 = vld [vmem:[#allocation6 + $0x7c] sm:$0xf]
        %v264 = vld [vmem:[#allocation6 + $0x80] sm:$0xf]
        %v265 = vld [vmem:[#allocation6 + $0x84] sm:$0xf]
        %v266 = vld [vmem:[#allocation6 + $0x88] sm:$0xf]
        %v267 = vld [vmem:[#allocation6 + $0x8c] sm:$0xf]
        %v268 = vld [vmem:[#allocation6 + $0x90] sm:$0xf]
        %v269 = vld [vmem:[#allocation6 + $0x94] sm:$0xf]
        %v270 = vld [vmem:[#allocation6 + $0x98] sm:$0xf]
        %v271 = vld [vmem:[#allocation6 + $0x9c] sm:$0xf]
        %v272 = vld [vmem:[#allocation6 + $0xa0] sm:$0xf]
        %v273 = vld [vmem:[#allocation6 + $0xa4] sm:$0xf]
        %v274 = vld [vmem:[#allocation6 + $0xa8] sm:$0xf]
        %v275 = vld [vmem:[#allocation6 + $0xac] sm:$0xf]
        %v276 = vld [vmem:[#allocation6 + $0xb0] sm:$0xf]
        %v277 = vld [vmem:[#allocation6 + $0xb4] sm:$0xf]
        %v278 = vld [vmem:[#allocation6 + $0xb8] sm:$0xf]
        %v279 = vld [vmem:[#allocation6 + $0xbc] sm:$0xf]
        %v280 = vld [vmem:[#allocation8] sm:$0x1]
        %v281 = vlaneseq
        %v282 = vshrl.u32 %v281, 7
        %v283 = vsub.s32 0, %v282
        %v284 = vrot.slane %v280, %v283
        %v333 = vunpack.c.l.b16 %v232
        %v334 = vunpack.c.l.b16 %v233
        %v335 = vunpack.c.l.b16 %v234
        %v336 = vunpack.c.l.b16 %v235
        %v337 = vunpack.c.l.b16 %v236
        %v338 = vunpack.c.l.b16 %v237
        %v339 = vunpack.c.l.b16 %v238
        %v340 = vunpack.c.l.b16 %v239
        %v341 = vunpack.c.l.b16 %v240
        %v342 = vunpack.c.l.b16 %v241
        %v343 = vunpack.c.l.b16 %v242
        %v344 = vunpack.c.l.b16 %v243
        %v345 = vunpack.c.l.b16 %v244
        %v346 = vunpack.c.l.b16 %v245
        %v347 = vunpack.c.l.b16 %v246
        %v348 = vunpack.c.l.b16 %v247
        %v349 = vunpack.c.l.b16 %v248
        %v350 = vunpack.c.l.b16 %v249
        %v351 = vunpack.c.l.b16 %v250
        %v352 = vunpack.c.l.b16 %v251
        %v353 = vunpack.c.l.b16 %v252
        %v354 = vunpack.c.l.b16 %v253
        %v355 = vunpack.c.l.b16 %v254
        %v356 = vunpack.c.l.b16 %v255
        %v357 = vunpack.c.l.b16 %v256
        %v358 = vunpack.c.l.b16 %v257
        %v359 = vunpack.c.l.b16 %v258
        %v360 = vunpack.c.l.b16 %v259
        %v361 = vunpack.c.l.b16 %v260
        %v362 = vunpack.c.l.b16 %v261
        %v363 = vunpack.c.l.b16 %v262
        %v364 = vunpack.c.l.b16 %v263
        %v365 = vunpack.c.l.b16 %v264
        %v366 = vunpack.c.l.b16 %v265
        %v367 = vunpack.c.l.b16 %v266
        %v368 = vunpack.c.l.b16 %v267
        %v369 = vunpack.c.l.b16 %v268
        %v370 = vunpack.c.l.b16 %v269
        %v371 = vunpack.c.l.b16 %v270
        %v372 = vunpack.c.l.b16 %v271
        %v373 = vunpack.c.l.b16 %v272
        %v374 = vunpack.c.l.b16 %v273
        %v375 = vunpack.c.l.b16 %v274
        %v376 = vunpack.c.l.b16 %v275
        %v377 = vunpack.c.l.b16 %v276
        %v378 = vunpack.c.l.b16 %v277
        %v379 = vunpack.c.l.b16 %v278
        %v380 = vunpack.c.l.b16 %v279
        %v381 = vpack.c.b16 %v334, %v333
        %v382 = vpack.c.b16 %v336, %v335
        %v383 = vpack.c.b16 %v338, %v337
        %v384 = vpack.c.b16 %v340, %v339
        %v385 = vpack.c.b16 %v342, %v341
        %v386 = vpack.c.b16 %v344, %v343
        %v387 = vpack.c.b16 %v346, %v345
        %v388 = vpack.c.b16 %v348, %v347
        %v389 = vpack.c.b16 %v350, %v349
        %v390 = vpack.c.b16 %v352, %v351
        %v391 = vpack.c.b16 %v354, %v353
        %v392 = vpack.c.b16 %v356, %v355
        %v393 = vpack.c.b16 %v358, %v357
        %v394 = vpack.c.b16 %v360, %v359
        %v395 = vpack.c.b16 %v362, %v361
        %v396 = vpack.c.b16 %v364, %v363
        %v397 = vpack.c.b16 %v366, %v365
        %v398 = vpack.c.b16 %v368, %v367
        %v399 = vpack.c.b16 %v370, %v369
        %v400 = vpack.c.b16 %v372, %v371
        %v401 = vpack.c.b16 %v374, %v373
        %v402 = vpack.c.b16 %v376, %v375
        %v403 = vpack.c.b16 %v378, %v377
        %v404 = vpack.c.b16 %v380, %v379
        %429 = vmatprep.subr.bf16.mxu0 0
        %430 = vmatpush1.bf16.msra.mxu0 %v381
        %431 = vmatprep.subr.bf16.mxu0 0
        %432 = vmatpush1.bf16.msra.mxu0 %v382
        %433 = vmatprep.subr.bf16.mxu0 0
        %434 = vmatpush1.bf16.msra.mxu0 %v383
        %435 = vmatprep.subr.bf16.mxu0 0
        %436 = vmatpush1.bf16.msra.mxu0 %v384
        %437 = vmatprep.subr.bf16.mxu0 0
        %438 = vmatpush1.bf16.msra.mxu0 %v385
        %439 = vmatprep.subr.bf16.mxu0 0
        %440 = vmatpush1.bf16.msra.mxu0 %v386
        %441 = vmatprep.subr.bf16.mxu0 0
        %442 = vmatpush1.bf16.msra.mxu0 %v387
        %443 = vmatprep.subr.bf16.mxu0 0
        %444 = vmatpush1.bf16.msra.mxu0 %v388
        %445 = vmatprep.subr.bf16.mxu0 0
        %446 = vmatpush1.bf16.msra.mxu0 %v389
        %447 = vmatprep.subr.bf16.mxu0 0
        %448 = vmatpush1.bf16.msra.mxu0 %v390
        %449 = vmatprep.subr.bf16.mxu0 0
        %450 = vmatpush1.bf16.msra.mxu0 %v391
        %451 = vmatprep.subr.bf16.mxu0 0
        %452 = vmatpush1.bf16.msra.mxu0 %v392
        %453 = vmatprep.subr.bf16.mxu0 0
        %454 = vmatpush1.bf16.msra.mxu0 %v393
        %455 = vmatprep.subr.bf16.mxu0 0
        %456 = vmatpush1.bf16.msra.mxu0 %v394
        %457 = vmatprep.subr.bf16.mxu0 0
        %458 = vmatpush1.bf16.msra.mxu0 %v395
        %459 = vmatprep.subr.bf16.mxu0 0
        %460 = vmatpush1.bf16.msra.mxu0 %v396
        %461 = vmatprep.mubr.bf16.mxu0 %v230
        %462 = vmatmul.mubr.bf16.gmra.mrb[0].mxu0 %v229
        %v463 = vpop.f32.mrb[0].mxu0
        %v464 = vadd.f32 %v284, %v463
        %v465 = vpop.f32.mrb[0].mxu0
        %v466 = vpop.f32.mrb[0].mxu0
        %v467 = vadd.f32 %v284, %v466
        %v468 = vpop.f32.mrb[0].mxu0
        %469 = vdwg.mxu0
        %470 = vmatprep.subr.bf16.mxu0 0
        %471 = vmatpush1.bf16.msra.mxu0 %v397
        %472 = vmatprep.subr.bf16.mxu0 0
        %473 = vmatpush1.bf16.msra.mxu0 %v398
        %474 = vmatprep.subr.bf16.mxu0 0
        %475 = vmatpush1.bf16.msra.mxu0 %v399
        %476 = vmatprep.subr.bf16.mxu0 0
        %477 = vmatpush1.bf16.msra.mxu0 %v400
        %478 = vmatprep.subr.bf16.mxu0 0
        %479 = vmatpush1.bf16.msra.mxu0 %v401
        %480 = vmatprep.subr.bf16.mxu0 0
        %481 = vmatpush1.bf16.msra.mxu0 %v402
        %482 = vmatprep.subr.bf16.mxu0 0
        %483 = vmatpush1.bf16.msra.mxu0 %v403
        %484 = vmatprep.subr.bf16.mxu0 0
        %485 = vmatpush1.bf16.msra.mxu0 %v404
        %486 = vmatprep.subr.bf16.mxu0 0
        %487 = vmatpush1.bf16.msra.mxu0 0
        %488 = vmatprep.subr.bf16.mxu0 0
        %489 = vmatpush1.bf16.msra.mxu0 0
        %490 = vmatprep.subr.bf16.mxu0 0
        %491 = vmatpush1.bf16.msra.mxu0 0
        %492 = vmatprep.subr.bf16.mxu0 0
        %493 = vmatpush1.bf16.msra.mxu0 0
        %494 = vmatprep.subr.bf16.mxu0 0
        %495 = vmatpush1.bf16.msra.mxu0 0
        %496 = vmatprep.subr.bf16.mxu0 0
        %497 = vmatpush1.bf16.msra.mxu0 0
        %498 = vmatprep.subr.bf16.mxu0 0
        %499 = vmatpush1.bf16.msra.mxu0 0
        %500 = vmatprep.subr.bf16.mxu0 0
        %501 = vmatpush1.bf16.msra.mxu0 0
        %502 = vmatprep.mubr.bf16.mxu0 0
        %503 = vmatmul.mubr.bf16.gmra.mrb[0].mxu0 %v231
        %v504 = vpop.f32.mrb[0].mxu0
        %v505 = vadd.f32 %v464, %v504
        %v506 = vpop.f32.mrb[0].mxu0
        %v507 = vpop.f32.mrb[0].mxu0
        %v508 = vadd.f32 %v467, %v507
        %v509 = vpop.f32.mrb[0].mxu0
        %510 = vdwg.mxu0
        %v511 = vmax.f32 %v505, 0.0
        %v512 = vmax.f32 %v508, 0.0
        %513 = vst [vmem:[#allocation3] sm:$0xff] %v511
        %514 = vst [vmem:[#allocation3 + $0x8] sm:$0xff] %v512
        %v515 = vld [vmem:[#allocation3] ss:$2 sm:$0xff]
        %s516 = scalar_lea.vmem [#allocation3], 1
        %v517 = vld [vmem:[%s516] ss:$2 sm:$0xff]
        %v518 = vmax.f32 %v515, %v517
        %520 = vrot.lane.b32.xlu0 %v518, 64
        %v521 = vpop.permute.xlu0 %520
        %v523 = vmax.f32 %v518, %v521
        %vm524 = vcmask 523264
        %525 = vst.msk [vmem:[#allocation4 + $0x1] sm:$0xff] %vm524, %v523
        %v526 = vld [vmem:[#allocation4] sm:$0xff]
        %v527 = vld [vmem:[#allocation4 + $0x1] sm:$0xff]
        %v528 = vld [vmem:[#allocation4 + $0x2] sm:$0xff]
        %v529 = vpack.c.bf16 %v526, %v526
        %v530 = vpack.c.bf16 %v527, %v527
        %v531 = vpack.c.bf16 %v528, %v528
        %v532 = vld [vmem:[#allocation6 + $0xc0] sm:$0xf]
        %v533 = vld [vmem:[#allocation6 + $0xc4] sm:$0xf]
        %v534 = vld [vmem:[#allocation6 + $0xc8] sm:$0xf]
        %v535 = vld [vmem:[#allocation6 + $0xcc] sm:$0xf]
        %v536 = vld [vmem:[#allocation6 + $0xd0] sm:$0xf]
        %v537 = vld [vmem:[#allocation6 + $0xd4] sm:$0xf]
        %v538 = vld [vmem:[#allocation6 + $0xd8] sm:$0xf]
        %v539 = vld [vmem:[#allocation6 + $0xdc] sm:$0xf]
        %v540 = vld [vmem:[#allocation6 + $0xe0] sm:$0xf]
        %v541 = vld [vmem:[#allocation6 + $0xe4] sm:$0xf]
        %v542 = vld [vmem:[#allocation6 + $0xe8] sm:$0xf]
        %v543 = vld [vmem:[#allocation6 + $0xec] sm:$0xf]
        %v544 = vld [vmem:[#allocation6 + $0xf0] sm:$0xf]
        %v545 = vld [vmem:[#allocation6 + $0xf4] sm:$0xf]
        %v546 = vld [vmem:[#allocation6 + $0xf8] sm:$0xf]
        %v547 = vld [vmem:[#allocation6 + $0xfc] sm:$0xf]
        %v548 = vld [vmem:[#allocation6 + $0x100] sm:$0xf]
        %v549 = vld [vmem:[#allocation6 + $0x104] sm:$0xf]
        %v550 = vld [vmem:[#allocation6 + $0x108] sm:$0xf]
        %v551 = vld [vmem:[#allocation6 + $0x10c] sm:$0xf]
        %v552 = vld [vmem:[#allocation6 + $0x110] sm:$0xf]
        %v553 = vld [vmem:[#allocation6 + $0x114] sm:$0xf]
        %v554 = vld [vmem:[#allocation6 + $0x118] sm:$0xf]
        %v555 = vld [vmem:[#allocation6 + $0x11c] sm:$0xf]
        %v556 = vld [vmem:[#allocation6 + $0x120] sm:$0xf]
        %v557 = vld [vmem:[#allocation6 + $0x124] sm:$0xf]
        %v558 = vld [vmem:[#allocation6 + $0x128] sm:$0xf]
        %v559 = vld [vmem:[#allocation6 + $0x12c] sm:$0xf]
        %v560 = vld [vmem:[#allocation6 + $0x130] sm:$0xf]
        %v561 = vld [vmem:[#allocation6 + $0x134] sm:$0xf]
        %v562 = vld [vmem:[#allocation6 + $0x138] sm:$0xf]
        %v563 = vld [vmem:[#allocation6 + $0x13c] sm:$0xf]
        %v564 = vld [vmem:[#allocation6 + $0x140] sm:$0xf]
        %v565 = vld [vmem:[#allocation6 + $0x144] sm:$0xf]
        %v566 = vld [vmem:[#allocation6 + $0x148] sm:$0xf]
        %v567 = vld [vmem:[#allocation6 + $0x14c] sm:$0xf]
        %v568 = vld [vmem:[#allocation6 + $0x150] sm:$0xf]
        %v569 = vld [vmem:[#allocation6 + $0x154] sm:$0xf]
        %v570 = vld [vmem:[#allocation6 + $0x158] sm:$0xf]
        %v571 = vld [vmem:[#allocation6 + $0x15c] sm:$0xf]
        %v572 = vld [vmem:[#allocation6 + $0x160] sm:$0xf]
        %v573 = vld [vmem:[#allocation6 + $0x164] sm:$0xf]
        %v574 = vld [vmem:[#allocation6 + $0x168] sm:$0xf]
        %v575 = vld [vmem:[#allocation6 + $0x16c] sm:$0xf]
        %v576 = vld [vmem:[#allocation6 + $0x170] sm:$0xf]
        %v577 = vld [vmem:[#allocation6 + $0x174] sm:$0xf]
        %v578 = vld [vmem:[#allocation6 + $0x178] sm:$0xf]
        %v579 = vld [vmem:[#allocation6 + $0x17c] sm:$0xf]
        %v580 = vld [vmem:[#allocation8 + $0x1] sm:$0x1]
        %v581 = vlaneseq
        %v582 = vshrl.u32 %v581, 7
        %v583 = vsub.s32 0, %v582
        %v584 = vrot.slane %v580, %v583
        %v633 = vunpack.c.l.b16 %v532
        %v634 = vunpack.c.l.b16 %v533
        %v635 = vunpack.c.l.b16 %v534
        %v636 = vunpack.c.l.b16 %v535
        %v637 = vunpack.c.l.b16 %v536
        %v638 = vunpack.c.l.b16 %v537
        %v639 = vunpack.c.l.b16 %v538
        %v640 = vunpack.c.l.b16 %v539
        %v641 = vunpack.c.l.b16 %v540
        %v642 = vunpack.c.l.b16 %v541
        %v643 = vunpack.c.l.b16 %v542
        %v644 = vunpack.c.l.b16 %v543
        %v645 = vunpack.c.l.b16 %v544
        %v646 = vunpack.c.l.b16 %v545
        %v647 = vunpack.c.l.b16 %v546
        %v648 = vunpack.c.l.b16 %v547
        %v649 = vunpack.c.l.b16 %v548
        %v650 = vunpack.c.l.b16 %v549
        %v651 = vunpack.c.l.b16 %v550
        %v652 = vunpack.c.l.b16 %v551
        %v653 = vunpack.c.l.b16 %v552
        %v654 = vunpack.c.l.b16 %v553
        %v655 = vunpack.c.l.b16 %v554
        %v656 = vunpack.c.l.b16 %v555
        %v657 = vunpack.c.l.b16 %v556
        %v658 = vunpack.c.l.b16 %v557
        %v659 = vunpack.c.l.b16 %v558
        %v660 = vunpack.c.l.b16 %v559
        %v661 = vunpack.c.l.b16 %v560
        %v662 = vunpack.c.l.b16 %v561
        %v663 = vunpack.c.l.b16 %v562
        %v664 = vunpack.c.l.b16 %v563
        %v665 = vunpack.c.l.b16 %v564
        %v666 = vunpack.c.l.b16 %v565
        %v667 = vunpack.c.l.b16 %v566
        %v668 = vunpack.c.l.b16 %v567
        %v669 = vunpack.c.l.b16 %v568
        %v670 = vunpack.c.l.b16 %v569
        %v671 = vunpack.c.l.b16 %v570
        %v672 = vunpack.c.l.b16 %v571
        %v673 = vunpack.c.l.b16 %v572
        %v674 = vunpack.c.l.b16 %v573
        %v675 = vunpack.c.l.b16 %v574
        %v676 = vunpack.c.l.b16 %v575
        %v677 = vunpack.c.l.b16 %v576
        %v678 = vunpack.c.l.b16 %v577
        %v679 = vunpack.c.l.b16 %v578
        %v680 = vunpack.c.l.b16 %v579
        %v681 = vpack.c.b16 %v634, %v633
        %v682 = vpack.c.b16 %v636, %v635
        %v683 = vpack.c.b16 %v638, %v637
        %v684 = vpack.c.b16 %v640, %v639
        %v685 = vpack.c.b16 %v642, %v641
        %v686 = vpack.c.b16 %v644, %v643
        %v687 = vpack.c.b16 %v646, %v645
        %v688 = vpack.c.b16 %v648, %v647
        %v689 = vpack.c.b16 %v650, %v649
        %v690 = vpack.c.b16 %v652, %v651
        %v691 = vpack.c.b16 %v654, %v653
        %v692 = vpack.c.b16 %v656, %v655
        %v693 = vpack.c.b16 %v658, %v657
        %v694 = vpack.c.b16 %v660, %v659
        %v695 = vpack.c.b16 %v662, %v661
        %v696 = vpack.c.b16 %v664, %v663
        %v697 = vpack.c.b16 %v666, %v665
        %v698 = vpack.c.b16 %v668, %v667
        %v699 = vpack.c.b16 %v670, %v669
        %v700 = vpack.c.b16 %v672, %v671
        %v701 = vpack.c.b16 %v674, %v673
        %v702 = vpack.c.b16 %v676, %v675
        %v703 = vpack.c.b16 %v678, %v677
        %v704 = vpack.c.b16 %v680, %v679
        %729 = vmatprep.subr.bf16.mxu0 0
        %730 = vmatpush1.bf16.msra.mxu0 %v681
        %731 = vmatprep.subr.bf16.mxu0 0
        %732 = vmatpush1.bf16.msra.mxu0 %v682
        %733 = vmatprep.subr.bf16.mxu0 0
        %734 = vmatpush1.bf16.msra.mxu0 %v683
        %735 = vmatprep.subr.bf16.mxu0 0
        %736 = vmatpush1.bf16.msra.mxu0 %v684
        %737 = vmatprep.subr.bf16.mxu0 0
        %738 = vmatpush1.bf16.msra.mxu0 %v685
        %739 = vmatprep.subr.bf16.mxu0 0
        %740 = vmatpush1.bf16.msra.mxu0 %v686
        %741 = vmatprep.subr.bf16.mxu0 0
        %742 = vmatpush1.bf16.msra.mxu0 %v687
        %743 = vmatprep.subr.bf16.mxu0 0
        %744 = vmatpush1.bf16.msra.mxu0 %v688
        %745 = vmatprep.subr.bf16.mxu0 0
        %746 = vmatpush1.bf16.msra.mxu0 %v689
        %747 = vmatprep.subr.bf16.mxu0 0
        %748 = vmatpush1.bf16.msra.mxu0 %v690
        %749 = vmatprep.subr.bf16.mxu0 0
        %750 = vmatpush1.bf16.msra.mxu0 %v691
        %751 = vmatprep.subr.bf16.mxu0 0
        %752 = vmatpush1.bf16.msra.mxu0 %v692
        %753 = vmatprep.subr.bf16.mxu0 0
        %754 = vmatpush1.bf16.msra.mxu0 %v693
        %755 = vmatprep.subr.bf16.mxu0 0
        %756 = vmatpush1.bf16.msra.mxu0 %v694
        %757 = vmatprep.subr.bf16.mxu0 0
        %758 = vmatpush1.bf16.msra.mxu0 %v695
        %759 = vmatprep.subr.bf16.mxu0 0
        %760 = vmatpush1.bf16.msra.mxu0 %v696
        %761 = vmatprep.mubr.bf16.mxu0 %v530
        %762 = vmatmul.mubr.bf16.gmra.mrb[0].mxu0 %v529
        %v763 = vpop.f32.mrb[0].mxu0
        %v764 = vadd.f32 %v584, %v763
        %v765 = vpop.f32.mrb[0].mxu0
        %v766 = vpop.f32.mrb[0].mxu0
        %v767 = vpop.f32.mrb[0].mxu0
        %768 = vdwg.mxu0
        %769 = vmatprep.subr.bf16.mxu0 0
        %770 = vmatpush1.bf16.msra.mxu0 %v697
        %771 = vmatprep.subr.bf16.mxu0 0
        %772 = vmatpush1.bf16.msra.mxu0 %v698
        %773 = vmatprep.subr.bf16.mxu0 0
        %774 = vmatpush1.bf16.msra.mxu0 %v699
        %775 = vmatprep.subr.bf16.mxu0 0
        %776 = vmatpush1.bf16.msra.mxu0 %v700
        %777 = vmatprep.subr.bf16.mxu0 0
        %778 = vmatpush1.bf16.msra.mxu0 %v701
        %779 = vmatprep.subr.bf16.mxu0 0
        %780 = vmatpush1.bf16.msra.mxu0 %v702
        %781 = vmatprep.subr.bf16.mxu0 0
        %782 = vmatpush1.bf16.msra.mxu0 %v703
        %783 = vmatprep.subr.bf16.mxu0 0
        %784 = vmatpush1.bf16.msra.mxu0 %v704
        %785 = vmatprep.subr.bf16.mxu0 0
        %786 = vmatpush1.bf16.msra.mxu0 0
        %787 = vmatprep.subr.bf16.mxu0 0
        %788 = vmatpush1.bf16.msra.mxu0 0
        %789 = vmatprep.subr.bf16.mxu0 0
        %790 = vmatpush1.bf16.msra.mxu0 0
        %791 = vmatprep.subr.bf16.mxu0 0
        %792 = vmatpush1.bf16.msra.mxu0 0
        %793 = vmatprep.subr.bf16.mxu0 0
        %794 = vmatpush1.bf16.msra.mxu0 0
        %795 = vmatprep.subr.bf16.mxu0 0
        %796 = vmatpush1.bf16.msra.mxu0 0
        %797 = vmatprep.subr.bf16.mxu0 0
        %798 = vmatpush1.bf16.msra.mxu0 0
        %799 = vmatprep.subr.bf16.mxu0 0
        %800 = vmatpush1.bf16.msra.mxu0 0
        %801 = vmatprep.mubr.bf16.mxu0 0
        %802 = vmatmul.mubr.bf16.gmra.mrb[0].mxu0 %v531
        %v803 = vpop.f32.mrb[0].mxu0
        %v804 = vadd.f32 %v764, %v803
        %v805 = vpop.f32.mrb[0].mxu0
        %v806 = vpop.f32.mrb[0].mxu0
        %v807 = vpop.f32.mrb[0].mxu0
        %808 = vdwg.mxu0
        %v809 = vmax.f32 %v804, 0.0
        %810 = vst.msk [vmem:[#allocation5 + $0x1] sm:$0xff] %vm524, %v809
        %811 = vst [vmem:[#allocation5 + $0x9] sm:$0x1] 0.0
        %v812 = vld [vmem:[#allocation4 + $0x1] sm:$0xff]
        %v813 = vld [vmem:[#allocation5] sm:$0xff]
        %v814 = vld [vmem:[#allocation5 + $0x1] sm:$0xff]
        %v815 = vld [vmem:[#allocation5 + $0x2] sm:$0xff]
        %v816 = vpack.c.bf16 %v813, %v813
        %v817 = vpack.c.bf16 %v814, %v814
        %v818 = vpack.c.bf16 %v815, %v815
        %v819 = vld [vmem:[#allocation6 + $0x180] sm:$0xf]
        %v820 = vld [vmem:[#allocation6 + $0x184] sm:$0xf]
        %v821 = vld [vmem:[#allocation6 + $0x188] sm:$0xf]
        %v822 = vld [vmem:[#allocation6 + $0x18c] sm:$0xf]
        %v823 = vld [vmem:[#allocation6 + $0x190] sm:$0xf]
        %v824 = vld [vmem:[#allocation6 + $0x194] sm:$0xf]
        %v825 = vld [vmem:[#allocation6 + $0x198] sm:$0xf]
        %v826 = vld [vmem:[#allocation6 + $0x19c] sm:$0xf]
        %v827 = vld [vmem:[#allocation6 + $0x1a0] sm:$0xf]
        %v828 = vld [vmem:[#allocation6 + $0x1a4] sm:$0xf]
        %v829 = vld [vmem:[#allocation6 + $0x1a8] sm:$0xf]
        %v830 = vld [vmem:[#allocation6 + $0x1ac] sm:$0xf]
        %v831 = vld [vmem:[#allocation6 + $0x1b0] sm:$0xf]
        %v832 = vld [vmem:[#allocation6 + $0x1b4] sm:$0xf]
        %v833 = vld [vmem:[#allocation6 + $0x1b8] sm:$0xf]
        %v834 = vld [vmem:[#allocation6 + $0x1bc] sm:$0xf]
        %v835 = vld [vmem:[#allocation6 + $0x1c0] sm:$0xf]
        %v836 = vld [vmem:[#allocation6 + $0x1c4] sm:$0xf]
        %v837 = vld [vmem:[#allocation6 + $0x1c8] sm:$0xf]
        %v838 = vld [vmem:[#allocation6 + $0x1cc] sm:$0xf]
        %v839 = vld [vmem:[#allocation6 + $0x1d0] sm:$0xf]
        %v840 = vld [vmem:[#allocation6 + $0x1d4] sm:$0xf]
        %v841 = vld [vmem:[#allocation6 + $0x1d8] sm:$0xf]
        %v842 = vld [vmem:[#allocation6 + $0x1dc] sm:$0xf]
        %v843 = vld [vmem:[#allocation6 + $0x1e0] sm:$0xf]
        %v844 = vld [vmem:[#allocation6 + $0x1e4] sm:$0xf]
        %v845 = vld [vmem:[#allocation6 + $0x1e8] sm:$0xf]
        %v846 = vld [vmem:[#allocation6 + $0x1ec] sm:$0xf]
        %v847 = vld [vmem:[#allocation6 + $0x1f0] sm:$0xf]
        %v848 = vld [vmem:[#allocation6 + $0x1f4] sm:$0xf]
        %v849 = vld [vmem:[#allocation6 + $0x1f8] sm:$0xf]
        %v850 = vld [vmem:[#allocation6 + $0x1fc] sm:$0xf]
        %v851 = vld [vmem:[#allocation6 + $0x200] sm:$0xf]
        %v852 = vld [vmem:[#allocation6 + $0x204] sm:$0xf]
        %v853 = vld [vmem:[#allocation6 + $0x208] sm:$0xf]
        %v854 = vld [vmem:[#allocation6 + $0x20c] sm:$0xf]
        %v855 = vld [vmem:[#allocation6 + $0x210] sm:$0xf]
        %v856 = vld [vmem:[#allocation6 + $0x214] sm:$0xf]
        %v857 = vld [vmem:[#allocation6 + $0x218] sm:$0xf]
        %v858 = vld [vmem:[#allocation6 + $0x21c] sm:$0xf]
        %v859 = vld [vmem:[#allocation6 + $0x220] sm:$0xf]
        %v860 = vld [vmem:[#allocation6 + $0x224] sm:$0xf]
        %v861 = vld [vmem:[#allocation6 + $0x228] sm:$0xf]
        %v862 = vld [vmem:[#allocation6 + $0x22c] sm:$0xf]
        %v863 = vld [vmem:[#allocation6 + $0x230] sm:$0xf]
        %v864 = vld [vmem:[#allocation6 + $0x234] sm:$0xf]
        %v865 = vld [vmem:[#allocation6 + $0x238] sm:$0xf]
        %v866 = vld [vmem:[#allocation6 + $0x23c] sm:$0xf]
        %v867 = vld [vmem:[#allocation8 + $0x2] sm:$0x1]
        %v868 = vlaneseq
        %v869 = vshrl.u32 %v868, 7
        %v870 = vsub.s32 0, %v869
        %v871 = vrot.slane %v867, %v870
        %v920 = vunpack.c.l.b16 %v819
        %v921 = vunpack.c.l.b16 %v820
        %v922 = vunpack.c.l.b16 %v821
        %v923 = vunpack.c.l.b16 %v822
        %v924 = vunpack.c.l.b16 %v823
        %v925 = vunpack.c.l.b16 %v824
        %v926 = vunpack.c.l.b16 %v825
        %v927 = vunpack.c.l.b16 %v826
        %v928 = vunpack.c.l.b16 %v827
        %v929 = vunpack.c.l.b16 %v828
        %v930 = vunpack.c.l.b16 %v829
        %v931 = vunpack.c.l.b16 %v830
        %v932 = vunpack.c.l.b16 %v831
        %v933 = vunpack.c.l.b16 %v832
        %v934 = vunpack.c.l.b16 %v833
        %v935 = vunpack.c.l.b16 %v834
        %v936 = vunpack.c.l.b16 %v835
        %v937 = vunpack.c.l.b16 %v836
        %v938 = vunpack.c.l.b16 %v837
        %v939 = vunpack.c.l.b16 %v838
        %v940 = vunpack.c.l.b16 %v839
        %v941 = vunpack.c.l.b16 %v840
        %v942 = vunpack.c.l.b16 %v841
        %v943 = vunpack.c.l.b16 %v842
        %v944 = vunpack.c.l.b16 %v843
        %v945 = vunpack.c.l.b16 %v844
        %v946 = vunpack.c.l.b16 %v845
        %v947 = vunpack.c.l.b16 %v846
        %v948 = vunpack.c.l.b16 %v847
        %v949 = vunpack.c.l.b16 %v848
        %v950 = vunpack.c.l.b16 %v849
        %v951 = vunpack.c.l.b16 %v850
        %v952 = vunpack.c.l.b16 %v851
        %v953 = vunpack.c.l.b16 %v852
        %v954 = vunpack.c.l.b16 %v853
        %v955 = vunpack.c.l.b16 %v854
        %v956 = vunpack.c.l.b16 %v855
        %v957 = vunpack.c.l.b16 %v856
        %v958 = vunpack.c.l.b16 %v857
        %v959 = vunpack.c.l.b16 %v858
        %v960 = vunpack.c.l.b16 %v859
        %v961 = vunpack.c.l.b16 %v860
        %v962 = vunpack.c.l.b16 %v861
        %v963 = vunpack.c.l.b16 %v862
        %v964 = vunpack.c.l.b16 %v863
        %v965 = vunpack.c.l.b16 %v864
        %v966 = vunpack.c.l.b16 %v865
        %v967 = vunpack.c.l.b16 %v866
        %v968 = vpack.c.b16 %v921, %v920
        %v969 = vpack.c.b16 %v923, %v922
        %v970 = vpack.c.b16 %v925, %v924
        %v971 = vpack.c.b16 %v927, %v926
        %v972 = vpack.c.b16 %v929, %v928
        %v973 = vpack.c.b16 %v931, %v930
        %v974 = vpack.c.b16 %v933, %v932
        %v975 = vpack.c.b16 %v935, %v934
        %v976 = vpack.c.b16 %v937, %v936
        %v977 = vpack.c.b16 %v939, %v938
        %v978 = vpack.c.b16 %v941, %v940
        %v979 = vpack.c.b16 %v943, %v942
        %v980 = vpack.c.b16 %v945, %v944
        %v981 = vpack.c.b16 %v947, %v946
        %v982 = vpack.c.b16 %v949, %v948
        %v983 = vpack.c.b16 %v951, %v950
        %v984 = vpack.c.b16 %v953, %v952
        %v985 = vpack.c.b16 %v955, %v954
        %v986 = vpack.c.b16 %v957, %v956
        %v987 = vpack.c.b16 %v959, %v958
        %v988 = vpack.c.b16 %v961, %v960
        %v989 = vpack.c.b16 %v963, %v962
        %v990 = vpack.c.b16 %v965, %v964
        %v991 = vpack.c.b16 %v967, %v966
        %1016 = vmatprep.subr.bf16.mxu0 0
        %1017 = vmatpush1.bf16.msra.mxu0 %v968
        %1018 = vmatprep.subr.bf16.mxu0 0
        %1019 = vmatpush1.bf16.msra.mxu0 %v969
        %1020 = vmatprep.subr.bf16.mxu0 0
        %1021 = vmatpush1.bf16.msra.mxu0 %v970
        %1022 = vmatprep.subr.bf16.mxu0 0
        %1023 = vmatpush1.bf16.msra.mxu0 %v971
        %1024 = vmatprep.subr.bf16.mxu0 0
        %1025 = vmatpush1.bf16.msra.mxu0 %v972
        %1026 = vmatprep.subr.bf16.mxu0 0
        %1027 = vmatpush1.bf16.msra.mxu0 %v973
        %1028 = vmatprep.subr.bf16.mxu0 0
        %1029 = vmatpush1.bf16.msra.mxu0 %v974
        %1030 = vmatprep.subr.bf16.mxu0 0
        %1031 = vmatpush1.bf16.msra.mxu0 %v975
        %1032 = vmatprep.subr.bf16.mxu0 0
        %1033 = vmatpush1.bf16.msra.mxu0 %v976
        %1034 = vmatprep.subr.bf16.mxu0 0
        %1035 = vmatpush1.bf16.msra.mxu0 %v977
        %1036 = vmatprep.subr.bf16.mxu0 0
        %1037 = vmatpush1.bf16.msra.mxu0 %v978
        %1038 = vmatprep.subr.bf16.mxu0 0
        %1039 = vmatpush1.bf16.msra.mxu0 %v979
        %1040 = vmatprep.subr.bf16.mxu0 0
        %1041 = vmatpush1.bf16.msra.mxu0 %v980
        %1042 = vmatprep.subr.bf16.mxu0 0
        %1043 = vmatpush1.bf16.msra.mxu0 %v981
        %1044 = vmatprep.subr.bf16.mxu0 0
        %1045 = vmatpush1.bf16.msra.mxu0 %v982
        %1046 = vmatprep.subr.bf16.mxu0 0
        %1047 = vmatpush1.bf16.msra.mxu0 %v983
        %1048 = vmatprep.mubr.bf16.mxu0 %v817
        %1049 = vmatmul.mubr.bf16.gmra.mrb[0].mxu0 %v816
        %v1050 = vpop.f32.mrb[0].mxu0
        %v1051 = vadd.f32 %v871, %v1050
        %v1052 = vpop.f32.mrb[0].mxu0
        %v1053 = vpop.f32.mrb[0].mxu0
        %v1054 = vpop.f32.mrb[0].mxu0
        %1055 = vdwg.mxu0
        %1056 = vmatprep.subr.bf16.mxu0 0
        %1057 = vmatpush1.bf16.msra.mxu0 %v984
        %1058 = vmatprep.subr.bf16.mxu0 0
        %1059 = vmatpush1.bf16.msra.mxu0 %v985
        %1060 = vmatprep.subr.bf16.mxu0 0
        %1061 = vmatpush1.bf16.msra.mxu0 %v986
        %1062 = vmatprep.subr.bf16.mxu0 0
        %1063 = vmatpush1.bf16.msra.mxu0 %v987
        %1064 = vmatprep.subr.bf16.mxu0 0
        %1065 = vmatpush1.bf16.msra.mxu0 %v988
        %1066 = vmatprep.subr.bf16.mxu0 0
        %1067 = vmatpush1.bf16.msra.mxu0 %v989
        %1068 = vmatprep.subr.bf16.mxu0 0
        %1069 = vmatpush1.bf16.msra.mxu0 %v990
        %1070 = vmatprep.subr.bf16.mxu0 0
        %1071 = vmatpush1.bf16.msra.mxu0 %v991
        %1072 = vmatprep.subr.bf16.mxu0 0
        %1073 = vmatpush1.bf16.msra.mxu0 0
        %1074 = vmatprep.subr.bf16.mxu0 0
        %1075 = vmatpush1.bf16.msra.mxu0 0
        %1076 = vmatprep.subr.bf16.mxu0 0
        %1077 = vmatpush1.bf16.msra.mxu0 0
        %1078 = vmatprep.subr.bf16.mxu0 0
        %1079 = vmatpush1.bf16.msra.mxu0 0
        %1080 = vmatprep.subr.bf16.mxu0 0
        %1081 = vmatpush1.bf16.msra.mxu0 0
        %1082 = vmatprep.subr.bf16.mxu0 0
        %1083 = vmatpush1.bf16.msra.mxu0 0
        %1084 = vmatprep.subr.bf16.mxu0 0
        %1085 = vmatpush1.bf16.msra.mxu0 0
        %1086 = vmatprep.subr.bf16.mxu0 0
        %1087 = vmatpush1.bf16.msra.mxu0 0
        %1088 = vmatprep.mubr.bf16.mxu0 0
        %1089 = vmatmul.mubr.bf16.gmra.mrb[0].mxu0 %v818
        %v1090 = vpop.f32.mrb[0].mxu0
        %v1091 = vadd.f32 %v1051, %v1090
        %v1092 = vpop.f32.mrb[0].mxu0
        %v1093 = vpop.f32.mrb[0].mxu0
        %v1094 = vpop.f32.mrb[0].mxu0
        %1095 = vdwg.mxu0
        %v1096 = vadd.f32 %v1091, %v812
        %v1097 = vmax.f32 %v1096, 0.0
        %1098 = vst.msk [vmem:[#allocation4 + $0x1] sm:$0xff] %vm524, %v1097
        %1099 = vst [vmem:[#allocation4 + $0x9] sm:$0x1] 0.0
        %v1100 = vld [vmem:[#allocation4] sm:$0xff]
        %v1101 = vld [vmem:[#allocation4 + $0x1] sm:$0xff]
        %v1102 = vld [vmem:[#allocation4 + $0x2] sm:$0xff]
        %v1103 = vpack.c.bf16 %v1100, %v1100
        %v1104 = vpack.c.bf16 %v1101, %v1101
        %v1105 = vpack.c.bf16 %v1102, %v1102
        %v1106 = vld [vmem:[#allocation6 + $0x240] sm:$0xf]
        %v1107 = vld [vmem:[#allocation6 + $0x244] sm:$0xf]
        %v1108 = vld [vmem:[#allocation6 + $0x248] sm:$0xf]
        %v1109 = vld [vmem:[#allocation6 + $0x24c] sm:$0xf]
        %v1110 = vld [vmem:[#allocation6 + $0x250] sm:$0xf]
        %v1111 = vld [vmem:[#allocation6 + $0x254] sm:$0xf]
        %v1112 = vld [vmem:[#allocation6 + $0x258] sm:$0xf]
        %v1113 = vld [vmem:[#allocation6 + $0x25c] sm:$0xf]
        %v1114 = vld [vmem:[#allocation6 + $0x260] sm:$0xf]
        %v1115 = vld [vmem:[#allocation6 + $0x264] sm:$0xf]
        %v1116 = vld [vmem:[#allocation6 + $0x268] sm:$0xf]
        %v1117 = vld [vmem:[#allocation6 + $0x26c] sm:$0xf]
        %v1118 = vld [vmem:[#allocation6 + $0x270] sm:$0xf]
        %v1119 = vld [vmem:[#allocation6 + $0x274] sm:$0xf]
        %v1120 = vld [vmem:[#allocation6 + $0x278] sm:$0xf]
        %v1121 = vld [vmem:[#allocation6 + $0x27c] sm:$0xf]
        %v1122 = vld [vmem:[#allocation6 + $0x280] sm:$0xf]
        %v1123 = vld [vmem:[#allocation6 + $0x284] sm:$0xf]
        %v1124 = vld [vmem:[#allocation6 + $0x288] sm:$0xf]
        %v1125 = vld [vmem:[#allocation6 + $0x28c] sm:$0xf]
        %v1126 = vld [vmem:[#allocation6 + $0x290] sm:$0xf]
        %v1127 = vld [vmem:[#allocation6 + $0x294] sm:$0xf]
        %v1128 = vld [vmem:[#allocation6 + $0x298] sm:$0xf]
        %v1129 = vld [vmem:[#allocation6 + $0x29c] sm:$0xf]
        %v1130 = vld [vmem:[#allocation6 + $0x2a0] sm:$0xf]
        %v1131 = vld [vmem:[#allocation6 + $0x2a4] sm:$0xf]
        %v1132 = vld [vmem:[#allocation6 + $0x2a8] sm:$0xf]
        %v1133 = vld [vmem:[#allocation6 + $0x2ac] sm:$0xf]
        %v1134 = vld [vmem:[#allocation6 + $0x2b0] sm:$0xf]
        %v1135 = vld [vmem:[#allocation6 + $0x2b4] sm:$0xf]
        %v1136 = vld [vmem:[#allocation6 + $0x2b8] sm:$0xf]
        %v1137 = vld [vmem:[#allocation6 + $0x2bc] sm:$0xf]
        %v1138 = vld [vmem:[#allocation6 + $0x2c0] sm:$0xf]
        %v1139 = vld [vmem:[#allocation6 + $0x2c4] sm:$0xf]
        %v1140 = vld [vmem:[#allocation6 + $0x2c8] sm:$0xf]
        %v1141 = vld [vmem:[#allocation6 + $0x2cc] sm:$0xf]
        %v1142 = vld [vmem:[#allocation6 + $0x2d0] sm:$0xf]
        %v1143 = vld [vmem:[#allocation6 + $0x2d4] sm:$0xf]
        %v1144 = vld [vmem:[#allocation6 + $0x2d8] sm:$0xf]
        %v1145 = vld [vmem:[#allocation6 + $0x2dc] sm:$0xf]
        %v1146 = vld [vmem:[#allocation6 + $0x2e0] sm:$0xf]
        %v1147 = vld [vmem:[#allocation6 + $0x2e4] sm:$0xf]
        %v1148 = vld [vmem:[#allocation6 + $0x2e8] sm:$0xf]
        %v1149 = vld [vmem:[#allocation6 + $0x2ec] sm:$0xf]
        %v1150 = vld [vmem:[#allocation6 + $0x2f0] sm:$0xf]
        %v1151 = vld [vmem:[#allocation6 + $0x2f4] sm:$0xf]
        %v1152 = vld [vmem:[#allocation6 + $0x2f8] sm:$0xf]
        %v1153 = vld [vmem:[#allocation6 + $0x2fc] sm:$0xf]
        %v1154 = vld [vmem:[#allocation8 + $0x3] sm:$0x1]
        %v1155 = vlaneseq
        %v1156 = vshrl.u32 %v1155, 7
        %v1157 = vsub.s32 0, %v1156
        %v1158 = vrot.slane %v1154, %v1157
        %v1207 = vunpack.c.l.b16 %v1106
        %v1208 = vunpack.c.l.b16 %v1107
        %v1209 = vunpack.c.l.b16 %v1108
        %v1210 = vunpack.c.l.b16 %v1109
        %v1211 = vunpack.c.l.b16 %v1110
        %v1212 = vunpack.c.l.b16 %v1111
        %v1213 = vunpack.c.l.b16 %v1112
        %v1214 = vunpack.c.l.b16 %v1113
        %v1215 = vunpack.c.l.b16 %v1114
        %v1216 = vunpack.c.l.b16 %v1115
        %v1217 = vunpack.c.l.b16 %v1116
        %v1218 = vunpack.c.l.b16 %v1117
        %v1219 = vunpack.c.l.b16 %v1118
        %v1220 = vunpack.c.l.b16 %v1119
        %v1221 = vunpack.c.l.b16 %v1120
        %v1222 = vunpack.c.l.b16 %v1121
        %v1223 = vunpack.c.l.b16 %v1122
        %v1224 = vunpack.c.l.b16 %v1123
        %v1225 = vunpack.c.l.b16 %v1124
        %v1226 = vunpack.c.l.b16 %v1125
        %v1227 = vunpack.c.l.b16 %v1126
        %v1228 = vunpack.c.l.b16 %v1127
        %v1229 = vunpack.c.l.b16 %v1128
        %v1230 = vunpack.c.l.b16 %v1129
        %v1231 = vunpack.c.l.b16 %v1130
        %v1232 = vunpack.c.l.b16 %v1131
        %v1233 = vunpack.c.l.b16 %v1132
        %v1234 = vunpack.c.l.b16 %v1133
        %v1235 = vunpack.c.l.b16 %v1134
        %v1236 = vunpack.c.l.b16 %v1135
        %v1237 = vunpack.c.l.b16 %v1136
        %v1238 = vunpack.c.l.b16 %v1137
        %v1239 = vunpack.c.l.b16 %v1138
        %v1240 = vunpack.c.l.b16 %v1139
        %v1241 = vunpack.c.l.b16 %v1140
        %v1242 = vunpack.c.l.b16 %v1141
        %v1243 = vunpack.c.l.b16 %v1142
        %v1244 = vunpack.c.l.b16 %v1143
        %v1245 = vunpack.c.l.b16 %v1144
        %v1246 = vunpack.c.l.b16 %v1145
        %v1247 = vunpack.c.l.b16 %v1146
        %v1248 = vunpack.c.l.b16 %v1147
        %v1249 = vunpack.c.l.b16 %v1148
        %v1250 = vunpack.c.l.b16 %v1149
        %v1251 = vunpack.c.l.b16 %v1150
        %v1252 = vunpack.c.l.b16 %v1151
        %v1253 = vunpack.c.l.b16 %v1152
        %v1254 = vunpack.c.l.b16 %v1153
        %v1255 = vpack.c.b16 %v1208, %v1207
        %v1256 = vpack.c.b16 %v1210, %v1209
        %v1257 = vpack.c.b16 %v1212, %v1211
        %v1258 = vpack.c.b16 %v1214, %v1213
        %v1259 = vpack.c.b16 %v1216, %v1215
        %v1260 = vpack.c.b16 %v1218, %v1217
        %v1261 = vpack.c.b16 %v1220, %v1219
        %v1262 = vpack.c.b16 %v1222, %v1221
        %v1263 = vpack.c.b16 %v1224, %v1223
        %v1264 = vpack.c.b16 %v1226, %v1225
        %v1265 = vpack.c.b16 %v1228, %v1227
        %v1266 = vpack.c.b16 %v1230, %v1229
        %v1267 = vpack.c.b16 %v1232, %v1231
        %v1268 = vpack.c.b16 %v1234, %v1233
        %v1269 = vpack.c.b16 %v1236, %v1235
        %v1270 = vpack.c.b16 %v1238, %v1237
        %v1271 = vpack.c.b16 %v1240, %v1239
        %v1272 = vpack.c.b16 %v1242, %v1241
        %v1273 = vpack.c.b16 %v1244, %v1243
        %v1274 = vpack.c.b16 %v1246, %v1245
        %v1275 = vpack.c.b16 %v1248, %v1247
        %v1276 = vpack.c.b16 %v1250, %v1249
        %v1277 = vpack.c.b16 %v1252, %v1251
        %v1278 = vpack.c.b16 %v1254, %v1253
        %1303 = vmatprep.subr.bf16.mxu0 0
        %1304 = vmatpush1.bf16.msra.mxu0 %v1255
        %1305 = vmatprep.subr.bf16.mxu0 0
        %1306 = vmatpush1.bf16.msra.mxu0 %v1256
        %1307 = vmatprep.subr.bf16.mxu0 0
        %1308 = vmatpush1.bf16.msra.mxu0 %v1257
        %1309 = vmatprep.subr.bf16.mxu0 0
        %1310 = vmatpush1.bf16.msra.mxu0 %v1258
        %1311 = vmatprep.subr.bf16.mxu0 0
        %1312 = vmatpush1.bf16.msra.mxu0 %v1259
        %1313 = vmatprep.subr.bf16.mxu0 0
        %1314 = vmatpush1.bf16.msra.mxu0 %v1260
        %1315 = vmatprep.subr.bf16.mxu0 0
        %1316 = vmatpush1.bf16.msra.mxu0 %v1261
        %1317 = vmatprep.subr.bf16.mxu0 0
        %1318 = vmatpush1.bf16.msra.mxu0 %v1262
        %1319 = vmatprep.subr.bf16.mxu0 0
        %1320 = vmatpush1.bf16.msra.mxu0 %v1263
        %1321 = vmatprep.subr.bf16.mxu0 0
        %1322 = vmatpush1.bf16.msra.mxu0 %v1264
        %1323 = vmatprep.subr.bf16.mxu0 0
        %1324 = vmatpush1.bf16.msra.mxu0 %v1265
        %1325 = vmatprep.subr.bf16.mxu0 0
        %1326 = vmatpush1.bf16.msra.mxu0 %v1266
        %1327 = vmatprep.subr.bf16.mxu0 0
        %1328 = vmatpush1.bf16.msra.mxu0 %v1267
        %1329 = vmatprep.subr.bf16.mxu0 0
        %1330 = vmatpush1.bf16.msra.mxu0 %v1268
        %1331 = vmatprep.subr.bf16.mxu0 0
        %1332 = vmatpush1.bf16.msra.mxu0 %v1269
        %1333 = vmatprep.subr.bf16.mxu0 0
        %1334 = vmatpush1.bf16.msra.mxu0 %v1270
        %1335 = vmatprep.mubr.bf16.mxu0 %v1104
        %1336 = vmatmul.mubr.bf16.gmra.mrb[0].mxu0 %v1103
        %v1337 = vpop.f32.mrb[0].mxu0
        %v1338 = vadd.f32 %v1158, %v1337
        %v1339 = vpop.f32.mrb[0].mxu0
        %v1340 = vpop.f32.mrb[0].mxu0
        %v1341 = vpop.f32.mrb[0].mxu0
        %1342 = vdwg.mxu0
        %1343 = vmatprep.subr.bf16.mxu0 0
        %1344 = vmatpush1.bf16.msra.mxu0 %v1271
        %1345 = vmatprep.subr.bf16.mxu0 0
        %1346 = vmatpush1.bf16.msra.mxu0 %v1272
        %1347 = vmatprep.subr.bf16.mxu0 0
        %1348 = vmatpush1.bf16.msra.mxu0 %v1273
        %1349 = vmatprep.subr.bf16.mxu0 0
        %1350 = vmatpush1.bf16.msra.mxu0 %v1274
        %1351 = vmatprep.subr.bf16.mxu0 0
        %1352 = vmatpush1.bf16.msra.mxu0 %v1275
        %1353 = vmatprep.subr.bf16.mxu0 0
        %1354 = vmatpush1.bf16.msra.mxu0 %v1276
        %1355 = vmatprep.subr.bf16.mxu0 0
        %1356 = vmatpush1.bf16.msra.mxu0 %v1277
        %1357 = vmatprep.subr.bf16.mxu0 0
        %1358 = vmatpush1.bf16.msra.mxu0 %v1278
        %1359 = vmatprep.subr.bf16.mxu0 0
        %1360 = vmatpush1.bf16.msra.mxu0 0
        %1361 = vmatprep.subr.bf16.mxu0 0
        %1362 = vmatpush1.bf16.msra.mxu0 0
        %1363 = vmatprep.subr.bf16.mxu0 0
        %1364 = vmatpush1.bf16.msra.mxu0 0
        %1365 = vmatprep.subr.bf16.mxu0 0
        %1366 = vmatpush1.bf16.msra.mxu0 0
        %1367 = vmatprep.subr.bf16.mxu0 0
        %1368 = vmatpush1.bf16.msra.mxu0 0
        %1369 = vmatprep.subr.bf16.mxu0 0
        %1370 = vmatpush1.bf16.msra.mxu0 0
        %1371 = vmatprep.subr.bf16.mxu0 0
        %1372 = vmatpush1.bf16.msra.mxu0 0
        %1373 = vmatprep.subr.bf16.mxu0 0
        %1374 = vmatpush1.bf16.msra.mxu0 0
        %1375 = vmatprep.mubr.bf16.mxu0 0
        %1376 = vmatmul.mubr.bf16.gmra.mrb[0].mxu0 %v1105
        %v1377 = vpop.f32.mrb[0].mxu0
        %v1378 = vadd.f32 %v1338, %v1377
        %v1379 = vpop.f32.mrb[0].mxu0
        %v1380 = vpop.f32.mrb[0].mxu0
        %v1381 = vpop.f32.mrb[0].mxu0
        %1382 = vdwg.mxu0
        %v1383 = vmax.f32 %v1378, 0.0
        %1384 = vst.msk [vmem:[#allocation5 + $0x1] sm:$0xff] %vm524, %v1383
        %1385 = vst [vmem:[#allocation5 + $0x9] sm:$0x1] 0.0
        %v1386 = vld [vmem:[#allocation4 + $0x1] sm:$0xff]
        %v1387 = vld [vmem:[#allocation5] sm:$0xff]
        %v1388 = vld [vmem:[#allocation5 + $0x1] sm:$0xff]
        %v1389 = vld [vmem:[#allocation5 + $0x2] sm:$0xff]
        %v1390 = vpack.c.bf16 %v1387, %v1387
        %v1391 = vpack.c.bf16 %v1388, %v1388
        %v1392 = vpack.c.bf16 %v1389, %v1389
        %v1393 = vld [vmem:[#allocation6 + $0x300] sm:$0xf]
        %v1394 = vld [vmem:[#allocation6 + $0x304] sm:$0xf]
        %v1395 = vld [vmem:[#allocation6 + $0x308] sm:$0xf]
        %v1396 = vld [vmem:[#allocation6 + $0x30c] sm:$0xf]
        %v1397 = vld [vmem:[#allocation6 + $0x310] sm:$0xf]
        %v1398 = vld [vmem:[#allocation6 + $0x314] sm:$0xf]
        %v1399 = vld [vmem:[#allocation6 + $0x318] sm:$0xf]
        %v1400 = vld [vmem:[#allocation6 + $0x31c] sm:$0xf]
        %v1401 = vld [vmem:[#allocation6 + $0x320] sm:$0xf]
        %v1402 = vld [vmem:[#allocation6 + $0x324] sm:$0xf]
        %v1403 = vld [vmem:[#allocation6 + $0x328] sm:$0xf]
        %v1404 = vld [vmem:[#allocation6 + $0x32c] sm:$0xf]
        %v1405 = vld [vmem:[#allocation6 + $0x330] sm:$0xf]
        %v1406 = vld [vmem:[#allocation6 + $0x334] sm:$0xf]
        %v1407 = vld [vmem:[#allocation6 + $0x338] sm:$0xf]
        %v1408 = vld [vmem:[#allocation6 + $0x33c] sm:$0xf]
        %v1409 = vld [vmem:[#allocation6 + $0x340] sm:$0xf]
        %v1410 = vld [vmem:[#allocation6 + $0x344] sm:$0xf]
        %v1411 = vld [vmem:[#allocation6 + $0x348] sm:$0xf]
        %v1412 = vld [vmem:[#allocation6 + $0x34c] sm:$0xf]
        %v1413 = vld [vmem:[#allocation6 + $0x350] sm:$0xf]
        %v1414 = vld [vmem:[#allocation6 + $0x354] sm:$0xf]
        %v1415 = vld [vmem:[#allocation6 + $0x358] sm:$0xf]
        %v1416 = vld [vmem:[#allocation6 + $0x35c] sm:$0xf]
        %v1417 = vld [vmem:[#allocation6 + $0x360] sm:$0xf]
        %v1418 = vld [vmem:[#allocation6 + $0x364] sm:$0xf]
        %v1419 = vld [vmem:[#allocation6 + $0x368] sm:$0xf]
        %v1420 = vld [vmem:[#allocation6 + $0x36c] sm:$0xf]
        %v1421 = vld [vmem:[#allocation6 + $0x370] sm:$0xf]
        %v1422 = vld [vmem:[#allocation6 + $0x374] sm:$0xf]
        %v1423 = vld [vmem:[#allocation6 + $0x378] sm:$0xf]
        %v1424 = vld [vmem:[#allocation6 + $0x37c] sm:$0xf]
        %v1425 = vld [vmem:[#allocation6 + $0x380] sm:$0xf]
        %v1426 = vld [vmem:[#allocation6 + $0x384] sm:$0xf]
        %v1427 = vld [vmem:[#allocation6 + $0x388] sm:$0xf]
        %v1428 = vld [vmem:[#allocation6 + $0x38c] sm:$0xf]
        %v1429 = vld [vmem:[#allocation6 + $0x390] sm:$0xf]
        %v1430 = vld [vmem:[#allocation6 + $0x394] sm:$0xf]
        %v1431 = vld [vmem:[#allocation6 + $0x398] sm:$0xf]
        %v1432 = vld [vmem:[#allocation6 + $0x39c] sm:$0xf]
        %v1433 = vld [vmem:[#allocation6 + $0x3a0] sm:$0xf]
        %v1434 = vld [vmem:[#allocation6 + $0x3a4] sm:$0xf]
        %v1435 = vld [vmem:[#allocation6 + $0x3a8] sm:$0xf]
        %v1436 = vld [vmem:[#allocation6 + $0x3ac] sm:$0xf]
        %v1437 = vld [vmem:[#allocation6 + $0x3b0] sm:$0xf]
        %v1438 = vld [vmem:[#allocation6 + $0x3b4] sm:$0xf]
        %v1439 = vld [vmem:[#allocation6 + $0x3b8] sm:$0xf]
        %v1440 = vld [vmem:[#allocation6 + $0x3bc] sm:$0xf]
        %v1441 = vld [vmem:[#allocation8 + $0x4] sm:$0x1]
        %v1442 = vlaneseq
        %v1443 = vshrl.u32 %v1442, 7
        %v1444 = vsub.s32 0, %v1443
        %v1445 = vrot.slane %v1441, %v1444
        %v1494 = vunpack.c.l.b16 %v1393
        %v1495 = vunpack.c.l.b16 %v1394
        %v1496 = vunpack.c.l.b16 %v1395
        %v1497 = vunpack.c.l.b16 %v1396
        %v1498 = vunpack.c.l.b16 %v1397
        %v1499 = vunpack.c.l.b16 %v1398
        %v1500 = vunpack.c.l.b16 %v1399
        %v1501 = vunpack.c.l.b16 %v1400
        %v1502 = vunpack.c.l.b16 %v1401
        %v1503 = vunpack.c.l.b16 %v1402
        %v1504 = vunpack.c.l.b16 %v1403
        %v1505 = vunpack.c.l.b16 %v1404
        %v1506 = vunpack.c.l.b16 %v1405
        %v1507 = vunpack.c.l.b16 %v1406
        %v1508 = vunpack.c.l.b16 %v1407
        %v1509 = vunpack.c.l.b16 %v1408
        %v1510 = vunpack.c.l.b16 %v1409
        %v1511 = vunpack.c.l.b16 %v1410
        %v1512 = vunpack.c.l.b16 %v1411
        %v1513 = vunpack.c.l.b16 %v1412
        %v1514 = vunpack.c.l.b16 %v1413
        %v1515 = vunpack.c.l.b16 %v1414
        %v1516 = vunpack.c.l.b16 %v1415
        %v1517 = vunpack.c.l.b16 %v1416
        %v1518 = vunpack.c.l.b16 %v1417
        %v1519 = vunpack.c.l.b16 %v1418
        %v1520 = vunpack.c.l.b16 %v1419
        %v1521 = vunpack.c.l.b16 %v1420
        %v1522 = vunpack.c.l.b16 %v1421
        %v1523 = vunpack.c.l.b16 %v1422
        %v1524 = vunpack.c.l.b16 %v1423
        %v1525 = vunpack.c.l.b16 %v1424
        %v1526 = vunpack.c.l.b16 %v1425
        %v1527 = vunpack.c.l.b16 %v1426
        %v1528 = vunpack.c.l.b16 %v1427
        %v1529 = vunpack.c.l.b16 %v1428
        %v1530 = vunpack.c.l.b16 %v1429
        %v1531 = vunpack.c.l.b16 %v1430
        %v1532 = vunpack.c.l.b16 %v1431
        %v1533 = vunpack.c.l.b16 %v1432
        %v1534 = vunpack.c.l.b16 %v1433
        %v1535 = vunpack.c.l.b16 %v1434
        %v1536 = vunpack.c.l.b16 %v1435
        %v1537 = vunpack.c.l.b16 %v1436
        %v1538 = vunpack.c.l.b16 %v1437
        %v1539 = vunpack.c.l.b16 %v1438
        %v1540 = vunpack.c.l.b16 %v1439
        %v1541 = vunpack.c.l.b16 %v1440
        %v1542 = vpack.c.b16 %v1495, %v1494
        %v1543 = vpack.c.b16 %v1497, %v1496
        %v1544 = vpack.c.b16 %v1499, %v1498
        %v1545 = vpack.c.b16 %v1501, %v1500
        %v1546 = vpack.c.b16 %v1503, %v1502
        %v1547 = vpack.c.b16 %v1505, %v1504
        %v1548 = vpack.c.b16 %v1507, %v1506
        %v1549 = vpack.c.b16 %v1509, %v1508
        %v1550 = vpack.c.b16 %v1511, %v1510
        %v1551 = vpack.c.b16 %v1513, %v1512
        %v1552 = vpack.c.b16 %v1515, %v1514
        %v1553 = vpack.c.b16 %v1517, %v1516
        %v1554 = vpack.c.b16 %v1519, %v1518
        %v1555 = vpack.c.b16 %v1521, %v1520
        %v1556 = vpack.c.b16 %v1523, %v1522
        %v1557 = vpack.c.b16 %v1525, %v1524
        %v1558 = vpack.c.b16 %v1527, %v1526
        %v1559 = vpack.c.b16 %v1529, %v1528
        %v1560 = vpack.c.b16 %v1531, %v1530
        %v1561 = vpack.c.b16 %v1533, %v1532
        %v1562 = vpack.c.b16 %v1535, %v1534
        %v1563 = vpack.c.b16 %v1537, %v1536
        %v1564 = vpack.c.b16 %v1539, %v1538
        %v1565 = vpack.c.b16 %v1541, %v1540
        %1590 = vmatprep.subr.bf16.mxu0 0
        %1591 = vmatpush1.bf16.msra.mxu0 %v1542
        %1592 = vmatprep.subr.bf16.mxu0 0
        %1593 = vmatpush1.bf16.msra.mxu0 %v1543
        %1594 = vmatprep.subr.bf16.mxu0 0
        %1595 = vmatpush1.bf16.msra.mxu0 %v1544
        %1596 = vmatprep.subr.bf16.mxu0 0
        %1597 = vmatpush1.bf16.msra.mxu0 %v1545
        %1598 = vmatprep.subr.bf16.mxu0 0
        %1599 = vmatpush1.bf16.msra.mxu0 %v1546
        %1600 = vmatprep.subr.bf16.mxu0 0
        %1601 = vmatpush1.bf16.msra.mxu0 %v1547
        %1602 = vmatprep.subr.bf16.mxu0 0
        %1603 = vmatpush1.bf16.msra.mxu0 %v1548
        %1604 = vmatprep.subr.bf16.mxu0 0
        %1605 = vmatpush1.bf16.msra.mxu0 %v1549
        %1606 = vmatprep.subr.bf16.mxu0 0
        %1607 = vmatpush1.bf16.msra.mxu0 %v1550
        %1608 = vmatprep.subr.bf16.mxu0 0
        %1609 = vmatpush1.bf16.msra.mxu0 %v1551
        %1610 = vmatprep.subr.bf16.mxu0 0
        %1611 = vmatpush1.bf16.msra.mxu0 %v1552
        %1612 = vmatprep.subr.bf16.mxu0 0
        %1613 = vmatpush1.bf16.msra.mxu0 %v1553
        %1614 = vmatprep.subr.bf16.mxu0 0
        %1615 = vmatpush1.bf16.msra.mxu0 %v1554
        %1616 = vmatprep.subr.bf16.mxu0 0
        %1617 = vmatpush1.bf16.msra.mxu0 %v1555
        %1618 = vmatprep.subr.bf16.mxu0 0
        %1619 = vmatpush1.bf16.msra.mxu0 %v1556
        %1620 = vmatprep.subr.bf16.mxu0 0
        %1621 = vmatpush1.bf16.msra.mxu0 %v1557
        %1622 = vmatprep.mubr.bf16.mxu0 %v1391
        %1623 = vmatmul.mubr.bf16.gmra.mrb[0].mxu0 %v1390
        %v1624 = vpop.f32.mrb[0].mxu0
        %v1625 = vadd.f32 %v1445, %v1624
        %v1626 = vpop.f32.mrb[0].mxu0
        %v1627 = vpop.f32.mrb[0].mxu0
        %v1628 = vpop.f32.mrb[0].mxu0
        %1629 = vdwg.mxu0
        %1630 = vmatprep.subr.bf16.mxu0 0
        %1631 = vmatpush1.bf16.msra.mxu0 %v1558
        %1632 = vmatprep.subr.bf16.mxu0 0
        %1633 = vmatpush1.bf16.msra.mxu0 %v1559
        %1634 = vmatprep.subr.bf16.mxu0 0
        %1635 = vmatpush1.bf16.msra.mxu0 %v1560
        %1636 = vmatprep.subr.bf16.mxu0 0
        %1637 = vmatpush1.bf16.msra.mxu0 %v1561
        %1638 = vmatprep.subr.bf16.mxu0 0
        %1639 = vmatpush1.bf16.msra.mxu0 %v1562
        %1640 = vmatprep.subr.bf16.mxu0 0
        %1641 = vmatpush1.bf16.msra.mxu0 %v1563
        %1642 = vmatprep.subr.bf16.mxu0 0
        %1643 = vmatpush1.bf16.msra.mxu0 %v1564
        %1644 = vmatprep.subr.bf16.mxu0 0
        %1645 = vmatpush1.bf16.msra.mxu0 %v1565
        %1646 = vmatprep.subr.bf16.mxu0 0
        %1647 = vmatpush1.bf16.msra.mxu0 0
        %1648 = vmatprep.subr.bf16.mxu0 0
        %1649 = vmatpush1.bf16.msra.mxu0 0
        %1650 = vmatprep.subr.bf16.mxu0 0
        %1651 = vmatpush1.bf16.msra.mxu0 0
        %1652 = vmatprep.subr.bf16.mxu0 0
        %1653 = vmatpush1.bf16.msra.mxu0 0
        %1654 = vmatprep.subr.bf16.mxu0 0
        %1655 = vmatpush1.bf16.msra.mxu0 0
        %1656 = vmatprep.subr.bf16.mxu0 0
        %1657 = vmatpush1.bf16.msra.mxu0 0
        %1658 = vmatprep.subr.bf16.mxu0 0
        %1659 = vmatpush1.bf16.msra.mxu0 0
        %1660 = vmatprep.subr.bf16.mxu0 0
        %1661 = vmatpush1.bf16.msra.mxu0 0
        %1662 = vmatprep.mubr.bf16.mxu0 0
        %1663 = vmatmul.mubr.bf16.gmra.mrb[0].mxu0 %v1392
        %v1664 = vpop.f32.mrb[0].mxu0
        %v1665 = vadd.f32 %v1625, %v1664
        %v1666 = vpop.f32.mrb[0].mxu0
        %v1667 = vpop.f32.mrb[0].mxu0
        %v1668 = vpop.f32.mrb[0].mxu0
        %1669 = vdwg.mxu0
        %v1670 = vadd.f32 %v1665, %v1386
        %v1671 = vmax.f32 %v1670, 0.0
        %1672 = vst.msk [vmem:[#allocation4 + $0x1] sm:$0xff] %vm524, %v1671
        %1673 = vst [vmem:[#allocation4 + $0x9] sm:$0x1] 0.0
        %v1674 = vld [vmem:[#allocation4] ss:$2 sm:$0xf]
        %s1675 = scalar_lea.vmem [#allocation4], 1
        %v1676 = vld [vmem:[%s1675] ss:$2 sm:$0xf]
        %s1677 = scalar_lea.vmem [#allocation4], 2
        %v1678 = vld [vmem:[%s1677] ss:$2 sm:$0xf]
        %v1679 = vpack.c.bf16 %v1674, %v1674
        %v1680 = vpack.c.bf16 %v1676, %v1676
        %v1681 = vpack.c.bf16 %v1678, %v1678
        %v1682 = vld [vmem:[#allocation6 + $0x3c0] sm:$0xf]
        %v1683 = vld [vmem:[#allocation6 + $0x3c4] sm:$0xf]
        %v1684 = vld [vmem:[#allocation6 + $0x3c8] sm:$0xf]
        %v1685 = vld [vmem:[#allocation6 + $0x3cc] sm:$0xf]
        %v1686 = vld [vmem:[#allocation6 + $0x3d0] sm:$0xf]
        %v1687 = vld [vmem:[#allocation6 + $0x3d4] sm:$0xf]
        %v1688 = vld [vmem:[#allocation6 + $0x3d8] sm:$0xf]
        %v1689 = vld [vmem:[#allocation6 + $0x3dc] sm:$0xf]
        %v1690 = vld [vmem:[#allocation6 + $0x3e0] sm:$0xf]
        %v1691 = vld [vmem:[#allocation6 + $0x3e4] sm:$0xf]
        %v1692 = vld [vmem:[#allocation6 + $0x3e8] sm:$0xf]
        %v1693 = vld [vmem:[#allocation6 + $0x3ec] sm:$0xf]
        %v1694 = vld [vmem:[#allocation6 + $0x3f0] sm:$0xf]
        %v1695 = vld [vmem:[#allocation6 + $0x3f4] sm:$0xf]
        %v1696 = vld [vmem:[#allocation6 + $0x3f8] sm:$0xf]
        %v1697 = vld [vmem:[#allocation6 + $0x3fc] sm:$0xf]
        %v1698 = vld [vmem:[#allocation6 + $0x400] sm:$0xf]
        %v1699 = vld [vmem:[#allocation6 + $0x404] sm:$0xf]
        %v1700 = vld [vmem:[#allocation6 + $0x408] sm:$0xf]
        %v1701 = vld [vmem:[#allocation6 + $0x40c] sm:$0xf]
        %v1702 = vld [vmem:[#allocation6 + $0x410] sm:$0xf]
        %v1703 = vld [vmem:[#allocation6 + $0x414] sm:$0xf]
        %v1704 = vld [vmem:[#allocation6 + $0x418] sm:$0xf]
        %v1705 = vld [vmem:[#allocation6 + $0x41c] sm:$0xf]
        %v1706 = vld [vmem:[#allocation6 + $0x420] sm:$0xf]
        %v1707 = vld [vmem:[#allocation6 + $0x424] sm:$0xf]
        %v1708 = vld [vmem:[#allocation6 + $0x428] sm:$0xf]
        %v1709 = vld [vmem:[#allocation6 + $0x42c] sm:$0xf]
        %v1710 = vld [vmem:[#allocation6 + $0x430] sm:$0xf]
        %v1711 = vld [vmem:[#allocation6 + $0x434] sm:$0xf]
        %v1712 = vld [vmem:[#allocation6 + $0x438] sm:$0xf]
        %v1713 = vld [vmem:[#allocation6 + $0x43c] sm:$0xf]
        %v1714 = vld [vmem:[#allocation6 + $0x440] sm:$0xf]
        %v1715 = vld [vmem:[#allocation6 + $0x444] sm:$0xf]
        %v1716 = vld [vmem:[#allocation6 + $0x448] sm:$0xf]
        %v1717 = vld [vmem:[#allocation6 + $0x44c] sm:$0xf]
        %v1718 = vld [vmem:[#allocation6 + $0x450] sm:$0xf]
        %v1719 = vld [vmem:[#allocation6 + $0x454] sm:$0xf]
        %v1720 = vld [vmem:[#allocation6 + $0x458] sm:$0xf]
        %v1721 = vld [vmem:[#allocation6 + $0x45c] sm:$0xf]
        %v1722 = vld [vmem:[#allocation6 + $0x460] sm:$0xf]
        %v1723 = vld [vmem:[#allocation6 + $0x464] sm:$0xf]
        %v1724 = vld [vmem:[#allocation6 + $0x468] sm:$0xf]
        %v1725 = vld [vmem:[#allocation6 + $0x46c] sm:$0xf]
        %v1726 = vld [vmem:[#allocation6 + $0x470] sm:$0xf]
        %v1727 = vld [vmem:[#allocation6 + $0x474] sm:$0xf]
        %v1728 = vld [vmem:[#allocation6 + $0x478] sm:$0xf]
        %v1729 = vld [vmem:[#allocation6 + $0x47c] sm:$0xf]
        %v1730 = vld [vmem:[#allocation8 + $0x5] sm:$0x1]
        %v1731 = vlaneseq
        %v1732 = vshrl.u32 %v1731, 7
        %v1733 = vsub.s32 0, %v1732
        %v1734 = vrot.slane %v1730, %v1733
        %v1783 = vunpack.c.l.b16 %v1682
        %v1784 = vunpack.c.l.b16 %v1683
        %v1785 = vunpack.c.l.b16 %v1684
        %v1786 = vunpack.c.l.b16 %v1685
        %v1787 = vunpack.c.l.b16 %v1686
        %v1788 = vunpack.c.l.b16 %v1687
        %v1789 = vunpack.c.l.b16 %v1688
        %v1790 = vunpack.c.l.b16 %v1689
        %v1791 = vunpack.c.l.b16 %v1690
        %v1792 = vunpack.c.l.b16 %v1691
        %v1793 = vunpack.c.l.b16 %v1692
        %v1794 = vunpack.c.l.b16 %v1693
        %v1795 = vunpack.c.l.b16 %v1694
        %v1796 = vunpack.c.l.b16 %v1695
        %v1797 = vunpack.c.l.b16 %v1696
        %v1798 = vunpack.c.l.b16 %v1697
        %v1799 = vunpack.c.l.b16 %v1698
        %v1800 = vunpack.c.l.b16 %v1699
        %v1801 = vunpack.c.l.b16 %v1700
        %v1802 = vunpack.c.l.b16 %v1701
        %v1803 = vunpack.c.l.b16 %v1702
        %v1804 = vunpack.c.l.b16 %v1703
        %v1805 = vunpack.c.l.b16 %v1704
        %v1806 = vunpack.c.l.b16 %v1705
        %v1807 = vunpack.c.l.b16 %v1706
        %v1808 = vunpack.c.l.b16 %v1707
        %v1809 = vunpack.c.l.b16 %v1708
        %v1810 = vunpack.c.l.b16 %v1709
        %v1811 = vunpack.c.l.b16 %v1710
        %v1812 = vunpack.c.l.b16 %v1711
        %v1813 = vunpack.c.l.b16 %v1712
        %v1814 = vunpack.c.l.b16 %v1713
        %v1815 = vunpack.c.l.b16 %v1714
        %v1816 = vunpack.c.l.b16 %v1715
        %v1817 = vunpack.c.l.b16 %v1716
        %v1818 = vunpack.c.l.b16 %v1717
        %v1819 = vunpack.c.l.b16 %v1718
        %v1820 = vunpack.c.l.b16 %v1719
        %v1821 = vunpack.c.l.b16 %v1720
        %v1822 = vunpack.c.l.b16 %v1721
        %v1823 = vunpack.c.l.b16 %v1722
        %v1824 = vunpack.c.l.b16 %v1723
        %v1825 = vunpack.c.l.b16 %v1724
        %v1826 = vunpack.c.l.b16 %v1725
        %v1827 = vunpack.c.l.b16 %v1726
        %v1828 = vunpack.c.l.b16 %v1727
        %v1829 = vunpack.c.l.b16 %v1728
        %v1830 = vunpack.c.l.b16 %v1729
        %v1831 = vpack.c.b16 %v1784, %v1783
        %v1832 = vpack.c.b16 %v1786, %v1785
        %v1833 = vpack.c.b16 %v1788, %v1787
        %v1834 = vpack.c.b16 %v1790, %v1789
        %v1835 = vpack.c.b16 %v1792, %v1791
        %v1836 = vpack.c.b16 %v1794, %v1793
        %v1837 = vpack.c.b16 %v1796, %v1795
        %v1838 = vpack.c.b16 %v1798, %v1797
        %v1839 = vpack.c.b16 %v1800, %v1799
        %v1840 = vpack.c.b16 %v1802, %v1801
        %v1841 = vpack.c.b16 %v1804, %v1803
        %v1842 = vpack.c.b16 %v1806, %v1805
        %v1843 = vpack.c.b16 %v1808, %v1807
        %v1844 = vpack.c.b16 %v1810, %v1809
        %v1845 = vpack.c.b16 %v1812, %v1811
        %v1846 = vpack.c.b16 %v1814, %v1813
        %v1847 = vpack.c.b16 %v1816, %v1815
        %v1848 = vpack.c.b16 %v1818, %v1817
        %v1849 = vpack.c.b16 %v1820, %v1819
        %v1850 = vpack.c.b16 %v1822, %v1821
        %v1851 = vpack.c.b16 %v1824, %v1823
        %v1852 = vpack.c.b16 %v1826, %v1825
        %v1853 = vpack.c.b16 %v1828, %v1827
        %v1854 = vpack.c.b16 %v1830, %v1829
        %1879 = vmatprep.subr.bf16.mxu0 0
        %1880 = vmatpush1.bf16.msra.mxu0 %v1831
        %1881 = vmatprep.subr.bf16.mxu0 0
        %1882 = vmatpush1.bf16.msra.mxu0 %v1832
        %1883 = vmatprep.subr.bf16.mxu0 0
        %1884 = vmatpush1.bf16.msra.mxu0 %v1833
        %1885 = vmatprep.subr.bf16.mxu0 0
        %1886 = vmatpush1.bf16.msra.mxu0 %v1834
        %1887 = vmatprep.subr.bf16.mxu0 0
        %1888 = vmatpush1.bf16.msra.mxu0 %v1835
        %1889 = vmatprep.subr.bf16.mxu0 0
        %1890 = vmatpush1.bf16.msra.mxu0 %v1836
        %1891 = vmatprep.subr.bf16.mxu0 0
        %1892 = vmatpush1.bf16.msra.mxu0 %v1837
        %1893 = vmatprep.subr.bf16.mxu0 0
        %1894 = vmatpush1.bf16.msra.mxu0 %v1838
        %1895 = vmatprep.subr.bf16.mxu0 0
        %1896 = vmatpush1.bf16.msra.mxu0 %v1839
        %1897 = vmatprep.subr.bf16.mxu0 0
        %1898 = vmatpush1.bf16.msra.mxu0 %v1840
        %1899 = vmatprep.subr.bf16.mxu0 0
        %1900 = vmatpush1.bf16.msra.mxu0 %v1841
        %1901 = vmatprep.subr.bf16.mxu0 0
        %1902 = vmatpush1.bf16.msra.mxu0 %v1842
        %1903 = vmatprep.subr.bf16.mxu0 0
        %1904 = vmatpush1.bf16.msra.mxu0 %v1843
        %1905 = vmatprep.subr.bf16.mxu0 0
        %1906 = vmatpush1.bf16.msra.mxu0 %v1844
        %1907 = vmatprep.subr.bf16.mxu0 0
        %1908 = vmatpush1.bf16.msra.mxu0 %v1845
        %1909 = vmatprep.subr.bf16.mxu0 0
        %1910 = vmatpush1.bf16.msra.mxu0 %v1846
        %1911 = vmatprep.mubr.bf16.mxu0 %v1680
        %1912 = vmatmul.mubr.bf16.gmra.mrb[0].mxu0 %v1679
        %v1913 = vpop.f32.mrb[0].mxu0
        %v1914 = vadd.f32 %v1734, %v1913
        %v1915 = vpop.f32.mrb[0].mxu0
        %v1916 = vpop.f32.mrb[0].mxu0
        %v1917 = vpop.f32.mrb[0].mxu0
        %1918 = vdwg.mxu0
        %1919 = vmatprep.subr.bf16.mxu0 0
        %1920 = vmatpush1.bf16.msra.mxu0 %v1847
        %1921 = vmatprep.subr.bf16.mxu0 0
        %1922 = vmatpush1.bf16.msra.mxu0 %v1848
        %1923 = vmatprep.subr.bf16.mxu0 0
        %1924 = vmatpush1.bf16.msra.mxu0 %v1849
        %1925 = vmatprep.subr.bf16.mxu0 0
        %1926 = vmatpush1.bf16.msra.mxu0 %v1850
        %1927 = vmatprep.subr.bf16.mxu0 0
        %1928 = vmatpush1.bf16.msra.mxu0 %v1851
        %1929 = vmatprep.subr.bf16.mxu0 0
        %1930 = vmatpush1.bf16.msra.mxu0 %v1852
        %1931 = vmatprep.subr.bf16.mxu0 0
        %1932 = vmatpush1.bf16.msra.mxu0 %v1853
        %1933 = vmatprep.subr.bf16.mxu0 0
        %1934 = vmatpush1.bf16.msra.mxu0 %v1854
        %1935 = vmatprep.subr.bf16.mxu0 0
        %1936 = vmatpush1.bf16.msra.mxu0 0
        %1937 = vmatprep.subr.bf16.mxu0 0
        %1938 = vmatpush1.bf16.msra.mxu0 0
        %1939 = vmatprep.subr.bf16.mxu0 0
        %1940 = vmatpush1.bf16.msra.mxu0 0
        %1941 = vmatprep.subr.bf16.mxu0 0
        %1942 = vmatpush1.bf16.msra.mxu0 0
        %1943 = vmatprep.subr.bf16.mxu0 0
        %1944 = vmatpush1.bf16.msra.mxu0 0
        %1945 = vmatprep.subr.bf16.mxu0 0
        %1946 = vmatpush1.bf16.msra.mxu0 0
        %1947 = vmatprep.subr.bf16.mxu0 0
        %1948 = vmatpush1.bf16.msra.mxu0 0
        %1949 = vmatprep.subr.bf16.mxu0 0
        %1950 = vmatpush1.bf16.msra.mxu0 0
        %1951 = vmatprep.mubr.bf16.mxu0 0
        %1952 = vmatmul.mubr.bf16.gmra.mrb[0].mxu0 %v1681
        %v1953 = vpop.f32.mrb[0].mxu0
        %v1954 = vadd.f32 %v1914, %v1953
        %v1955 = vpop.f32.mrb[0].mxu0
        %v1956 = vpop.f32.mrb[0].mxu0
        %v1957 = vpop.f32.mrb[0].mxu0
        %1958 = vdwg.mxu0
        %v1959 = vmax.f32 %v1954, 0.0
        %vm1960 = vcmask 519168
        %1961 = vst.msk [vmem:[#allocation5 + $0x1] sm:$0xf] %vm1960, %v1959
        %1962 = vst [vmem:[#allocation5 + $0x5] sm:$0x1] 0.0
        %v1963 = vld [vmem:[%s1675] ss:$2 sm:$0xf]
        %v1964 = vpack.c.bf16 %v1963, %v1963
        %v1965 = vld [vmem:[#allocation6 + $0x540] sm:$0xf]
        %v1966 = vld [vmem:[#allocation6 + $0x544] sm:$0xf]
        %v1967 = vld [vmem:[#allocation6 + $0x548] sm:$0xf]
        %v1968 = vld [vmem:[#allocation6 + $0x54c] sm:$0xf]
        %v1969 = vld [vmem:[#allocation6 + $0x550] sm:$0xf]
        %v1970 = vld [vmem:[#allocation6 + $0x554] sm:$0xf]
        %v1971 = vld [vmem:[#allocation6 + $0x558] sm:$0xf]
        %v1972 = vld [vmem:[#allocation6 + $0x55c] sm:$0xf]
        %v1973 = vld [vmem:[#allocation6 + $0x560] sm:$0xf]
        %v1974 = vld [vmem:[#allocation6 + $0x564] sm:$0xf]
        %v1975 = vld [vmem:[#allocation6 + $0x568] sm:$0xf]
        %v1976 = vld [vmem:[#allocation6 + $0x56c] sm:$0xf]
        %v1977 = vld [vmem:[#allocation6 + $0x570] sm:$0xf]
        %v1978 = vld [vmem:[#allocation6 + $0x574] sm:$0xf]
        %v1979 = vld [vmem:[#allocation6 + $0x578] sm:$0xf]
        %v1980 = vld [vmem:[#allocation6 + $0x57c] sm:$0xf]
        %v1981 = vld [vmem:[#allocation8 + $0x7] sm:$0x1]
        %v1982 = vlaneseq
        %v1983 = vshrl.u32 %v1982, 7
        %v1984 = vsub.s32 0, %v1983
        %v1985 = vrot.slane %v1981, %v1984
        %v2002 = vunpack.c.l.b16 %v1965
        %v2003 = vunpack.c.l.b16 %v1966
        %v2004 = vunpack.c.l.b16 %v1967
        %v2005 = vunpack.c.l.b16 %v1968
        %v2006 = vunpack.c.l.b16 %v1969
        %v2007 = vunpack.c.l.b16 %v1970
        %v2008 = vunpack.c.l.b16 %v1971
        %v2009 = vunpack.c.l.b16 %v1972
        %v2010 = vunpack.c.l.b16 %v1973
        %v2011 = vunpack.c.l.b16 %v1974
        %v2012 = vunpack.c.l.b16 %v1975
        %v2013 = vunpack.c.l.b16 %v1976
        %v2014 = vunpack.c.l.b16 %v1977
        %v2015 = vunpack.c.l.b16 %v1978
        %v2016 = vunpack.c.l.b16 %v1979
        %v2017 = vunpack.c.l.b16 %v1980
        %v2018 = vpack.c.b16 %v2003, %v2002
        %v2019 = vpack.c.b16 %v2005, %v2004
        %v2020 = vpack.c.b16 %v2007, %v2006
        %v2021 = vpack.c.b16 %v2009, %v2008
        %v2022 = vpack.c.b16 %v2011, %v2010
        %v2023 = vpack.c.b16 %v2013, %v2012
        %v2024 = vpack.c.b16 %v2015, %v2014
        %v2025 = vpack.c.b16 %v2017, %v2016
        %2034 = vmatprep.subr.bf16.mxu0 0
        %2035 = vmatpush1.bf16.msra.mxu0 %v2018
        %2036 = vmatprep.subr.bf16.mxu0 0
        %2037 = vmatpush1.bf16.msra.mxu0 %v2019
        %2038 = vmatprep.subr.bf16.mxu0 0
        %2039 = vmatpush1.bf16.msra.mxu0 %v2020
        %2040 = vmatprep.subr.bf16.mxu0 0
        %2041 = vmatpush1.bf16.msra.mxu0 %v2021
        %2042 = vmatprep.subr.bf16.mxu0 0
        %2043 = vmatpush1.bf16.msra.mxu0 %v2022
        %2044 = vmatprep.subr.bf16.mxu0 0
        %2045 = vmatpush1.bf16.msra.mxu0 %v2023
        %2046 = vmatprep.subr.bf16.mxu0 0
        %2047 = vmatpush1.bf16.msra.mxu0 %v2024
        %2048 = vmatprep.subr.bf16.mxu0 0
        %2049 = vmatpush1.bf16.msra.mxu0 %v2025
        %2050 = vmatprep.subr.bf16.mxu0 0
        %2051 = vmatpush1.bf16.msra.mxu0 0
        %2052 = vmatprep.subr.bf16.mxu0 0
        %2053 = vmatpush1.bf16.msra.mxu0 0
        %2054 = vmatprep.subr.bf16.mxu0 0
        %2055 = vmatpush1.bf16.msra.mxu0 0
        %2056 = vmatprep.subr.bf16.mxu0 0
        %2057 = vmatpush1.bf16.msra.mxu0 0
        %2058 = vmatprep.subr.bf16.mxu0 0
        %2059 = vmatpush1.bf16.msra.mxu0 0
        %2060 = vmatprep.subr.bf16.mxu0 0
        %2061 = vmatpush1.bf16.msra.mxu0 0
        %2062 = vmatprep.subr.bf16.mxu0 0
        %2063 = vmatpush1.bf16.msra.mxu0 0
        %2064 = vmatprep.subr.bf16.mxu0 0
        %2065 = vmatpush1.bf16.msra.mxu0 0
        %2066 = vmatprep.mubr.bf16.mxu0 0
        %2067 = vmatmul.mubr.bf16.gmra.mrb[0].mxu0 %v1964
        %v2068 = vpop.f32.mrb[0].mxu0
        %v2069 = vadd.f32 %v1985, %v2068
        %v2070 = vpop.f32.mrb[0].mxu0
        %v2071 = vpop.f32.mrb[0].mxu0
        %v2072 = vpop.f32.mrb[0].mxu0
        %2073 = vdwg.mxu0
        %v2074 = vld [vmem:[#allocation5] sm:$0xf]
        %v2075 = vld [vmem:[#allocation5 + $0x1] sm:$0xf]
        %v2076 = vld [vmem:[#allocation5 + $0x2] sm:$0xf]
        %v2077 = vpack.c.bf16 %v2074, %v2074
        %v2078 = vpack.c.bf16 %v2075, %v2075
        %v2079 = vpack.c.bf16 %v2076, %v2076
        %v2080 = vld [vmem:[#allocation6 + $0x480] sm:$0xf]
        %v2081 = vld [vmem:[#allocation6 + $0x484] sm:$0xf]
        %v2082 = vld [vmem:[#allocation6 + $0x488] sm:$0xf]
        %v2083 = vld [vmem:[#allocation6 + $0x48c] sm:$0xf]
        %v2084 = vld [vmem:[#allocation6 + $0x490] sm:$0xf]
        %v2085 = vld [vmem:[#allocation6 + $0x494] sm:$0xf]
        %v2086 = vld [vmem:[#allocation6 + $0x498] sm:$0xf]
        %v2087 = vld [vmem:[#allocation6 + $0x49c] sm:$0xf]
        %v2088 = vld [vmem:[#allocation6 + $0x4a0] sm:$0xf]
        %v2089 = vld [vmem:[#allocation6 + $0x4a4] sm:$0xf]
        %v2090 = vld [vmem:[#allocation6 + $0x4a8] sm:$0xf]
        %v2091 = vld [vmem:[#allocation6 + $0x4ac] sm:$0xf]
        %v2092 = vld [vmem:[#allocation6 + $0x4b0] sm:$0xf]
        %v2093 = vld [vmem:[#allocation6 + $0x4b4] sm:$0xf]
        %v2094 = vld [vmem:[#allocation6 + $0x4b8] sm:$0xf]
        %v2095 = vld [vmem:[#allocation6 + $0x4bc] sm:$0xf]
        %v2096 = vld [vmem:[#allocation6 + $0x4c0] sm:$0xf]
        %v2097 = vld [vmem:[#allocation6 + $0x4c4] sm:$0xf]
        %v2098 = vld [vmem:[#allocation6 + $0x4c8] sm:$0xf]
        %v2099 = vld [vmem:[#allocation6 + $0x4cc] sm:$0xf]
        %v2100 = vld [vmem:[#allocation6 + $0x4d0] sm:$0xf]
        %v2101 = vld [vmem:[#allocation6 + $0x4d4] sm:$0xf]
        %v2102 = vld [vmem:[#allocation6 + $0x4d8] sm:$0xf]
        %v2103 = vld [vmem:[#allocation6 + $0x4dc] sm:$0xf]
        %v2104 = vld [vmem:[#allocation6 + $0x4e0] sm:$0xf]
        %v2105 = vld [vmem:[#allocation6 + $0x4e4] sm:$0xf]
        %v2106 = vld [vmem:[#allocation6 + $0x4e8] sm:$0xf]
        %v2107 = vld [vmem:[#allocation6 + $0x4ec] sm:$0xf]
        %v2108 = vld [vmem:[#allocation6 + $0x4f0] sm:$0xf]
        %v2109 = vld [vmem:[#allocation6 + $0x4f4] sm:$0xf]
        %v2110 = vld [vmem:[#allocation6 + $0x4f8] sm:$0xf]
        %v2111 = vld [vmem:[#allocation6 + $0x4fc] sm:$0xf]
        %v2112 = vld [vmem:[#allocation6 + $0x500] sm:$0xf]
        %v2113 = vld [vmem:[#allocation6 + $0x504] sm:$0xf]
        %v2114 = vld [vmem:[#allocation6 + $0x508] sm:$0xf]
        %v2115 = vld [vmem:[#allocation6 + $0x50c] sm:$0xf]
        %v2116 = vld [vmem:[#allocation6 + $0x510] sm:$0xf]
        %v2117 = vld [vmem:[#allocation6 + $0x514] sm:$0xf]
        %v2118 = vld [vmem:[#allocation6 + $0x518] sm:$0xf]
        %v2119 = vld [vmem:[#allocation6 + $0x51c] sm:$0xf]
        %v2120 = vld [vmem:[#allocation6 + $0x520] sm:$0xf]
        %v2121 = vld [vmem:[#allocation6 + $0x524] sm:$0xf]
        %v2122 = vld [vmem:[#allocation6 + $0x528] sm:$0xf]
        %v2123 = vld [vmem:[#allocation6 + $0x52c] sm:$0xf]
        %v2124 = vld [vmem:[#allocation6 + $0x530] sm:$0xf]
        %v2125 = vld [vmem:[#allocation6 + $0x534] sm:$0xf]
        %v2126 = vld [vmem:[#allocation6 + $0x538] sm:$0xf]
        %v2127 = vld [vmem:[#allocation6 + $0x53c] sm:$0xf]
        %v2128 = vld [vmem:[#allocation8 + $0x6] sm:$0x1]
        %v2129 = vlaneseq
        %v2130 = vshrl.u32 %v2129, 7
        %v2131 = vsub.s32 0, %v2130
        %v2132 = vrot.slane %v2128, %v2131
        %v2181 = vunpack.c.l.b16 %v2080
        %v2182 = vunpack.c.l.b16 %v2081
        %v2183 = vunpack.c.l.b16 %v2082
        %v2184 = vunpack.c.l.b16 %v2083
        %v2185 = vunpack.c.l.b16 %v2084
        %v2186 = vunpack.c.l.b16 %v2085
        %v2187 = vunpack.c.l.b16 %v2086
        %v2188 = vunpack.c.l.b16 %v2087
        %v2189 = vunpack.c.l.b16 %v2088
        %v2190 = vunpack.c.l.b16 %v2089
        %v2191 = vunpack.c.l.b16 %v2090
        %v2192 = vunpack.c.l.b16 %v2091
        %v2193 = vunpack.c.l.b16 %v2092
        %v2194 = vunpack.c.l.b16 %v2093
        %v2195 = vunpack.c.l.b16 %v2094
        %v2196 = vunpack.c.l.b16 %v2095
        %v2197 = vunpack.c.l.b16 %v2096
        %v2198 = vunpack.c.l.b16 %v2097
        %v2199 = vunpack.c.l.b16 %v2098
        %v2200 = vunpack.c.l.b16 %v2099
        %v2201 = vunpack.c.l.b16 %v2100
        %v2202 = vunpack.c.l.b16 %v2101
        %v2203 = vunpack.c.l.b16 %v2102
        %v2204 = vunpack.c.l.b16 %v2103
        %v2205 = vunpack.c.l.b16 %v2104
        %v2206 = vunpack.c.l.b16 %v2105
        %v2207 = vunpack.c.l.b16 %v2106
        %v2208 = vunpack.c.l.b16 %v2107
        %v2209 = vunpack.c.l.b16 %v2108
        %v2210 = vunpack.c.l.b16 %v2109
        %v2211 = vunpack.c.l.b16 %v2110
        %v2212 = vunpack.c.l.b16 %v2111
        %v2213 = vunpack.c.l.b16 %v2112
        %v2214 = vunpack.c.l.b16 %v2113
        %v2215 = vunpack.c.l.b16 %v2114
        %v2216 = vunpack.c.l.b16 %v2115
        %v2217 = vunpack.c.l.b16 %v2116
        %v2218 = vunpack.c.l.b16 %v2117
        %v2219 = vunpack.c.l.b16 %v2118
        %v2220 = vunpack.c.l.b16 %v2119
        %v2221 = vunpack.c.l.b16 %v2120
        %v2222 = vunpack.c.l.b16 %v2121
        %v2223 = vunpack.c.l.b16 %v2122
        %v2224 = vunpack.c.l.b16 %v2123
        %v2225 = vunpack.c.l.b16 %v2124
        %v2226 = vunpack.c.l.b16 %v2125
        %v2227 = vunpack.c.l.b16 %v2126
        %v2228 = vunpack.c.l.b16 %v2127
        %v2229 = vpack.c.b16 %v2182, %v2181
        %v2230 = vpack.c.b16 %v2184, %v2183
        %v2231 = vpack.c.b16 %v2186, %v2185
        %v2232 = vpack.c.b16 %v2188, %v2187
        %v2233 = vpack.c.b16 %v2190, %v2189
        %v2234 = vpack.c.b16 %v2192, %v2191
        %v2235 = vpack.c.b16 %v2194, %v2193
        %v2236 = vpack.c.b16 %v2196, %v2195
        %v2237 = vpack.c.b16 %v2198, %v2197
        %v2238 = vpack.c.b16 %v2200, %v2199
        %v2239 = vpack.c.b16 %v2202, %v2201
        %v2240 = vpack.c.b16 %v2204, %v2203
        %v2241 = vpack.c.b16 %v2206, %v2205
        %v2242 = vpack.c.b16 %v2208, %v2207
        %v2243 = vpack.c.b16 %v2210, %v2209
        %v2244 = vpack.c.b16 %v2212, %v2211
        %v2245 = vpack.c.b16 %v2214, %v2213
        %v2246 = vpack.c.b16 %v2216, %v2215
        %v2247 = vpack.c.b16 %v2218, %v2217
        %v2248 = vpack.c.b16 %v2220, %v2219
        %v2249 = vpack.c.b16 %v2222, %v2221
        %v2250 = vpack.c.b16 %v2224, %v2223
        %v2251 = vpack.c.b16 %v2226, %v2225
        %v2252 = vpack.c.b16 %v2228, %v2227
        %2277 = vmatprep.subr.bf16.mxu0 0
        %2278 = vmatpush1.bf16.msra.mxu0 %v2229
        %2279 = vmatprep.subr.bf16.mxu0 0
        %2280 = vmatpush1.bf16.msra.mxu0 %v2230
        %2281 = vmatprep.subr.bf16.mxu0 0
        %2282 = vmatpush1.bf16.msra.mxu0 %v2231
        %2283 = vmatprep.subr.bf16.mxu0 0
        %2284 = vmatpush1.bf16.msra.mxu0 %v2232
        %2285 = vmatprep.subr.bf16.mxu0 0
        %2286 = vmatpush1.bf16.msra.mxu0 %v2233
        %2287 = vmatprep.subr.bf16.mxu0 0
        %2288 = vmatpush1.bf16.msra.mxu0 %v2234
        %2289 = vmatprep.subr.bf16.mxu0 0
        %2290 = vmatpush1.bf16.msra.mxu0 %v2235
        %2291 = vmatprep.subr.bf16.mxu0 0
        %2292 = vmatpush1.bf16.msra.mxu0 %v2236
        %2293 = vmatprep.subr.bf16.mxu0 0
        %2294 = vmatpush1.bf16.msra.mxu0 %v2237
        %2295 = vmatprep.subr.bf16.mxu0 0
        %2296 = vmatpush1.bf16.msra.mxu0 %v2238
        %2297 = vmatprep.subr.bf16.mxu0 0
        %2298 = vmatpush1.bf16.msra.mxu0 %v2239
        %2299 = vmatprep.subr.bf16.mxu0 0
        %2300 = vmatpush1.bf16.msra.mxu0 %v2240
        %2301 = vmatprep.subr.bf16.mxu0 0
        %2302 = vmatpush1.bf16.msra.mxu0 %v2241
        %2303 = vmatprep.subr.bf16.mxu0 0
        %2304 = vmatpush1.bf16.msra.mxu0 %v2242
        %2305 = vmatprep.subr.bf16.mxu0 0
        %2306 = vmatpush1.bf16.msra.mxu0 %v2243
        %2307 = vmatprep.subr.bf16.mxu0 0
        %2308 = vmatpush1.bf16.msra.mxu0 %v2244
        %2309 = vmatprep.mubr.bf16.mxu0 %v2078
        %2310 = vmatmul.mubr.bf16.gmra.mrb[0].mxu0 %v2077
        %v2311 = vpop.f32.mrb[0].mxu0
        %v2312 = vadd.f32 %v2132, %v2311
        %v2313 = vpop.f32.mrb[0].mxu0
        %v2314 = vpop.f32.mrb[0].mxu0
        %v2315 = vpop.f32.mrb[0].mxu0
        %2316 = vdwg.mxu0
        %2317 = vmatprep.subr.bf16.mxu0 0
        %2318 = vmatpush1.bf16.msra.mxu0 %v2245
        %2319 = vmatprep.subr.bf16.mxu0 0
        %2320 = vmatpush1.bf16.msra.mxu0 %v2246
        %2321 = vmatprep.subr.bf16.mxu0 0
        %2322 = vmatpush1.bf16.msra.mxu0 %v2247
        %2323 = vmatprep.subr.bf16.mxu0 0
        %2324 = vmatpush1.bf16.msra.mxu0 %v2248
        %2325 = vmatprep.subr.bf16.mxu0 0
        %2326 = vmatpush1.bf16.msra.mxu0 %v2249
        %2327 = vmatprep.subr.bf16.mxu0 0
        %2328 = vmatpush1.bf16.msra.mxu0 %v2250
        %2329 = vmatprep.subr.bf16.mxu0 0
        %2330 = vmatpush1.bf16.msra.mxu0 %v2251
        %2331 = vmatprep.subr.bf16.mxu0 0
        %2332 = vmatpush1.bf16.msra.mxu0 %v2252
        %2333 = vmatprep.subr.bf16.mxu0 0
        %2334 = vmatpush1.bf16.msra.mxu0 0
        %2335 = vmatprep.subr.bf16.mxu0 0
        %2336 = vmatpush1.bf16.msra.mxu0 0
        %2337 = vmatprep.subr.bf16.mxu0 0
        %2338 = vmatpush1.bf16.msra.mxu0 0
        %2339 = vmatprep.subr.bf16.mxu0 0
        %2340 = vmatpush1.bf16.msra.mxu0 0
        %2341 = vmatprep.subr.bf16.mxu0 0
        %2342 = vmatpush1.bf16.msra.mxu0 0
        %2343 = vmatprep.subr.bf16.mxu0 0
        %2344 = vmatpush1.bf16.msra.mxu0 0
        %2345 = vmatprep.subr.bf16.mxu0 0
        %2346 = vmatpush1.bf16.msra.mxu0 0
        %2347 = vmatprep.subr.bf16.mxu0 0
        %2348 = vmatpush1.bf16.msra.mxu0 0
        %2349 = vmatprep.mubr.bf16.mxu0 0
        %2350 = vmatmul.mubr.bf16.gmra.mrb[0].mxu0 %v2079
        %v2351 = vpop.f32.mrb[0].mxu0
        %v2352 = vadd.f32 %v2312, %v2351
        %v2353 = vpop.f32.mrb[0].mxu0
        %v2354 = vpop.f32.mrb[0].mxu0
        %v2355 = vpop.f32.mrb[0].mxu0
        %2356 = vdwg.mxu0
        %v2357 = vadd.f32 %v2352, %v2069
        %v2358 = vmax.f32 %v2357, 0.0
        %2359 = vst.msk [vmem:[#allocation4 + $0x1] sm:$0xf] %vm1960, %v2358
        %2360 = vst [vmem:[#allocation4 + $0x5] sm:$0x1] 0.0
        %v2361 = vld [vmem:[#allocation4] sm:$0xf]
        %v2362 = vld [vmem:[#allocation4 + $0x1] sm:$0xf]
        %v2363 = vld [vmem:[#allocation4 + $0x2] sm:$0xf]
        %v2364 = vpack.c.bf16 %v2361, %v2361
        %v2365 = vpack.c.bf16 %v2362, %v2362
        %v2366 = vpack.c.bf16 %v2363, %v2363
        %v2367 = vld [vmem:[#allocation6 + $0x580] sm:$0xf]
        %v2368 = vld [vmem:[#allocation6 + $0x584] sm:$0xf]
        %v2369 = vld [vmem:[#allocation6 + $0x588] sm:$0xf]
        %v2370 = vld [vmem:[#allocation6 + $0x58c] sm:$0xf]
        %v2371 = vld [vmem:[#allocation6 + $0x590] sm:$0xf]
        %v2372 = vld [vmem:[#allocation6 + $0x594] sm:$0xf]
        %v2373 = vld [vmem:[#allocation6 + $0x598] sm:$0xf]
        %v2374 = vld [vmem:[#allocation6 + $0x59c] sm:$0xf]
        %v2375 = vld [vmem:[#allocation6 + $0x5a0] sm:$0xf]
        %v2376 = vld [vmem:[#allocation6 + $0x5a4] sm:$0xf]
        %v2377 = vld [vmem:[#allocation6 + $0x5a8] sm:$0xf]
        %v2378 = vld [vmem:[#allocation6 + $0x5ac] sm:$0xf]
        %v2379 = vld [vmem:[#allocation6 + $0x5b0] sm:$0xf]
        %v2380 = vld [vmem:[#allocation6 + $0x5b4] sm:$0xf]
        %v2381 = vld [vmem:[#allocation6 + $0x5b8] sm:$0xf]
        %v2382 = vld [vmem:[#allocation6 + $0x5bc] sm:$0xf]
        %v2383 = vld [vmem:[#allocation6 + $0x5c0] sm:$0xf]
        %v2384 = vld [vmem:[#allocation6 + $0x5c4] sm:$0xf]
        %v2385 = vld [vmem:[#allocation6 + $0x5c8] sm:$0xf]
        %v2386 = vld [vmem:[#allocation6 + $0x5cc] sm:$0xf]
        %v2387 = vld [vmem:[#allocation6 + $0x5d0] sm:$0xf]
        %v2388 = vld [vmem:[#allocation6 + $0x5d4] sm:$0xf]
        %v2389 = vld [vmem:[#allocation6 + $0x5d8] sm:$0xf]
        %v2390 = vld [vmem:[#allocation6 + $0x5dc] sm:$0xf]
        %v2391 = vld [vmem:[#allocation6 + $0x5e0] sm:$0xf]
        %v2392 = vld [vmem:[#allocation6 + $0x5e4] sm:$0xf]
        %v2393 = vld [vmem:[#allocation6 + $0x5e8] sm:$0xf]
        %v2394 = vld [vmem:[#allocation6 + $0x5ec] sm:$0xf]
        %v2395 = vld [vmem:[#allocation6 + $0x5f0] sm:$0xf]
        %v2396 = vld [vmem:[#allocation6 + $0x5f4] sm:$0xf]
        %v2397 = vld [vmem:[#allocation6 + $0x5f8] sm:$0xf]
        %v2398 = vld [vmem:[#allocation6 + $0x5fc] sm:$0xf]
        %v2399 = vld [vmem:[#allocation6 + $0x600] sm:$0xf]
        %v2400 = vld [vmem:[#allocation6 + $0x604] sm:$0xf]
        %v2401 = vld [vmem:[#allocation6 + $0x608] sm:$0xf]
        %v2402 = vld [vmem:[#allocation6 + $0x60c] sm:$0xf]
        %v2403 = vld [vmem:[#allocation6 + $0x610] sm:$0xf]
        %v2404 = vld [vmem:[#allocation6 + $0x614] sm:$0xf]
        %v2405 = vld [vmem:[#allocation6 + $0x618] sm:$0xf]
        %v2406 = vld [vmem:[#allocation6 + $0x61c] sm:$0xf]
        %v2407 = vld [vmem:[#allocation6 + $0x620] sm:$0xf]
        %v2408 = vld [vmem:[#allocation6 + $0x624] sm:$0xf]
        %v2409 = vld [vmem:[#allocation6 + $0x628] sm:$0xf]
        %v2410 = vld [vmem:[#allocation6 + $0x62c] sm:$0xf]
        %v2411 = vld [vmem:[#allocation6 + $0x630] sm:$0xf]
        %v2412 = vld [vmem:[#allocation6 + $0x634] sm:$0xf]
        %v2413 = vld [vmem:[#allocation6 + $0x638] sm:$0xf]
        %v2414 = vld [vmem:[#allocation6 + $0x63c] sm:$0xf]
        %v2415 = vld [vmem:[#allocation8 + $0x8] sm:$0x1]
        %v2416 = vlaneseq
        %v2417 = vshrl.u32 %v2416, 7
        %v2418 = vsub.s32 0, %v2417
        %v2419 = vrot.slane %v2415, %v2418
        %v2468 = vunpack.c.l.b16 %v2367
        %v2469 = vunpack.c.l.b16 %v2368
        %v2470 = vunpack.c.l.b16 %v2369
        %v2471 = vunpack.c.l.b16 %v2370
        %v2472 = vunpack.c.l.b16 %v2371
        %v2473 = vunpack.c.l.b16 %v2372
        %v2474 = vunpack.c.l.b16 %v2373
        %v2475 = vunpack.c.l.b16 %v2374
        %v2476 = vunpack.c.l.b16 %v2375
        %v2477 = vunpack.c.l.b16 %v2376
        %v2478 = vunpack.c.l.b16 %v2377
        %v2479 = vunpack.c.l.b16 %v2378
        %v2480 = vunpack.c.l.b16 %v2379
        %v2481 = vunpack.c.l.b16 %v2380
        %v2482 = vunpack.c.l.b16 %v2381
        %v2483 = vunpack.c.l.b16 %v2382
        %v2484 = vunpack.c.l.b16 %v2383
        %v2485 = vunpack.c.l.b16 %v2384
        %v2486 = vunpack.c.l.b16 %v2385
        %v2487 = vunpack.c.l.b16 %v2386
        %v2488 = vunpack.c.l.b16 %v2387
        %v2489 = vunpack.c.l.b16 %v2388
        %v2490 = vunpack.c.l.b16 %v2389
        %v2491 = vunpack.c.l.b16 %v2390
        %v2492 = vunpack.c.l.b16 %v2391
        %v2493 = vunpack.c.l.b16 %v2392
        %v2494 = vunpack.c.l.b16 %v2393
        %v2495 = vunpack.c.l.b16 %v2394
        %v2496 = vunpack.c.l.b16 %v2395
        %v2497 = vunpack.c.l.b16 %v2396
        %v2498 = vunpack.c.l.b16 %v2397
        %v2499 = vunpack.c.l.b16 %v2398
        %v2500 = vunpack.c.l.b16 %v2399
        %v2501 = vunpack.c.l.b16 %v2400
        %v2502 = vunpack.c.l.b16 %v2401
        %v2503 = vunpack.c.l.b16 %v2402
        %v2504 = vunpack.c.l.b16 %v2403
        %v2505 = vunpack.c.l.b16 %v2404
        %v2506 = vunpack.c.l.b16 %v2405
        %v2507 = vunpack.c.l.b16 %v2406
        %v2508 = vunpack.c.l.b16 %v2407
        %v2509 = vunpack.c.l.b16 %v2408
        %v2510 = vunpack.c.l.b16 %v2409
        %v2511 = vunpack.c.l.b16 %v2410
        %v2512 = vunpack.c.l.b16 %v2411
        %v2513 = vunpack.c.l.b16 %v2412
        %v2514 = vunpack.c.l.b16 %v2413
        %v2515 = vunpack.c.l.b16 %v2414
        %v2516 = vpack.c.b16 %v2469, %v2468
        %v2517 = vpack.c.b16 %v2471, %v2470
        %v2518 = vpack.c.b16 %v2473, %v2472
        %v2519 = vpack.c.b16 %v2475, %v2474
        %v2520 = vpack.c.b16 %v2477, %v2476
        %v2521 = vpack.c.b16 %v2479, %v2478
        %v2522 = vpack.c.b16 %v2481, %v2480
        %v2523 = vpack.c.b16 %v2483, %v2482
        %v2524 = vpack.c.b16 %v2485, %v2484
        %v2525 = vpack.c.b16 %v2487, %v2486
        %v2526 = vpack.c.b16 %v2489, %v2488
        %v2527 = vpack.c.b16 %v2491, %v2490
        %v2528 = vpack.c.b16 %v2493, %v2492
        %v2529 = vpack.c.b16 %v2495, %v2494
        %v2530 = vpack.c.b16 %v2497, %v2496
        %v2531 = vpack.c.b16 %v2499, %v2498
        %v2532 = vpack.c.b16 %v2501, %v2500
        %v2533 = vpack.c.b16 %v2503, %v2502
        %v2534 = vpack.c.b16 %v2505, %v2504
        %v2535 = vpack.c.b16 %v2507, %v2506
        %v2536 = vpack.c.b16 %v2509, %v2508
        %v2537 = vpack.c.b16 %v2511, %v2510
        %v2538 = vpack.c.b16 %v2513, %v2512
        %v2539 = vpack.c.b16 %v2515, %v2514
        %2564 = vmatprep.subr.bf16.mxu0 0
        %2565 = vmatpush1.bf16.msra.mxu0 %v2516
        %2566 = vmatprep.subr.bf16.mxu0 0
        %2567 = vmatpush1.bf16.msra.mxu0 %v2517
        %2568 = vmatprep.subr.bf16.mxu0 0
        %2569 = vmatpush1.bf16.msra.mxu0 %v2518
        %2570 = vmatprep.subr.bf16.mxu0 0
        %2571 = vmatpush1.bf16.msra.mxu0 %v2519
        %2572 = vmatprep.subr.bf16.mxu0 0
        %2573 = vmatpush1.bf16.msra.mxu0 %v2520
        %2574 = vmatprep.subr.bf16.mxu0 0
        %2575 = vmatpush1.bf16.msra.mxu0 %v2521
        %2576 = vmatprep.subr.bf16.mxu0 0
        %2577 = vmatpush1.bf16.msra.mxu0 %v2522
        %2578 = vmatprep.subr.bf16.mxu0 0
        %2579 = vmatpush1.bf16.msra.mxu0 %v2523
        %2580 = vmatprep.subr.bf16.mxu0 0
        %2581 = vmatpush1.bf16.msra.mxu0 %v2524
        %2582 = vmatprep.subr.bf16.mxu0 0
        %2583 = vmatpush1.bf16.msra.mxu0 %v2525
        %2584 = vmatprep.subr.bf16.mxu0 0
        %2585 = vmatpush1.bf16.msra.mxu0 %v2526
        %2586 = vmatprep.subr.bf16.mxu0 0
        %2587 = vmatpush1.bf16.msra.mxu0 %v2527
        %2588 = vmatprep.subr.bf16.mxu0 0
        %2589 = vmatpush1.bf16.msra.mxu0 %v2528
        %2590 = vmatprep.subr.bf16.mxu0 0
        %2591 = vmatpush1.bf16.msra.mxu0 %v2529
        %2592 = vmatprep.subr.bf16.mxu0 0
        %2593 = vmatpush1.bf16.msra.mxu0 %v2530
        %2594 = vmatprep.subr.bf16.mxu0 0
        %2595 = vmatpush1.bf16.msra.mxu0 %v2531
        %2596 = vmatprep.mubr.bf16.mxu0 %v2365
        %2597 = vmatmul.mubr.bf16.gmra.mrb[0].mxu0 %v2364
        %v2598 = vpop.f32.mrb[0].mxu0
        %v2599 = vadd.f32 %v2419, %v2598
        %v2600 = vpop.f32.mrb[0].mxu0
        %v2601 = vpop.f32.mrb[0].mxu0
        %v2602 = vpop.f32.mrb[0].mxu0
        %2603 = vdwg.mxu0
        %2604 = vmatprep.subr.bf16.mxu0 0
        %2605 = vmatpush1.bf16.msra.mxu0 %v2532
        %2606 = vmatprep.subr.bf16.mxu0 0
        %2607 = vmatpush1.bf16.msra.mxu0 %v2533
        %2608 = vmatprep.subr.bf16.mxu0 0
        %2609 = vmatpush1.bf16.msra.mxu0 %v2534
        %2610 = vmatprep.subr.bf16.mxu0 0
        %2611 = vmatpush1.bf16.msra.mxu0 %v2535
        %2612 = vmatprep.subr.bf16.mxu0 0
        %2613 = vmatpush1.bf16.msra.mxu0 %v2536
        %2614 = vmatprep.subr.bf16.mxu0 0
        %2615 = vmatpush1.bf16.msra.mxu0 %v2537
        %2616 = vmatprep.subr.bf16.mxu0 0
        %2617 = vmatpush1.bf16.msra.mxu0 %v2538
        %2618 = vmatprep.subr.bf16.mxu0 0
        %2619 = vmatpush1.bf16.msra.mxu0 %v2539
        %2620 = vmatprep.subr.bf16.mxu0 0
        %2621 = vmatpush1.bf16.msra.mxu0 0
        %2622 = vmatprep.subr.bf16.mxu0 0
        %2623 = vmatpush1.bf16.msra.mxu0 0
        %2624 = vmatprep.subr.bf16.mxu0 0
        %2625 = vmatpush1.bf16.msra.mxu0 0
        %2626 = vmatprep.subr.bf16.mxu0 0
        %2627 = vmatpush1.bf16.msra.mxu0 0
        %2628 = vmatprep.subr.bf16.mxu0 0
        %2629 = vmatpush1.bf16.msra.mxu0 0
        %2630 = vmatprep.subr.bf16.mxu0 0
        %2631 = vmatpush1.bf16.msra.mxu0 0
        %2632 = vmatprep.subr.bf16.mxu0 0
        %2633 = vmatpush1.bf16.msra.mxu0 0
        %2634 = vmatprep.subr.bf16.mxu0 0
        %2635 = vmatpush1.bf16.msra.mxu0 0
        %2636 = vmatprep.mubr.bf16.mxu0 0
        %2637 = vmatmul.mubr.bf16.gmra.mrb[0].mxu0 %v2366
        %v2638 = vpop.f32.mrb[0].mxu0
        %v2639 = vadd.f32 %v2599, %v2638
        %v2640 = vpop.f32.mrb[0].mxu0
        %v2641 = vpop.f32.mrb[0].mxu0
        %v2642 = vpop.f32.mrb[0].mxu0
        %2643 = vdwg.mxu0
        %v2644 = vmax.f32 %v2639, 0.0
        %2645 = vst.msk [vmem:[#allocation5 + $0x1] sm:$0xf] %vm1960, %v2644
        %2646 = vst [vmem:[#allocation5 + $0x5] sm:$0x1] 0.0
        %v2647 = vld [vmem:[#allocation4 + $0x1] sm:$0xf]
        %v2648 = vld [vmem:[#allocation5] sm:$0xf]
        %v2649 = vld [vmem:[#allocation5 + $0x1] sm:$0xf]
        %v2650 = vld [vmem:[#allocation5 + $0x2] sm:$0xf]
        %v2651 = vpack.c.bf16 %v2648, %v2648
        %v2652 = vpack.c.bf16 %v2649, %v2649
        %v2653 = vpack.c.bf16 %v2650, %v2650
        %v2654 = vld [vmem:[#allocation6 + $0x640] sm:$0xf]
        %v2655 = vld [vmem:[#allocation6 + $0x644] sm:$0xf]
        %v2656 = vld [vmem:[#allocation6 + $0x648] sm:$0xf]
        %v2657 = vld [vmem:[#allocation6 + $0x64c] sm:$0xf]
        %v2658 = vld [vmem:[#allocation6 + $0x650] sm:$0xf]
        %v2659 = vld [vmem:[#allocation6 + $0x654] sm:$0xf]
        %v2660 = vld [vmem:[#allocation6 + $0x658] sm:$0xf]
        %v2661 = vld [vmem:[#allocation6 + $0x65c] sm:$0xf]
        %v2662 = vld [vmem:[#allocation6 + $0x660] sm:$0xf]
        %v2663 = vld [vmem:[#allocation6 + $0x664] sm:$0xf]
        %v2664 = vld [vmem:[#allocation6 + $0x668] sm:$0xf]
        %v2665 = vld [vmem:[#allocation6 + $0x66c] sm:$0xf]
        %v2666 = vld [vmem:[#allocation6 + $0x670] sm:$0xf]
        %v2667 = vld [vmem:[#allocation6 + $0x674] sm:$0xf]
        %v2668 = vld [vmem:[#allocation6 + $0x678] sm:$0xf]
        %v2669 = vld [vmem:[#allocation6 + $0x67c] sm:$0xf]
        %v2670 = vld [vmem:[#allocation6 + $0x680] sm:$0xf]
        %v2671 = vld [vmem:[#allocation6 + $0x684] sm:$0xf]
        %v2672 = vld [vmem:[#allocation6 + $0x688] sm:$0xf]
        %v2673 = vld [vmem:[#allocation6 + $0x68c] sm:$0xf]
        %v2674 = vld [vmem:[#allocation6 + $0x690] sm:$0xf]
        %v2675 = vld [vmem:[#allocation6 + $0x694] sm:$0xf]
        %v2676 = vld [vmem:[#allocation6 + $0x698] sm:$0xf]
        %v2677 = vld [vmem:[#allocation6 + $0x69c] sm:$0xf]
        %v2678 = vld [vmem:[#allocation6 + $0x6a0] sm:$0xf]
        %v2679 = vld [vmem:[#allocation6 + $0x6a4] sm:$0xf]
        %v2680 = vld [vmem:[#allocation6 + $0x6a8] sm:$0xf]
        %v2681 = vld [vmem:[#allocation6 + $0x6ac] sm:$0xf]
        %v2682 = vld [vmem:[#allocation6 + $0x6b0] sm:$0xf]
        %v2683 = vld [vmem:[#allocation6 + $0x6b4] sm:$0xf]
        %v2684 = vld [vmem:[#allocation6 + $0x6b8] sm:$0xf]
        %v2685 = vld [vmem:[#allocation6 + $0x6bc] sm:$0xf]
        %v2686 = vld [vmem:[#allocation6 + $0x6c0] sm:$0xf]
        %v2687 = vld [vmem:[#allocation6 + $0x6c4] sm:$0xf]
        %v2688 = vld [vmem:[#allocation6 + $0x6c8] sm:$0xf]
        %v2689 = vld [vmem:[#allocation6 + $0x6cc] sm:$0xf]
        %v2690 = vld [vmem:[#allocation6 + $0x6d0] sm:$0xf]
        %v2691 = vld [vmem:[#allocation6 + $0x6d4] sm:$0xf]
        %v2692 = vld [vmem:[#allocation6 + $0x6d8] sm:$0xf]
        %v2693 = vld [vmem:[#allocation6 + $0x6dc] sm:$0xf]
        %v2694 = vld [vmem:[#allocation6 + $0x6e0] sm:$0xf]
        %v2695 = vld [vmem:[#allocation6 + $0x6e4] sm:$0xf]
        %v2696 = vld [vmem:[#allocation6 + $0x6e8] sm:$0xf]
        %v2697 = vld [vmem:[#allocation6 + $0x6ec] sm:$0xf]
        %v2698 = vld [vmem:[#allocation6 + $0x6f0] sm:$0xf]
        %v2699 = vld [vmem:[#allocation6 + $0x6f4] sm:$0xf]
        %v2700 = vld [vmem:[#allocation6 + $0x6f8] sm:$0xf]
        %v2701 = vld [vmem:[#allocation6 + $0x6fc] sm:$0xf]
        %v2702 = vld [vmem:[#allocation8 + $0x9] sm:$0x1]
        %v2703 = vlaneseq
        %v2704 = vshrl.u32 %v2703, 7
        %v2705 = vsub.s32 0, %v2704
        %v2706 = vrot.slane %v2702, %v2705
        %v2755 = vunpack.c.l.b16 %v2654
        %v2756 = vunpack.c.l.b16 %v2655
        %v2757 = vunpack.c.l.b16 %v2656
        %v2758 = vunpack.c.l.b16 %v2657
        %v2759 = vunpack.c.l.b16 %v2658
        %v2760 = vunpack.c.l.b16 %v2659
        %v2761 = vunpack.c.l.b16 %v2660
        %v2762 = vunpack.c.l.b16 %v2661
        %v2763 = vunpack.c.l.b16 %v2662
        %v2764 = vunpack.c.l.b16 %v2663
        %v2765 = vunpack.c.l.b16 %v2664
        %v2766 = vunpack.c.l.b16 %v2665
        %v2767 = vunpack.c.l.b16 %v2666
        %v2768 = vunpack.c.l.b16 %v2667
        %v2769 = vunpack.c.l.b16 %v2668
        %v2770 = vunpack.c.l.b16 %v2669
        %v2771 = vunpack.c.l.b16 %v2670
        %v2772 = vunpack.c.l.b16 %v2671
        %v2773 = vunpack.c.l.b16 %v2672
        %v2774 = vunpack.c.l.b16 %v2673
        %v2775 = vunpack.c.l.b16 %v2674
        %v2776 = vunpack.c.l.b16 %v2675
        %v2777 = vunpack.c.l.b16 %v2676
        %v2778 = vunpack.c.l.b16 %v2677
        %v2779 = vunpack.c.l.b16 %v2678
        %v2780 = vunpack.c.l.b16 %v2679
        %v2781 = vunpack.c.l.b16 %v2680
        %v2782 = vunpack.c.l.b16 %v2681
        %v2783 = vunpack.c.l.b16 %v2682
        %v2784 = vunpack.c.l.b16 %v2683
        %v2785 = vunpack.c.l.b16 %v2684
        %v2786 = vunpack.c.l.b16 %v2685
        %v2787 = vunpack.c.l.b16 %v2686
        %v2788 = vunpack.c.l.b16 %v2687
        %v2789 = vunpack.c.l.b16 %v2688
        %v2790 = vunpack.c.l.b16 %v2689
        %v2791 = vunpack.c.l.b16 %v2690
        %v2792 = vunpack.c.l.b16 %v2691
        %v2793 = vunpack.c.l.b16 %v2692
        %v2794 = vunpack.c.l.b16 %v2693
        %v2795 = vunpack.c.l.b16 %v2694
        %v2796 = vunpack.c.l.b16 %v2695
        %v2797 = vunpack.c.l.b16 %v2696
        %v2798 = vunpack.c.l.b16 %v2697
        %v2799 = vunpack.c.l.b16 %v2698
        %v2800 = vunpack.c.l.b16 %v2699
        %v2801 = vunpack.c.l.b16 %v2700
        %v2802 = vunpack.c.l.b16 %v2701
        %v2803 = vpack.c.b16 %v2756, %v2755
        %v2804 = vpack.c.b16 %v2758, %v2757
        %v2805 = vpack.c.b16 %v2760, %v2759
        %v2806 = vpack.c.b16 %v2762, %v2761
        %v2807 = vpack.c.b16 %v2764, %v2763
        %v2808 = vpack.c.b16 %v2766, %v2765
        %v2809 = vpack.c.b16 %v2768, %v2767
        %v2810 = vpack.c.b16 %v2770, %v2769
        %v2811 = vpack.c.b16 %v2772, %v2771
        %v2812 = vpack.c.b16 %v2774, %v2773
        %v2813 = vpack.c.b16 %v2776, %v2775
        %v2814 = vpack.c.b16 %v2778, %v2777
        %v2815 = vpack.c.b16 %v2780, %v2779
        %v2816 = vpack.c.b16 %v2782, %v2781
        %v2817 = vpack.c.b16 %v2784, %v2783
        %v2818 = vpack.c.b16 %v2786, %v2785
        %v2819 = vpack.c.b16 %v2788, %v2787
        %v2820 = vpack.c.b16 %v2790, %v2789
        %v2821 = vpack.c.b16 %v2792, %v2791
        %v2822 = vpack.c.b16 %v2794, %v2793
        %v2823 = vpack.c.b16 %v2796, %v2795
        %v2824 = vpack.c.b16 %v2798, %v2797
        %v2825 = vpack.c.b16 %v2800, %v2799
        %v2826 = vpack.c.b16 %v2802, %v2801
        %2851 = vmatprep.subr.bf16.mxu0 0
        %2852 = vmatpush1.bf16.msra.mxu0 %v2803
        %2853 = vmatprep.subr.bf16.mxu0 0
        %2854 = vmatpush1.bf16.msra.mxu0 %v2804
        %2855 = vmatprep.subr.bf16.mxu0 0
        %2856 = vmatpush1.bf16.msra.mxu0 %v2805
        %2857 = vmatprep.subr.bf16.mxu0 0
        %2858 = vmatpush1.bf16.msra.mxu0 %v2806
        %2859 = vmatprep.subr.bf16.mxu0 0
        %2860 = vmatpush1.bf16.msra.mxu0 %v2807
        %2861 = vmatprep.subr.bf16.mxu0 0
        %2862 = vmatpush1.bf16.msra.mxu0 %v2808
        %2863 = vmatprep.subr.bf16.mxu0 0
        %2864 = vmatpush1.bf16.msra.mxu0 %v2809
        %2865 = vmatprep.subr.bf16.mxu0 0
        %2866 = vmatpush1.bf16.msra.mxu0 %v2810
        %2867 = vmatprep.subr.bf16.mxu0 0
        %2868 = vmatpush1.bf16.msra.mxu0 %v2811
        %2869 = vmatprep.subr.bf16.mxu0 0
        %2870 = vmatpush1.bf16.msra.mxu0 %v2812
        %2871 = vmatprep.subr.bf16.mxu0 0
        %2872 = vmatpush1.bf16.msra.mxu0 %v2813
        %2873 = vmatprep.subr.bf16.mxu0 0
        %2874 = vmatpush1.bf16.msra.mxu0 %v2814
        %2875 = vmatprep.subr.bf16.mxu0 0
        %2876 = vmatpush1.bf16.msra.mxu0 %v2815
        %2877 = vmatprep.subr.bf16.mxu0 0
        %2878 = vmatpush1.bf16.msra.mxu0 %v2816
        %2879 = vmatprep.subr.bf16.mxu0 0
        %2880 = vmatpush1.bf16.msra.mxu0 %v2817
        %2881 = vmatprep.subr.bf16.mxu0 0
        %2882 = vmatpush1.bf16.msra.mxu0 %v2818
        %2883 = vmatprep.mubr.bf16.mxu0 %v2652
        %2884 = vmatmul.mubr.bf16.gmra.mrb[0].mxu0 %v2651
        %v2885 = vpop.f32.mrb[0].mxu0
        %v2886 = vadd.f32 %v2706, %v2885
        %v2887 = vpop.f32.mrb[0].mxu0
        %v2888 = vpop.f32.mrb[0].mxu0
        %v2889 = vpop.f32.mrb[0].mxu0
        %2890 = vdwg.mxu0
        %2891 = vmatprep.subr.bf16.mxu0 0
        %2892 = vmatpush1.bf16.msra.mxu0 %v2819
        %2893 = vmatprep.subr.bf16.mxu0 0
        %2894 = vmatpush1.bf16.msra.mxu0 %v2820
        %2895 = vmatprep.subr.bf16.mxu0 0
        %2896 = vmatpush1.bf16.msra.mxu0 %v2821
        %2897 = vmatprep.subr.bf16.mxu0 0
        %2898 = vmatpush1.bf16.msra.mxu0 %v2822
        %2899 = vmatprep.subr.bf16.mxu0 0
        %2900 = vmatpush1.bf16.msra.mxu0 %v2823
        %2901 = vmatprep.subr.bf16.mxu0 0
        %2902 = vmatpush1.bf16.msra.mxu0 %v2824
        %2903 = vmatprep.subr.bf16.mxu0 0
        %2904 = vmatpush1.bf16.msra.mxu0 %v2825
        %2905 = vmatprep.subr.bf16.mxu0 0
        %2906 = vmatpush1.bf16.msra.mxu0 %v2826
        %2907 = vmatprep.subr.bf16.mxu0 0
        %2908 = vmatpush1.bf16.msra.mxu0 0
        %2909 = vmatprep.subr.bf16.mxu0 0
        %2910 = vmatpush1.bf16.msra.mxu0 0
        %2911 = vmatprep.subr.bf16.mxu0 0
        %2912 = vmatpush1.bf16.msra.mxu0 0
        %2913 = vmatprep.subr.bf16.mxu0 0
        %2914 = vmatpush1.bf16.msra.mxu0 0
        %2915 = vmatprep.subr.bf16.mxu0 0
        %2916 = vmatpush1.bf16.msra.mxu0 0
        %2917 = vmatprep.subr.bf16.mxu0 0
        %2918 = vmatpush1.bf16.msra.mxu0 0
        %2919 = vmatprep.subr.bf16.mxu0 0
        %2920 = vmatpush1.bf16.msra.mxu0 0
        %2921 = vmatprep.subr.bf16.mxu0 0
        %2922 = vmatpush1.bf16.msra.mxu0 0
        %2923 = vmatprep.mubr.bf16.mxu0 0
        %2924 = vmatmul.mubr.bf16.gmra.mrb[0].mxu0 %v2653
        %v2925 = vpop.f32.mrb[0].mxu0
        %v2926 = vadd.f32 %v2886, %v2925
        %v2927 = vpop.f32.mrb[0].mxu0
        %v2928 = vpop.f32.mrb[0].mxu0
        %v2929 = vpop.f32.mrb[0].mxu0
        %2930 = vdwg.mxu0
        %v2931 = vadd.f32 %v2926, %v2647
        %v2932 = vmax.f32 %v2931, 0.0
        %2933 = vst.msk [vmem:[#allocation4 + $0x1] sm:$0xf] %vm1960, %v2932
        %2934 = vst [vmem:[#allocation4 + $0x5] sm:$0x1] 0.0
        %v2935 = vld [vmem:[#allocation4] ss:$2 sm:$0x3]
        %v2936 = vld [vmem:[%s1675] ss:$2 sm:$0x3]
        %s2937 = scalar_lea.vmem [#allocation4], 2
        %v2938 = vld [vmem:[%s2937] ss:$2 sm:$0x3]
        %v2939 = vpack.c.bf16 %v2935, %v2935
        %v2940 = vpack.c.bf16 %v2936, %v2936
        %v2941 = vpack.c.bf16 %v2938, %v2938
        %v2942 = vld [vmem:[#allocation6 + $0x700] sm:$0xf]
        %v2943 = vld [vmem:[#allocation6 + $0x704] sm:$0xf]
        %v2944 = vld [vmem:[#allocation6 + $0x708] sm:$0xf]
        %v2945 = vld [vmem:[#allocation6 + $0x70c] sm:$0xf]
        %v2946 = vld [vmem:[#allocation6 + $0x710] sm:$0xf]
        %v2947 = vld [vmem:[#allocation6 + $0x714] sm:$0xf]
        %v2948 = vld [vmem:[#allocation6 + $0x718] sm:$0xf]
        %v2949 = vld [vmem:[#allocation6 + $0x71c] sm:$0xf]
        %v2950 = vld [vmem:[#allocation6 + $0x720] sm:$0xf]
        %v2951 = vld [vmem:[#allocation6 + $0x724] sm:$0xf]
        %v2952 = vld [vmem:[#allocation6 + $0x728] sm:$0xf]
        %v2953 = vld [vmem:[#allocation6 + $0x72c] sm:$0xf]
        %v2954 = vld [vmem:[#allocation6 + $0x730] sm:$0xf]
        %v2955 = vld [vmem:[#allocation6 + $0x734] sm:$0xf]
        %v2956 = vld [vmem:[#allocation6 + $0x738] sm:$0xf]
        %v2957 = vld [vmem:[#allocation6 + $0x73c] sm:$0xf]
        %v2958 = vld [vmem:[#allocation6 + $0x740] sm:$0xf]
        %v2959 = vld [vmem:[#allocation6 + $0x744] sm:$0xf]
        %v2960 = vld [vmem:[#allocation6 + $0x748] sm:$0xf]
        %v2961 = vld [vmem:[#allocation6 + $0x74c] sm:$0xf]
        %v2962 = vld [vmem:[#allocation6 + $0x750] sm:$0xf]
        %v2963 = vld [vmem:[#allocation6 + $0x754] sm:$0xf]
        %v2964 = vld [vmem:[#allocation6 + $0x758] sm:$0xf]
        %v2965 = vld [vmem:[#allocation6 + $0x75c] sm:$0xf]
        %v2966 = vld [vmem:[#allocation6 + $0x760] sm:$0xf]
        %v2967 = vld [vmem:[#allocation6 + $0x764] sm:$0xf]
        %v2968 = vld [vmem:[#allocation6 + $0x768] sm:$0xf]
        %v2969 = vld [vmem:[#allocation6 + $0x76c] sm:$0xf]
        %v2970 = vld [vmem:[#allocation6 + $0x770] sm:$0xf]
        %v2971 = vld [vmem:[#allocation6 + $0x774] sm:$0xf]
        %v2972 = vld [vmem:[#allocation6 + $0x778] sm:$0xf]
        %v2973 = vld [vmem:[#allocation6 + $0x77c] sm:$0xf]
        %v2974 = vld [vmem:[#allocation6 + $0x780] sm:$0xf]
        %v2975 = vld [vmem:[#allocation6 + $0x784] sm:$0xf]
        %v2976 = vld [vmem:[#allocation6 + $0x788] sm:$0xf]
        %v2977 = vld [vmem:[#allocation6 + $0x78c] sm:$0xf]
        %v2978 = vld [vmem:[#allocation6 + $0x790] sm:$0xf]
        %v2979 = vld [vmem:[#allocation6 + $0x794] sm:$0xf]
        %v2980 = vld [vmem:[#allocation6 + $0x798] sm:$0xf]
        %v2981 = vld [vmem:[#allocation6 + $0x79c] sm:$0xf]
        %v2982 = vld [vmem:[#allocation6 + $0x7a0] sm:$0xf]
        %v2983 = vld [vmem:[#allocation6 + $0x7a4] sm:$0xf]
        %v2984 = vld [vmem:[#allocation6 + $0x7a8] sm:$0xf]
        %v2985 = vld [vmem:[#allocation6 + $0x7ac] sm:$0xf]
        %v2986 = vld [vmem:[#allocation6 + $0x7b0] sm:$0xf]
        %v2987 = vld [vmem:[#allocation6 + $0x7b4] sm:$0xf]
        %v2988 = vld [vmem:[#allocation6 + $0x7b8] sm:$0xf]
        %v2989 = vld [vmem:[#allocation6 + $0x7bc] sm:$0xf]
        %v2990 = vld [vmem:[#allocation8 + $0xa] sm:$0x1]
        %v2991 = vlaneseq
        %v2992 = vshrl.u32 %v2991, 7
        %v2993 = vsub.s32 0, %v2992
        %v2994 = vrot.slane %v2990, %v2993
        %v3043 = vunpack.c.l.b16 %v2942
        %v3044 = vunpack.c.l.b16 %v2943
        %v3045 = vunpack.c.l.b16 %v2944
        %v3046 = vunpack.c.l.b16 %v2945
        %v3047 = vunpack.c.l.b16 %v2946
        %v3048 = vunpack.c.l.b16 %v2947
        %v3049 = vunpack.c.l.b16 %v2948
        %v3050 = vunpack.c.l.b16 %v2949
        %v3051 = vunpack.c.l.b16 %v2950
        %v3052 = vunpack.c.l.b16 %v2951
        %v3053 = vunpack.c.l.b16 %v2952
        %v3054 = vunpack.c.l.b16 %v2953
        %v3055 = vunpack.c.l.b16 %v2954
        %v3056 = vunpack.c.l.b16 %v2955
        %v3057 = vunpack.c.l.b16 %v2956
        %v3058 = vunpack.c.l.b16 %v2957
        %v3059 = vunpack.c.l.b16 %v2958
        %v3060 = vunpack.c.l.b16 %v2959
        %v3061 = vunpack.c.l.b16 %v2960
        %v3062 = vunpack.c.l.b16 %v2961
        %v3063 = vunpack.c.l.b16 %v2962
        %v3064 = vunpack.c.l.b16 %v2963
        %v3065 = vunpack.c.l.b16 %v2964
        %v3066 = vunpack.c.l.b16 %v2965
        %v3067 = vunpack.c.l.b16 %v2966
        %v3068 = vunpack.c.l.b16 %v2967
        %v3069 = vunpack.c.l.b16 %v2968
        %v3070 = vunpack.c.l.b16 %v2969
        %v3071 = vunpack.c.l.b16 %v2970
        %v3072 = vunpack.c.l.b16 %v2971
        %v3073 = vunpack.c.l.b16 %v2972
        %v3074 = vunpack.c.l.b16 %v2973
        %v3075 = vunpack.c.l.b16 %v2974
        %v3076 = vunpack.c.l.b16 %v2975
        %v3077 = vunpack.c.l.b16 %v2976
        %v3078 = vunpack.c.l.b16 %v2977
        %v3079 = vunpack.c.l.b16 %v2978
        %v3080 = vunpack.c.l.b16 %v2979
        %v3081 = vunpack.c.l.b16 %v2980
        %v3082 = vunpack.c.l.b16 %v2981
        %v3083 = vunpack.c.l.b16 %v2982
        %v3084 = vunpack.c.l.b16 %v2983
        %v3085 = vunpack.c.l.b16 %v2984
        %v3086 = vunpack.c.l.b16 %v2985
        %v3087 = vunpack.c.l.b16 %v2986
        %v3088 = vunpack.c.l.b16 %v2987
        %v3089 = vunpack.c.l.b16 %v2988
        %v3090 = vunpack.c.l.b16 %v2989
        %v3091 = vpack.c.b16 %v3044, %v3043
        %v3092 = vpack.c.b16 %v3046, %v3045
        %v3093 = vpack.c.b16 %v3048, %v3047
        %v3094 = vpack.c.b16 %v3050, %v3049
        %v3095 = vpack.c.b16 %v3052, %v3051
        %v3096 = vpack.c.b16 %v3054, %v3053
        %v3097 = vpack.c.b16 %v3056, %v3055
        %v3098 = vpack.c.b16 %v3058, %v3057
        %v3099 = vpack.c.b16 %v3060, %v3059
        %v3100 = vpack.c.b16 %v3062, %v3061
        %v3101 = vpack.c.b16 %v3064, %v3063
        %v3102 = vpack.c.b16 %v3066, %v3065
        %v3103 = vpack.c.b16 %v3068, %v3067
        %v3104 = vpack.c.b16 %v3070, %v3069
        %v3105 = vpack.c.b16 %v3072, %v3071
        %v3106 = vpack.c.b16 %v3074, %v3073
        %v3107 = vpack.c.b16 %v3076, %v3075
        %v3108 = vpack.c.b16 %v3078, %v3077
        %v3109 = vpack.c.b16 %v3080, %v3079
        %v3110 = vpack.c.b16 %v3082, %v3081
        %v3111 = vpack.c.b16 %v3084, %v3083
        %v3112 = vpack.c.b16 %v3086, %v3085
        %v3113 = vpack.c.b16 %v3088, %v3087
        %v3114 = vpack.c.b16 %v3090, %v3089
        %3139 = vmatprep.subr.bf16.mxu0 0
        %3140 = vmatpush1.bf16.msra.mxu0 %v3091
        %3141 = vmatprep.subr.bf16.mxu0 0
        %3142 = vmatpush1.bf16.msra.mxu0 %v3092
        %3143 = vmatprep.subr.bf16.mxu0 0
        %3144 = vmatpush1.bf16.msra.mxu0 %v3093
        %3145 = vmatprep.subr.bf16.mxu0 0
        %3146 = vmatpush1.bf16.msra.mxu0 %v3094
        %3147 = vmatprep.subr.bf16.mxu0 0
        %3148 = vmatpush1.bf16.msra.mxu0 %v3095
        %3149 = vmatprep.subr.bf16.mxu0 0
        %3150 = vmatpush1.bf16.msra.mxu0 %v3096
        %3151 = vmatprep.subr.bf16.mxu0 0
        %3152 = vmatpush1.bf16.msra.mxu0 %v3097
        %3153 = vmatprep.subr.bf16.mxu0 0
        %3154 = vmatpush1.bf16.msra.mxu0 %v3098
        %3155 = vmatprep.subr.bf16.mxu0 0
        %3156 = vmatpush1.bf16.msra.mxu0 %v3099
        %3157 = vmatprep.subr.bf16.mxu0 0
        %3158 = vmatpush1.bf16.msra.mxu0 %v3100
        %3159 = vmatprep.subr.bf16.mxu0 0
        %3160 = vmatpush1.bf16.msra.mxu0 %v3101
        %3161 = vmatprep.subr.bf16.mxu0 0
        %3162 = vmatpush1.bf16.msra.mxu0 %v3102
        %3163 = vmatprep.subr.bf16.mxu0 0
        %3164 = vmatpush1.bf16.msra.mxu0 %v3103
        %3165 = vmatprep.subr.bf16.mxu0 0
        %3166 = vmatpush1.bf16.msra.mxu0 %v3104
        %3167 = vmatprep.subr.bf16.mxu0 0
        %3168 = vmatpush1.bf16.msra.mxu0 %v3105
        %3169 = vmatprep.subr.bf16.mxu0 0
        %3170 = vmatpush1.bf16.msra.mxu0 %v3106
        %3171 = vmatprep.mubr.bf16.mxu0 %v2940
        %3172 = vmatmul.mubr.bf16.gmra.mrb[0].mxu0 %v2939
        %v3173 = vpop.f32.mrb[0].mxu0
        %v3174 = vadd.f32 %v2994, %v3173
        %v3175 = vpop.f32.mrb[0].mxu0
        %v3176 = vpop.f32.mrb[0].mxu0
        %v3177 = vpop.f32.mrb[0].mxu0
        %3178 = vdwg.mxu0
        %3179 = vmatprep.subr.bf16.mxu0 0
        %3180 = vmatpush1.bf16.msra.mxu0 %v3107
        %3181 = vmatprep.subr.bf16.mxu0 0
        %3182 = vmatpush1.bf16.msra.mxu0 %v3108
        %3183 = vmatprep.subr.bf16.mxu0 0
        %3184 = vmatpush1.bf16.msra.mxu0 %v3109
        %3185 = vmatprep.subr.bf16.mxu0 0
        %3186 = vmatpush1.bf16.msra.mxu0 %v3110
        %3187 = vmatprep.subr.bf16.mxu0 0
        %3188 = vmatpush1.bf16.msra.mxu0 %v3111
        %3189 = vmatprep.subr.bf16.mxu0 0
        %3190 = vmatpush1.bf16.msra.mxu0 %v3112
        %3191 = vmatprep.subr.bf16.mxu0 0
        %3192 = vmatpush1.bf16.msra.mxu0 %v3113
        %3193 = vmatprep.subr.bf16.mxu0 0
        %3194 = vmatpush1.bf16.msra.mxu0 %v3114
        %3195 = vmatprep.subr.bf16.mxu0 0
        %3196 = vmatpush1.bf16.msra.mxu0 0
        %3197 = vmatprep.subr.bf16.mxu0 0
        %3198 = vmatpush1.bf16.msra.mxu0 0
        %3199 = vmatprep.subr.bf16.mxu0 0
        %3200 = vmatpush1.bf16.msra.mxu0 0
        %3201 = vmatprep.subr.bf16.mxu0 0
        %3202 = vmatpush1.bf16.msra.mxu0 0
        %3203 = vmatprep.subr.bf16.mxu0 0
        %3204 = vmatpush1.bf16.msra.mxu0 0
        %3205 = vmatprep.subr.bf16.mxu0 0
        %3206 = vmatpush1.bf16.msra.mxu0 0
        %3207 = vmatprep.subr.bf16.mxu0 0
        %3208 = vmatpush1.bf16.msra.mxu0 0
        %3209 = vmatprep.subr.bf16.mxu0 0
        %3210 = vmatpush1.bf16.msra.mxu0 0
        %3211 = vmatprep.mubr.bf16.mxu0 0
        %3212 = vmatmul.mubr.bf16.gmra.mrb[0].mxu0 %v2941
        %v3213 = vpop.f32.mrb[0].mxu0
        %v3214 = vadd.f32 %v3174, %v3213
        %v3215 = vpop.f32.mrb[0].mxu0
        %v3216 = vpop.f32.mrb[0].mxu0
        %v3217 = vpop.f32.mrb[0].mxu0
        %3218 = vdwg.mxu0
        %v3219 = vmax.f32 %v3214, 0.0
        %vm3220 = vcmask 517120
        %3221 = vst.msk [vmem:[#allocation5 + $0x1] sm:$0x3] %vm3220, %v3219
        %3222 = vst [vmem:[#allocation5 + $0x3] sm:$0x1] 0.0
        %v3223 = vld [vmem:[%s1675] ss:$2 sm:$0x3]
        %v3224 = vpack.c.bf16 %v3223, %v3223
        %v3225 = vld [vmem:[#allocation6 + $0x880] sm:$0xf]
        %v3226 = vld [vmem:[#allocation6 + $0x884] sm:$0xf]
        %v3227 = vld [vmem:[#allocation6 + $0x888] sm:$0xf]
        %v3228 = vld [vmem:[#allocation6 + $0x88c] sm:$0xf]
        %v3229 = vld [vmem:[#allocation6 + $0x890] sm:$0xf]
        %v3230 = vld [vmem:[#allocation6 + $0x894] sm:$0xf]
        %v3231 = vld [vmem:[#allocation6 + $0x898] sm:$0xf]
        %v3232 = vld [vmem:[#allocation6 + $0x89c] sm:$0xf]
        %v3233 = vld [vmem:[#allocation6 + $0x8a0] sm:$0xf]
        %v3234 = vld [vmem:[#allocation6 + $0x8a4] sm:$0xf]
        %v3235 = vld [vmem:[#allocation6 + $0x8a8] sm:$0xf]
        %v3236 = vld [vmem:[#allocation6 + $0x8ac] sm:$0xf]
        %v3237 = vld [vmem:[#allocation6 + $0x8b0] sm:$0xf]
        %v3238 = vld [vmem:[#allocation6 + $0x8b4] sm:$0xf]
        %v3239 = vld [vmem:[#allocation6 + $0x8b8] sm:$0xf]
        %v3240 = vld [vmem:[#allocation6 + $0x8bc] sm:$0xf]
        %v3241 = vld [vmem:[#allocation8 + $0xc] sm:$0x1]
        %v3242 = vlaneseq
        %v3243 = vshrl.u32 %v3242, 7
        %v3244 = vsub.s32 0, %v3243
        %v3245 = vrot.slane %v3241, %v3244
        %v3262 = vunpack.c.l.b16 %v3225
        %v3263 = vunpack.c.l.b16 %v3226
        %v3264 = vunpack.c.l.b16 %v3227
        %v3265 = vunpack.c.l.b16 %v3228
        %v3266 = vunpack.c.l.b16 %v3229
        %v3267 = vunpack.c.l.b16 %v3230
        %v3268 = vunpack.c.l.b16 %v3231
        %v3269 = vunpack.c.l.b16 %v3232
        %v3270 = vunpack.c.l.b16 %v3233
        %v3271 = vunpack.c.l.b16 %v3234
        %v3272 = vunpack.c.l.b16 %v3235
        %v3273 = vunpack.c.l.b16 %v3236
        %v3274 = vunpack.c.l.b16 %v3237
        %v3275 = vunpack.c.l.b16 %v3238
        %v3276 = vunpack.c.l.b16 %v3239
        %v3277 = vunpack.c.l.b16 %v3240
        %v3278 = vpack.c.b16 %v3263, %v3262
        %v3279 = vpack.c.b16 %v3265, %v3264
        %v3280 = vpack.c.b16 %v3267, %v3266
        %v3281 = vpack.c.b16 %v3269, %v3268
        %v3282 = vpack.c.b16 %v3271, %v3270
        %v3283 = vpack.c.b16 %v3273, %v3272
        %v3284 = vpack.c.b16 %v3275, %v3274
        %v3285 = vpack.c.b16 %v3277, %v3276
        %3294 = vmatprep.subr.bf16.mxu0 0
        %3295 = vmatpush1.bf16.msra.mxu0 %v3278
        %3296 = vmatprep.subr.bf16.mxu0 0
        %3297 = vmatpush1.bf16.msra.mxu0 %v3279
        %3298 = vmatprep.subr.bf16.mxu0 0
        %3299 = vmatpush1.bf16.msra.mxu0 %v3280
        %3300 = vmatprep.subr.bf16.mxu0 0
        %3301 = vmatpush1.bf16.msra.mxu0 %v3281
        %3302 = vmatprep.subr.bf16.mxu0 0
        %3303 = vmatpush1.bf16.msra.mxu0 %v3282
        %3304 = vmatprep.subr.bf16.mxu0 0
        %3305 = vmatpush1.bf16.msra.mxu0 %v3283
        %3306 = vmatprep.subr.bf16.mxu0 0
        %3307 = vmatpush1.bf16.msra.mxu0 %v3284
        %3308 = vmatprep.subr.bf16.mxu0 0
        %3309 = vmatpush1.bf16.msra.mxu0 %v3285
        %3310 = vmatprep.subr.bf16.mxu0 0
        %3311 = vmatpush1.bf16.msra.mxu0 0
        %3312 = vmatprep.subr.bf16.mxu0 0
        %3313 = vmatpush1.bf16.msra.mxu0 0
        %3314 = vmatprep.subr.bf16.mxu0 0
        %3315 = vmatpush1.bf16.msra.mxu0 0
        %3316 = vmatprep.subr.bf16.mxu0 0
        %3317 = vmatpush1.bf16.msra.mxu0 0
        %3318 = vmatprep.subr.bf16.mxu0 0
        %3319 = vmatpush1.bf16.msra.mxu0 0
        %3320 = vmatprep.subr.bf16.mxu0 0
        %3321 = vmatpush1.bf16.msra.mxu0 0
        %3322 = vmatprep.subr.bf16.mxu0 0
        %3323 = vmatpush1.bf16.msra.mxu0 0
        %3324 = vmatprep.subr.bf16.mxu0 0
        %3325 = vmatpush1.bf16.msra.mxu0 0
        %3326 = vmatprep.mubr.bf16.mxu0 0
        %3327 = vmatmul.mubr.bf16.gmra.mrb[0].mxu0 %v3224
        %v3328 = vpop.f32.mrb[0].mxu0
        %v3329 = vadd.f32 %v3245, %v3328
        %v3330 = vpop.f32.mrb[0].mxu0
        %v3331 = vpop.f32.mrb[0].mxu0
        %v3332 = vpop.f32.mrb[0].mxu0
        %3333 = vdwg.mxu0
        %v3334 = vld [vmem:[#allocation5] sm:$0x3]
        %v3335 = vld [vmem:[#allocation5 + $0x1] sm:$0x3]
        %v3336 = vld [vmem:[#allocation5 + $0x2] sm:$0x3]
        %v3337 = vpack.c.bf16 %v3334, %v3334
        %v3338 = vpack.c.bf16 %v3335, %v3335
        %v3339 = vpack.c.bf16 %v3336, %v3336
        %v3340 = vld [vmem:[#allocation6 + $0x7c0] sm:$0xf]
        %v3341 = vld [vmem:[#allocation6 + $0x7c4] sm:$0xf]
        %v3342 = vld [vmem:[#allocation6 + $0x7c8] sm:$0xf]
        %v3343 = vld [vmem:[#allocation6 + $0x7cc] sm:$0xf]
        %v3344 = vld [vmem:[#allocation6 + $0x7d0] sm:$0xf]
        %v3345 = vld [vmem:[#allocation6 + $0x7d4] sm:$0xf]
        %v3346 = vld [vmem:[#allocation6 + $0x7d8] sm:$0xf]
        %v3347 = vld [vmem:[#allocation6 + $0x7dc] sm:$0xf]
        %v3348 = vld [vmem:[#allocation6 + $0x7e0] sm:$0xf]
        %v3349 = vld [vmem:[#allocation6 + $0x7e4] sm:$0xf]
        %v3350 = vld [vmem:[#allocation6 + $0x7e8] sm:$0xf]
        %v3351 = vld [vmem:[#allocation6 + $0x7ec] sm:$0xf]
        %v3352 = vld [vmem:[#allocation6 + $0x7f0] sm:$0xf]
        %v3353 = vld [vmem:[#allocation6 + $0x7f4] sm:$0xf]
        %v3354 = vld [vmem:[#allocation6 + $0x7f8] sm:$0xf]
        %v3355 = vld [vmem:[#allocation6 + $0x7fc] sm:$0xf]
        %v3356 = vld [vmem:[#allocation6 + $0x800] sm:$0xf]
        %v3357 = vld [vmem:[#allocation6 + $0x804] sm:$0xf]
        %v3358 = vld [vmem:[#allocation6 + $0x808] sm:$0xf]
        %v3359 = vld [vmem:[#allocation6 + $0x80c] sm:$0xf]
        %v3360 = vld [vmem:[#allocation6 + $0x810] sm:$0xf]
        %v3361 = vld [vmem:[#allocation6 + $0x814] sm:$0xf]
        %v3362 = vld [vmem:[#allocation6 + $0x818] sm:$0xf]
        %v3363 = vld [vmem:[#allocation6 + $0x81c] sm:$0xf]
        %v3364 = vld [vmem:[#allocation6 + $0x820] sm:$0xf]
        %v3365 = vld [vmem:[#allocation6 + $0x824] sm:$0xf]
        %v3366 = vld [vmem:[#allocation6 + $0x828] sm:$0xf]
        %v3367 = vld [vmem:[#allocation6 + $0x82c] sm:$0xf]
        %v3368 = vld [vmem:[#allocation6 + $0x830] sm:$0xf]
        %v3369 = vld [vmem:[#allocation6 + $0x834] sm:$0xf]
        %v3370 = vld [vmem:[#allocation6 + $0x838] sm:$0xf]
        %v3371 = vld [vmem:[#allocation6 + $0x83c] sm:$0xf]
        %v3372 = vld [vmem:[#allocation6 + $0x840] sm:$0xf]
        %v3373 = vld [vmem:[#allocation6 + $0x844] sm:$0xf]
        %v3374 = vld [vmem:[#allocation6 + $0x848] sm:$0xf]
        %v3375 = vld [vmem:[#allocation6 + $0x84c] sm:$0xf]
        %v3376 = vld [vmem:[#allocation6 + $0x850] sm:$0xf]
        %v3377 = vld [vmem:[#allocation6 + $0x854] sm:$0xf]
        %v3378 = vld [vmem:[#allocation6 + $0x858] sm:$0xf]
        %v3379 = vld [vmem:[#allocation6 + $0x85c] sm:$0xf]
        %v3380 = vld [vmem:[#allocation6 + $0x860] sm:$0xf]
        %v3381 = vld [vmem:[#allocation6 + $0x864] sm:$0xf]
        %v3382 = vld [vmem:[#allocation6 + $0x868] sm:$0xf]
        %v3383 = vld [vmem:[#allocation6 + $0x86c] sm:$0xf]
        %v3384 = vld [vmem:[#allocation6 + $0x870] sm:$0xf]
        %v3385 = vld [vmem:[#allocation6 + $0x874] sm:$0xf]
        %v3386 = vld [vmem:[#allocation6 + $0x878] sm:$0xf]
        %v3387 = vld [vmem:[#allocation6 + $0x87c] sm:$0xf]
        %v3388 = vld [vmem:[#allocation8 + $0xb] sm:$0x1]
        %v3389 = vlaneseq
        %v3390 = vshrl.u32 %v3389, 7
        %v3391 = vsub.s32 0, %v3390
        %v3392 = vrot.slane %v3388, %v3391
        %v3441 = vunpack.c.l.b16 %v3340
        %v3442 = vunpack.c.l.b16 %v3341
        %v3443 = vunpack.c.l.b16 %v3342
        %v3444 = vunpack.c.l.b16 %v3343
        %v3445 = vunpack.c.l.b16 %v3344
        %v3446 = vunpack.c.l.b16 %v3345
        %v3447 = vunpack.c.l.b16 %v3346
        %v3448 = vunpack.c.l.b16 %v3347
        %v3449 = vunpack.c.l.b16 %v3348
        %v3450 = vunpack.c.l.b16 %v3349
        %v3451 = vunpack.c.l.b16 %v3350
        %v3452 = vunpack.c.l.b16 %v3351
        %v3453 = vunpack.c.l.b16 %v3352
        %v3454 = vunpack.c.l.b16 %v3353
        %v3455 = vunpack.c.l.b16 %v3354
        %v3456 = vunpack.c.l.b16 %v3355
        %v3457 = vunpack.c.l.b16 %v3356
        %v3458 = vunpack.c.l.b16 %v3357
        %v3459 = vunpack.c.l.b16 %v3358
        %v3460 = vunpack.c.l.b16 %v3359
        %v3461 = vunpack.c.l.b16 %v3360
        %v3462 = vunpack.c.l.b16 %v3361
        %v3463 = vunpack.c.l.b16 %v3362
        %v3464 = vunpack.c.l.b16 %v3363
        %v3465 = vunpack.c.l.b16 %v3364
        %v3466 = vunpack.c.l.b16 %v3365
        %v3467 = vunpack.c.l.b16 %v3366
        %v3468 = vunpack.c.l.b16 %v3367
        %v3469 = vunpack.c.l.b16 %v3368
        %v3470 = vunpack.c.l.b16 %v3369
        %v3471 = vunpack.c.l.b16 %v3370
        %v3472 = vunpack.c.l.b16 %v3371
        %v3473 = vunpack.c.l.b16 %v3372
        %v3474 = vunpack.c.l.b16 %v3373
        %v3475 = vunpack.c.l.b16 %v3374
        %v3476 = vunpack.c.l.b16 %v3375
        %v3477 = vunpack.c.l.b16 %v3376
        %v3478 = vunpack.c.l.b16 %v3377
        %v3479 = vunpack.c.l.b16 %v3378
        %v3480 = vunpack.c.l.b16 %v3379
        %v3481 = vunpack.c.l.b16 %v3380
        %v3482 = vunpack.c.l.b16 %v3381
        %v3483 = vunpack.c.l.b16 %v3382
        %v3484 = vunpack.c.l.b16 %v3383
        %v3485 = vunpack.c.l.b16 %v3384
        %v3486 = vunpack.c.l.b16 %v3385
        %v3487 = vunpack.c.l.b16 %v3386
        %v3488 = vunpack.c.l.b16 %v3387
        %v3489 = vpack.c.b16 %v3442, %v3441
        %v3490 = vpack.c.b16 %v3444, %v3443
        %v3491 = vpack.c.b16 %v3446, %v3445
        %v3492 = vpack.c.b16 %v3448, %v3447
        %v3493 = vpack.c.b16 %v3450, %v3449
        %v3494 = vpack.c.b16 %v3452, %v3451
        %v3495 = vpack.c.b16 %v3454, %v3453
        %v3496 = vpack.c.b16 %v3456, %v3455
        %v3497 = vpack.c.b16 %v3458, %v3457
        %v3498 = vpack.c.b16 %v3460, %v3459
        %v3499 = vpack.c.b16 %v3462, %v3461
        %v3500 = vpack.c.b16 %v3464, %v3463
        %v3501 = vpack.c.b16 %v3466, %v3465
        %v3502 = vpack.c.b16 %v3468, %v3467
        %v3503 = vpack.c.b16 %v3470, %v3469
        %v3504 = vpack.c.b16 %v3472, %v3471
        %v3505 = vpack.c.b16 %v3474, %v3473
        %v3506 = vpack.c.b16 %v3476, %v3475
        %v3507 = vpack.c.b16 %v3478, %v3477
        %v3508 = vpack.c.b16 %v3480, %v3479
        %v3509 = vpack.c.b16 %v3482, %v3481
        %v3510 = vpack.c.b16 %v3484, %v3483
        %v3511 = vpack.c.b16 %v3486, %v3485
        %v3512 = vpack.c.b16 %v3488, %v3487
        %3537 = vmatprep.subr.bf16.mxu0 0
        %3538 = vmatpush1.bf16.msra.mxu0 %v3489
        %3539 = vmatprep.subr.bf16.mxu0 0
        %3540 = vmatpush1.bf16.msra.mxu0 %v3490
        %3541 = vmatprep.subr.bf16.mxu0 0
        %3542 = vmatpush1.bf16.msra.mxu0 %v3491
        %3543 = vmatprep.subr.bf16.mxu0 0
        %3544 = vmatpush1.bf16.msra.mxu0 %v3492
        %3545 = vmatprep.subr.bf16.mxu0 0
        %3546 = vmatpush1.bf16.msra.mxu0 %v3493
        %3547 = vmatprep.subr.bf16.mxu0 0
        %3548 = vmatpush1.bf16.msra.mxu0 %v3494
        %3549 = vmatprep.subr.bf16.mxu0 0
        %3550 = vmatpush1.bf16.msra.mxu0 %v3495
        %3551 = vmatprep.subr.bf16.mxu0 0
        %3552 = vmatpush1.bf16.msra.mxu0 %v3496
        %3553 = vmatprep.subr.bf16.mxu0 0
        %3554 = vmatpush1.bf16.msra.mxu0 %v3497
        %3555 = vmatprep.subr.bf16.mxu0 0
        %3556 = vmatpush1.bf16.msra.mxu0 %v3498
        %3557 = vmatprep.subr.bf16.mxu0 0
        %3558 = vmatpush1.bf16.msra.mxu0 %v3499
        %3559 = vmatprep.subr.bf16.mxu0 0
        %3560 = vmatpush1.bf16.msra.mxu0 %v3500
        %3561 = vmatprep.subr.bf16.mxu0 0
        %3562 = vmatpush1.bf16.msra.mxu0 %v3501
        %3563 = vmatprep.subr.bf16.mxu0 0
        %3564 = vmatpush1.bf16.msra.mxu0 %v3502
        %3565 = vmatprep.subr.bf16.mxu0 0
        %3566 = vmatpush1.bf16.msra.mxu0 %v3503
        %3567 = vmatprep.subr.bf16.mxu0 0
        %3568 = vmatpush1.bf16.msra.mxu0 %v3504
        %3569 = vmatprep.mubr.bf16.mxu0 %v3338
        %3570 = vmatmul.mubr.bf16.gmra.mrb[0].mxu0 %v3337
        %v3571 = vpop.f32.mrb[0].mxu0
        %v3572 = vadd.f32 %v3392, %v3571
        %v3573 = vpop.f32.mrb[0].mxu0
        %v3574 = vpop.f32.mrb[0].mxu0
        %v3575 = vpop.f32.mrb[0].mxu0
        %3576 = vdwg.mxu0
        %3577 = vmatprep.subr.bf16.mxu0 0
        %3578 = vmatpush1.bf16.msra.mxu0 %v3505
        %3579 = vmatprep.subr.bf16.mxu0 0
        %3580 = vmatpush1.bf16.msra.mxu0 %v3506
        %3581 = vmatprep.subr.bf16.mxu0 0
        %3582 = vmatpush1.bf16.msra.mxu0 %v3507
        %3583 = vmatprep.subr.bf16.mxu0 0
        %3584 = vmatpush1.bf16.msra.mxu0 %v3508
        %3585 = vmatprep.subr.bf16.mxu0 0
        %3586 = vmatpush1.bf16.msra.mxu0 %v3509
        %3587 = vmatprep.subr.bf16.mxu0 0
        %3588 = vmatpush1.bf16.msra.mxu0 %v3510
        %3589 = vmatprep.subr.bf16.mxu0 0
        %3590 = vmatpush1.bf16.msra.mxu0 %v3511
        %3591 = vmatprep.subr.bf16.mxu0 0
        %3592 = vmatpush1.bf16.msra.mxu0 %v3512
        %3593 = vmatprep.subr.bf16.mxu0 0
        %3594 = vmatpush1.bf16.msra.mxu0 0
        %3595 = vmatprep.subr.bf16.mxu0 0
        %3596 = vmatpush1.bf16.msra.mxu0 0
        %3597 = vmatprep.subr.bf16.mxu0 0
        %3598 = vmatpush1.bf16.msra.mxu0 0
        %3599 = vmatprep.subr.bf16.mxu0 0
        %3600 = vmatpush1.bf16.msra.mxu0 0
        %3601 = vmatprep.subr.bf16.mxu0 0
        %3602 = vmatpush1.bf16.msra.mxu0 0
        %3603 = vmatprep.subr.bf16.mxu0 0
        %3604 = vmatpush1.bf16.msra.mxu0 0
        %3605 = vmatprep.subr.bf16.mxu0 0
        %3606 = vmatpush1.bf16.msra.mxu0 0
        %3607 = vmatprep.subr.bf16.mxu0 0
        %3608 = vmatpush1.bf16.msra.mxu0 0
        %3609 = vmatprep.mubr.bf16.mxu0 0
        %3610 = vmatmul.mubr.bf16.gmra.mrb[0].mxu0 %v3339
        %v3611 = vpop.f32.mrb[0].mxu0
        %v3612 = vadd.f32 %v3572, %v3611
        %v3613 = vpop.f32.mrb[0].mxu0
        %v3614 = vpop.f32.mrb[0].mxu0
        %v3615 = vpop.f32.mrb[0].mxu0
        %3616 = vdwg.mxu0
        %v3617 = vadd.f32 %v3612, %v3329
        %v3618 = vmax.f32 %v3617, 0.0
        %3619 = vst.msk [vmem:[#allocation4 + $0x1] sm:$0x3] %vm3220, %v3618
        %3620 = vst [vmem:[#allocation4 + $0x3] sm:$0x1] 0.0
        %v3621 = vld [vmem:[#allocation4] sm:$0x3]
        %v3622 = vld [vmem:[#allocation4 + $0x1] sm:$0x3]
        %v3623 = vld [vmem:[#allocation4 + $0x2] sm:$0x3]
        %v3624 = vpack.c.bf16 %v3621, %v3621
        %v3625 = vpack.c.bf16 %v3622, %v3622
        %v3626 = vpack.c.bf16 %v3623, %v3623
        %v3627 = vld [vmem:[#allocation6 + $0x8c0] sm:$0xf]
        %v3628 = vld [vmem:[#allocation6 + $0x8c4] sm:$0xf]
        %v3629 = vld [vmem:[#allocation6 + $0x8c8] sm:$0xf]
        %v3630 = vld [vmem:[#allocation6 + $0x8cc] sm:$0xf]
        %v3631 = vld [vmem:[#allocation6 + $0x8d0] sm:$0xf]
        %v3632 = vld [vmem:[#allocation6 + $0x8d4] sm:$0xf]
        %v3633 = vld [vmem:[#allocation6 + $0x8d8] sm:$0xf]
        %v3634 = vld [vmem:[#allocation6 + $0x8dc] sm:$0xf]
        %v3635 = vld [vmem:[#allocation6 + $0x8e0] sm:$0xf]
        %v3636 = vld [vmem:[#allocation6 + $0x8e4] sm:$0xf]
        %v3637 = vld [vmem:[#allocation6 + $0x8e8] sm:$0xf]
        %v3638 = vld [vmem:[#allocation6 + $0x8ec] sm:$0xf]
        %v3639 = vld [vmem:[#allocation6 + $0x8f0] sm:$0xf]
        %v3640 = vld [vmem:[#allocation6 + $0x8f4] sm:$0xf]
        %v3641 = vld [vmem:[#allocation6 + $0x8f8] sm:$0xf]
        %v3642 = vld [vmem:[#allocation6 + $0x8fc] sm:$0xf]
        %v3643 = vld [vmem:[#allocation6 + $0x900] sm:$0xf]
        %v3644 = vld [vmem:[#allocation6 + $0x904] sm:$0xf]
        %v3645 = vld [vmem:[#allocation6 + $0x908] sm:$0xf]
        %v3646 = vld [vmem:[#allocation6 + $0x90c] sm:$0xf]
        %v3647 = vld [vmem:[#allocation6 + $0x910] sm:$0xf]
        %v3648 = vld [vmem:[#allocation6 + $0x914] sm:$0xf]
        %v3649 = vld [vmem:[#allocation6 + $0x918] sm:$0xf]
        %v3650 = vld [vmem:[#allocation6 + $0x91c] sm:$0xf]
        %v3651 = vld [vmem:[#allocation6 + $0x920] sm:$0xf]
        %v3652 = vld [vmem:[#allocation6 + $0x924] sm:$0xf]
        %v3653 = vld [vmem:[#allocation6 + $0x928] sm:$0xf]
        %v3654 = vld [vmem:[#allocation6 + $0x92c] sm:$0xf]
        %v3655 = vld [vmem:[#allocation6 + $0x930] sm:$0xf]
        %v3656 = vld [vmem:[#allocation6 + $0x934] sm:$0xf]
        %v3657 = vld [vmem:[#allocation6 + $0x938] sm:$0xf]
        %v3658 = vld [vmem:[#allocation6 + $0x93c] sm:$0xf]
        %v3659 = vld [vmem:[#allocation6 + $0x940] sm:$0xf]
        %v3660 = vld [vmem:[#allocation6 + $0x944] sm:$0xf]
        %v3661 = vld [vmem:[#allocation6 + $0x948] sm:$0xf]
        %v3662 = vld [vmem:[#allocation6 + $0x94c] sm:$0xf]
        %v3663 = vld [vmem:[#allocation6 + $0x950] sm:$0xf]
        %v3664 = vld [vmem:[#allocation6 + $0x954] sm:$0xf]
        %v3665 = vld [vmem:[#allocation6 + $0x958] sm:$0xf]
        %v3666 = vld [vmem:[#allocation6 + $0x95c] sm:$0xf]
        %v3667 = vld [vmem:[#allocation6 + $0x960] sm:$0xf]
        %v3668 = vld [vmem:[#allocation6 + $0x964] sm:$0xf]
        %v3669 = vld [vmem:[#allocation6 + $0x968] sm:$0xf]
        %v3670 = vld [vmem:[#allocation6 + $0x96c] sm:$0xf]
        %v3671 = vld [vmem:[#allocation6 + $0x970] sm:$0xf]
        %v3672 = vld [vmem:[#allocation6 + $0x974] sm:$0xf]
        %v3673 = vld [vmem:[#allocation6 + $0x978] sm:$0xf]
        %v3674 = vld [vmem:[#allocation6 + $0x97c] sm:$0xf]
        %v3675 = vld [vmem:[#allocation8 + $0xd] sm:$0x1]
        %v3676 = vlaneseq
        %v3677 = vshrl.u32 %v3676, 7
        %v3678 = vsub.s32 0, %v3677
        %v3679 = vrot.slane %v3675, %v3678
        %v3728 = vunpack.c.l.b16 %v3627
        %v3729 = vunpack.c.l.b16 %v3628
        %v3730 = vunpack.c.l.b16 %v3629
        %v3731 = vunpack.c.l.b16 %v3630
        %v3732 = vunpack.c.l.b16 %v3631
        %v3733 = vunpack.c.l.b16 %v3632
        %v3734 = vunpack.c.l.b16 %v3633
        %v3735 = vunpack.c.l.b16 %v3634
        %v3736 = vunpack.c.l.b16 %v3635
        %v3737 = vunpack.c.l.b16 %v3636
        %v3738 = vunpack.c.l.b16 %v3637
        %v3739 = vunpack.c.l.b16 %v3638
        %v3740 = vunpack.c.l.b16 %v3639
        %v3741 = vunpack.c.l.b16 %v3640
        %v3742 = vunpack.c.l.b16 %v3641
        %v3743 = vunpack.c.l.b16 %v3642
        %v3744 = vunpack.c.l.b16 %v3643
        %v3745 = vunpack.c.l.b16 %v3644
        %v3746 = vunpack.c.l.b16 %v3645
        %v3747 = vunpack.c.l.b16 %v3646
        %v3748 = vunpack.c.l.b16 %v3647
        %v3749 = vunpack.c.l.b16 %v3648
        %v3750 = vunpack.c.l.b16 %v3649
        %v3751 = vunpack.c.l.b16 %v3650
        %v3752 = vunpack.c.l.b16 %v3651
        %v3753 = vunpack.c.l.b16 %v3652
        %v3754 = vunpack.c.l.b16 %v3653
        %v3755 = vunpack.c.l.b16 %v3654
        %v3756 = vunpack.c.l.b16 %v3655
        %v3757 = vunpack.c.l.b16 %v3656
        %v3758 = vunpack.c.l.b16 %v3657
        %v3759 = vunpack.c.l.b16 %v3658
        %v3760 = vunpack.c.l.b16 %v3659
        %v3761 = vunpack.c.l.b16 %v3660
        %v3762 = vunpack.c.l.b16 %v3661
        %v3763 = vunpack.c.l.b16 %v3662
        %v3764 = vunpack.c.l.b16 %v3663
        %v3765 = vunpack.c.l.b16 %v3664
        %v3766 = vunpack.c.l.b16 %v3665
        %v3767 = vunpack.c.l.b16 %v3666
        %v3768 = vunpack.c.l.b16 %v3667
        %v3769 = vunpack.c.l.b16 %v3668
        %v3770 = vunpack.c.l.b16 %v3669
        %v3771 = vunpack.c.l.b16 %v3670
        %v3772 = vunpack.c.l.b16 %v3671
        %v3773 = vunpack.c.l.b16 %v3672
        %v3774 = vunpack.c.l.b16 %v3673
        %v3775 = vunpack.c.l.b16 %v3674
        %v3776 = vpack.c.b16 %v3729, %v3728
        %v3777 = vpack.c.b16 %v3731, %v3730
        %v3778 = vpack.c.b16 %v3733, %v3732
        %v3779 = vpack.c.b16 %v3735, %v3734
        %v3780 = vpack.c.b16 %v3737, %v3736
        %v3781 = vpack.c.b16 %v3739, %v3738
        %v3782 = vpack.c.b16 %v3741, %v3740
        %v3783 = vpack.c.b16 %v3743, %v3742
        %v3784 = vpack.c.b16 %v3745, %v3744
        %v3785 = vpack.c.b16 %v3747, %v3746
        %v3786 = vpack.c.b16 %v3749, %v3748
        %v3787 = vpack.c.b16 %v3751, %v3750
        %v3788 = vpack.c.b16 %v3753, %v3752
        %v3789 = vpack.c.b16 %v3755, %v3754
        %v3790 = vpack.c.b16 %v3757, %v3756
        %v3791 = vpack.c.b16 %v3759, %v3758
        %v3792 = vpack.c.b16 %v3761, %v3760
        %v3793 = vpack.c.b16 %v3763, %v3762
        %v3794 = vpack.c.b16 %v3765, %v3764
        %v3795 = vpack.c.b16 %v3767, %v3766
        %v3796 = vpack.c.b16 %v3769, %v3768
        %v3797 = vpack.c.b16 %v3771, %v3770
        %v3798 = vpack.c.b16 %v3773, %v3772
        %v3799 = vpack.c.b16 %v3775, %v3774
        %3824 = vmatprep.subr.bf16.mxu0 0
        %3825 = vmatpush1.bf16.msra.mxu0 %v3776
        %3826 = vmatprep.subr.bf16.mxu0 0
        %3827 = vmatpush1.bf16.msra.mxu0 %v3777
        %3828 = vmatprep.subr.bf16.mxu0 0
        %3829 = vmatpush1.bf16.msra.mxu0 %v3778
        %3830 = vmatprep.subr.bf16.mxu0 0
        %3831 = vmatpush1.bf16.msra.mxu0 %v3779
        %3832 = vmatprep.subr.bf16.mxu0 0
        %3833 = vmatpush1.bf16.msra.mxu0 %v3780
        %3834 = vmatprep.subr.bf16.mxu0 0
        %3835 = vmatpush1.bf16.msra.mxu0 %v3781
        %3836 = vmatprep.subr.bf16.mxu0 0
        %3837 = vmatpush1.bf16.msra.mxu0 %v3782
        %3838 = vmatprep.subr.bf16.mxu0 0
        %3839 = vmatpush1.bf16.msra.mxu0 %v3783
        %3840 = vmatprep.subr.bf16.mxu0 0
        %3841 = vmatpush1.bf16.msra.mxu0 %v3784
        %3842 = vmatprep.subr.bf16.mxu0 0
        %3843 = vmatpush1.bf16.msra.mxu0 %v3785
        %3844 = vmatprep.subr.bf16.mxu0 0
        %3845 = vmatpush1.bf16.msra.mxu0 %v3786
        %3846 = vmatprep.subr.bf16.mxu0 0
        %3847 = vmatpush1.bf16.msra.mxu0 %v3787
        %3848 = vmatprep.subr.bf16.mxu0 0
        %3849 = vmatpush1.bf16.msra.mxu0 %v3788
        %3850 = vmatprep.subr.bf16.mxu0 0
        %3851 = vmatpush1.bf16.msra.mxu0 %v3789
        %3852 = vmatprep.subr.bf16.mxu0 0
        %3853 = vmatpush1.bf16.msra.mxu0 %v3790
        %3854 = vmatprep.subr.bf16.mxu0 0
        %3855 = vmatpush1.bf16.msra.mxu0 %v3791
        %3856 = vmatprep.mubr.bf16.mxu0 %v3625
        %3857 = vmatmul.mubr.bf16.gmra.mrb[0].mxu0 %v3624
        %v3858 = vpop.f32.mrb[0].mxu0
        %v3859 = vadd.f32 %v3679, %v3858
        %v3860 = vpop.f32.mrb[0].mxu0
        %v3861 = vpop.f32.mrb[0].mxu0
        %v3862 = vpop.f32.mrb[0].mxu0
        %3863 = vdwg.mxu0
        %3864 = vmatprep.subr.bf16.mxu0 0
        %3865 = vmatpush1.bf16.msra.mxu0 %v3792
        %3866 = vmatprep.subr.bf16.mxu0 0
        %3867 = vmatpush1.bf16.msra.mxu0 %v3793
        %3868 = vmatprep.subr.bf16.mxu0 0
        %3869 = vmatpush1.bf16.msra.mxu0 %v3794
        %3870 = vmatprep.subr.bf16.mxu0 0
        %3871 = vmatpush1.bf16.msra.mxu0 %v3795
        %3872 = vmatprep.subr.bf16.mxu0 0
        %3873 = vmatpush1.bf16.msra.mxu0 %v3796
        %3874 = vmatprep.subr.bf16.mxu0 0
        %3875 = vmatpush1.bf16.msra.mxu0 %v3797
        %3876 = vmatprep.subr.bf16.mxu0 0
        %3877 = vmatpush1.bf16.msra.mxu0 %v3798
        %3878 = vmatprep.subr.bf16.mxu0 0
        %3879 = vmatpush1.bf16.msra.mxu0 %v3799
        %3880 = vmatprep.subr.bf16.mxu0 0
        %3881 = vmatpush1.bf16.msra.mxu0 0
        %3882 = vmatprep.subr.bf16.mxu0 0
        %3883 = vmatpush1.bf16.msra.mxu0 0
        %3884 = vmatprep.subr.bf16.mxu0 0
        %3885 = vmatpush1.bf16.msra.mxu0 0
        %3886 = vmatprep.subr.bf16.mxu0 0
        %3887 = vmatpush1.bf16.msra.mxu0 0
        %3888 = vmatprep.subr.bf16.mxu0 0
        %3889 = vmatpush1.bf16.msra.mxu0 0
        %3890 = vmatprep.subr.bf16.mxu0 0
        %3891 = vmatpush1.bf16.msra.mxu0 0
        %3892 = vmatprep.subr.bf16.mxu0 0
        %3893 = vmatpush1.bf16.msra.mxu0 0
        %3894 = vmatprep.subr.bf16.mxu0 0
        %3895 = vmatpush1.bf16.msra.mxu0 0
        %3896 = vmatprep.mubr.bf16.mxu0 0
        %3897 = vmatmul.mubr.bf16.gmra.mrb[0].mxu0 %v3626
        %v3898 = vpop.f32.mrb[0].mxu0
        %v3899 = vadd.f32 %v3859, %v3898
        %v3900 = vpop.f32.mrb[0].mxu0
        %v3901 = vpop.f32.mrb[0].mxu0
        %v3902 = vpop.f32.mrb[0].mxu0
        %3903 = vdwg.mxu0
        %v3904 = vmax.f32 %v3899, 0.0
        %3905 = vst.msk [vmem:[#allocation5 + $0x1] sm:$0x3] %vm3220, %v3904
        %3906 = vst [vmem:[#allocation5 + $0x3] sm:$0x1] 0.0
        %v3907 = vld [vmem:[#allocation4 + $0x1] sm:$0x3]
        %v3908 = vld [vmem:[#allocation5] sm:$0x3]
        %v3909 = vld [vmem:[#allocation5 + $0x1] sm:$0x3]
        %v3910 = vld [vmem:[#allocation5 + $0x2] sm:$0x3]
        %v3911 = vpack.c.bf16 %v3908, %v3908
        %v3912 = vpack.c.bf16 %v3909, %v3909
        %v3913 = vpack.c.bf16 %v3910, %v3910
        %v3914 = vld [vmem:[#allocation6 + $0x980] sm:$0xf]
        %v3915 = vld [vmem:[#allocation6 + $0x984] sm:$0xf]
        %v3916 = vld [vmem:[#allocation6 + $0x988] sm:$0xf]
        %v3917 = vld [vmem:[#allocation6 + $0x98c] sm:$0xf]
        %v3918 = vld [vmem:[#allocation6 + $0x990] sm:$0xf]
        %v3919 = vld [vmem:[#allocation6 + $0x994] sm:$0xf]
        %v3920 = vld [vmem:[#allocation6 + $0x998] sm:$0xf]
        %v3921 = vld [vmem:[#allocation6 + $0x99c] sm:$0xf]
        %v3922 = vld [vmem:[#allocation6 + $0x9a0] sm:$0xf]
        %v3923 = vld [vmem:[#allocation6 + $0x9a4] sm:$0xf]
        %v3924 = vld [vmem:[#allocation6 + $0x9a8] sm:$0xf]
        %v3925 = vld [vmem:[#allocation6 + $0x9ac] sm:$0xf]
        %v3926 = vld [vmem:[#allocation6 + $0x9b0] sm:$0xf]
        %v3927 = vld [vmem:[#allocation6 + $0x9b4] sm:$0xf]
        %v3928 = vld [vmem:[#allocation6 + $0x9b8] sm:$0xf]
        %v3929 = vld [vmem:[#allocation6 + $0x9bc] sm:$0xf]
        %v3930 = vld [vmem:[#allocation6 + $0x9c0] sm:$0xf]
        %v3931 = vld [vmem:[#allocation6 + $0x9c4] sm:$0xf]
        %v3932 = vld [vmem:[#allocation6 + $0x9c8] sm:$0xf]
        %v3933 = vld [vmem:[#allocation6 + $0x9cc] sm:$0xf]
        %v3934 = vld [vmem:[#allocation6 + $0x9d0] sm:$0xf]
        %v3935 = vld [vmem:[#allocation6 + $0x9d4] sm:$0xf]
        %v3936 = vld [vmem:[#allocation6 + $0x9d8] sm:$0xf]
        %v3937 = vld [vmem:[#allocation6 + $0x9dc] sm:$0xf]
        %v3938 = vld [vmem:[#allocation6 + $0x9e0] sm:$0xf]
        %v3939 = vld [vmem:[#allocation6 + $0x9e4] sm:$0xf]
        %v3940 = vld [vmem:[#allocation6 + $0x9e8] sm:$0xf]
        %v3941 = vld [vmem:[#allocation6 + $0x9ec] sm:$0xf]
        %v3942 = vld [vmem:[#allocation6 + $0x9f0] sm:$0xf]
        %v3943 = vld [vmem:[#allocation6 + $0x9f4] sm:$0xf]
        %v3944 = vld [vmem:[#allocation6 + $0x9f8] sm:$0xf]
        %v3945 = vld [vmem:[#allocation6 + $0x9fc] sm:$0xf]
        %v3946 = vld [vmem:[#allocation6 + $0xa00] sm:$0xf]
        %v3947 = vld [vmem:[#allocation6 + $0xa04] sm:$0xf]
        %v3948 = vld [vmem:[#allocation6 + $0xa08] sm:$0xf]
        %v3949 = vld [vmem:[#allocation6 + $0xa0c] sm:$0xf]
        %v3950 = vld [vmem:[#allocation6 + $0xa10] sm:$0xf]
        %v3951 = vld [vmem:[#allocation6 + $0xa14] sm:$0xf]
        %v3952 = vld [vmem:[#allocation6 + $0xa18] sm:$0xf]
        %v3953 = vld [vmem:[#allocation6 + $0xa1c] sm:$0xf]
        %v3954 = vld [vmem:[#allocation6 + $0xa20] sm:$0xf]
        %v3955 = vld [vmem:[#allocation6 + $0xa24] sm:$0xf]
        %v3956 = vld [vmem:[#allocation6 + $0xa28] sm:$0xf]
        %v3957 = vld [vmem:[#allocation6 + $0xa2c] sm:$0xf]
        %v3958 = vld [vmem:[#allocation6 + $0xa30] sm:$0xf]
        %v3959 = vld [vmem:[#allocation6 + $0xa34] sm:$0xf]
        %v3960 = vld [vmem:[#allocation6 + $0xa38] sm:$0xf]
        %v3961 = vld [vmem:[#allocation6 + $0xa3c] sm:$0xf]
        %v3962 = vld [vmem:[#allocation8 + $0xe] sm:$0x1]
        %v3963 = vlaneseq
        %v3964 = vshrl.u32 %v3963, 7
        %v3965 = vsub.s32 0, %v3964
        %v3966 = vrot.slane %v3962, %v3965
        %v4015 = vunpack.c.l.b16 %v3914
        %v4016 = vunpack.c.l.b16 %v3915
        %v4017 = vunpack.c.l.b16 %v3916
        %v4018 = vunpack.c.l.b16 %v3917
        %v4019 = vunpack.c.l.b16 %v3918
        %v4020 = vunpack.c.l.b16 %v3919
        %v4021 = vunpack.c.l.b16 %v3920
        %v4022 = vunpack.c.l.b16 %v3921
        %v4023 = vunpack.c.l.b16 %v3922
        %v4024 = vunpack.c.l.b16 %v3923
        %v4025 = vunpack.c.l.b16 %v3924
        %v4026 = vunpack.c.l.b16 %v3925
        %v4027 = vunpack.c.l.b16 %v3926
        %v4028 = vunpack.c.l.b16 %v3927
        %v4029 = vunpack.c.l.b16 %v3928
        %v4030 = vunpack.c.l.b16 %v3929
        %v4031 = vunpack.c.l.b16 %v3930
        %v4032 = vunpack.c.l.b16 %v3931
        %v4033 = vunpack.c.l.b16 %v3932
        %v4034 = vunpack.c.l.b16 %v3933
        %v4035 = vunpack.c.l.b16 %v3934
        %v4036 = vunpack.c.l.b16 %v3935
        %v4037 = vunpack.c.l.b16 %v3936
        %v4038 = vunpack.c.l.b16 %v3937
        %v4039 = vunpack.c.l.b16 %v3938
        %v4040 = vunpack.c.l.b16 %v3939
        %v4041 = vunpack.c.l.b16 %v3940
        %v4042 = vunpack.c.l.b16 %v3941
        %v4043 = vunpack.c.l.b16 %v3942
        %v4044 = vunpack.c.l.b16 %v3943
        %v4045 = vunpack.c.l.b16 %v3944
        %v4046 = vunpack.c.l.b16 %v3945
        %v4047 = vunpack.c.l.b16 %v3946
        %v4048 = vunpack.c.l.b16 %v3947
        %v4049 = vunpack.c.l.b16 %v3948
        %v4050 = vunpack.c.l.b16 %v3949
        %v4051 = vunpack.c.l.b16 %v3950
        %v4052 = vunpack.c.l.b16 %v3951
        %v4053 = vunpack.c.l.b16 %v3952
        %v4054 = vunpack.c.l.b16 %v3953
        %v4055 = vunpack.c.l.b16 %v3954
        %v4056 = vunpack.c.l.b16 %v3955
        %v4057 = vunpack.c.l.b16 %v3956
        %v4058 = vunpack.c.l.b16 %v3957
        %v4059 = vunpack.c.l.b16 %v3958
        %v4060 = vunpack.c.l.b16 %v3959
        %v4061 = vunpack.c.l.b16 %v3960
        %v4062 = vunpack.c.l.b16 %v3961
        %v4063 = vpack.c.b16 %v4016, %v4015
        %v4064 = vpack.c.b16 %v4018, %v4017
        %v4065 = vpack.c.b16 %v4020, %v4019
        %v4066 = vpack.c.b16 %v4022, %v4021
        %v4067 = vpack.c.b16 %v4024, %v4023
        %v4068 = vpack.c.b16 %v4026, %v4025
        %v4069 = vpack.c.b16 %v4028, %v4027
        %v4070 = vpack.c.b16 %v4030, %v4029
        %v4071 = vpack.c.b16 %v4032, %v4031
        %v4072 = vpack.c.b16 %v4034, %v4033
        %v4073 = vpack.c.b16 %v4036, %v4035
        %v4074 = vpack.c.b16 %v4038, %v4037
        %v4075 = vpack.c.b16 %v4040, %v4039
        %v4076 = vpack.c.b16 %v4042, %v4041
        %v4077 = vpack.c.b16 %v4044, %v4043
        %v4078 = vpack.c.b16 %v4046, %v4045
        %v4079 = vpack.c.b16 %v4048, %v4047
        %v4080 = vpack.c.b16 %v4050, %v4049
        %v4081 = vpack.c.b16 %v4052, %v4051
        %v4082 = vpack.c.b16 %v4054, %v4053
        %v4083 = vpack.c.b16 %v4056, %v4055
        %v4084 = vpack.c.b16 %v4058, %v4057
        %v4085 = vpack.c.b16 %v4060, %v4059
        %v4086 = vpack.c.b16 %v4062, %v4061
        %4111 = vmatprep.subr.bf16.mxu0 0
        %4112 = vmatpush1.bf16.msra.mxu0 %v4063
        %4113 = vmatprep.subr.bf16.mxu0 0
        %4114 = vmatpush1.bf16.msra.mxu0 %v4064
        %4115 = vmatprep.subr.bf16.mxu0 0
        %4116 = vmatpush1.bf16.msra.mxu0 %v4065
        %4117 = vmatprep.subr.bf16.mxu0 0
        %4118 = vmatpush1.bf16.msra.mxu0 %v4066
        %4119 = vmatprep.subr.bf16.mxu0 0
        %4120 = vmatpush1.bf16.msra.mxu0 %v4067
        %4121 = vmatprep.subr.bf16.mxu0 0
        %4122 = vmatpush1.bf16.msra.mxu0 %v4068
        %4123 = vmatprep.subr.bf16.mxu0 0
        %4124 = vmatpush1.bf16.msra.mxu0 %v4069
        %4125 = vmatprep.subr.bf16.mxu0 0
        %4126 = vmatpush1.bf16.msra.mxu0 %v4070
        %4127 = vmatprep.subr.bf16.mxu0 0
        %4128 = vmatpush1.bf16.msra.mxu0 %v4071
        %4129 = vmatprep.subr.bf16.mxu0 0
        %4130 = vmatpush1.bf16.msra.mxu0 %v4072
        %4131 = vmatprep.subr.bf16.mxu0 0
        %4132 = vmatpush1.bf16.msra.mxu0 %v4073
        %4133 = vmatprep.subr.bf16.mxu0 0
        %4134 = vmatpush1.bf16.msra.mxu0 %v4074
        %4135 = vmatprep.subr.bf16.mxu0 0
        %4136 = vmatpush1.bf16.msra.mxu0 %v4075
        %4137 = vmatprep.subr.bf16.mxu0 0
        %4138 = vmatpush1.bf16.msra.mxu0 %v4076
        %4139 = vmatprep.subr.bf16.mxu0 0
        %4140 = vmatpush1.bf16.msra.mxu0 %v4077
        %4141 = vmatprep.subr.bf16.mxu0 0
        %4142 = vmatpush1.bf16.msra.mxu0 %v4078
        %4143 = vmatprep.mubr.bf16.mxu0 %v3912
        %4144 = vmatmul.mubr.bf16.gmra.mrb[0].mxu0 %v3911
        %v4145 = vpop.f32.mrb[0].mxu0
        %v4146 = vadd.f32 %v3966, %v4145
        %v4147 = vpop.f32.mrb[0].mxu0
        %v4148 = vpop.f32.mrb[0].mxu0
        %v4149 = vpop.f32.mrb[0].mxu0
        %4150 = vdwg.mxu0
        %4151 = vmatprep.subr.bf16.mxu0 0
        %4152 = vmatpush1.bf16.msra.mxu0 %v4079
        %4153 = vmatprep.subr.bf16.mxu0 0
        %4154 = vmatpush1.bf16.msra.mxu0 %v4080
        %4155 = vmatprep.subr.bf16.mxu0 0
        %4156 = vmatpush1.bf16.msra.mxu0 %v4081
        %4157 = vmatprep.subr.bf16.mxu0 0
        %4158 = vmatpush1.bf16.msra.mxu0 %v4082
        %4159 = vmatprep.subr.bf16.mxu0 0
        %4160 = vmatpush1.bf16.msra.mxu0 %v4083
        %4161 = vmatprep.subr.bf16.mxu0 0
        %4162 = vmatpush1.bf16.msra.mxu0 %v4084
        %4163 = vmatprep.subr.bf16.mxu0 0
        %4164 = vmatpush1.bf16.msra.mxu0 %v4085
        %4165 = vmatprep.subr.bf16.mxu0 0
        %4166 = vmatpush1.bf16.msra.mxu0 %v4086
        %4167 = vmatprep.subr.bf16.mxu0 0
        %4168 = vmatpush1.bf16.msra.mxu0 0
        %4169 = vmatprep.subr.bf16.mxu0 0
        %4170 = vmatpush1.bf16.msra.mxu0 0
        %4171 = vmatprep.subr.bf16.mxu0 0
        %4172 = vmatpush1.bf16.msra.mxu0 0
        %4173 = vmatprep.subr.bf16.mxu0 0
        %4174 = vmatpush1.bf16.msra.mxu0 0
        %4175 = vmatprep.subr.bf16.mxu0 0
        %4176 = vmatpush1.bf16.msra.mxu0 0
        %4177 = vmatprep.subr.bf16.mxu0 0
        %4178 = vmatpush1.bf16.msra.mxu0 0
        %4179 = vmatprep.subr.bf16.mxu0 0
        %4180 = vmatpush1.bf16.msra.mxu0 0
        %4181 = vmatprep.subr.bf16.mxu0 0
        %4182 = vmatpush1.bf16.msra.mxu0 0
        %4183 = vmatprep.mubr.bf16.mxu0 0
        %4184 = vmatmul.mubr.bf16.gmra.mrb[0].mxu0 %v3913
        %v4185 = vpop.f32.mrb[0].mxu0
        %v4186 = vadd.f32 %v4146, %v4185
        %v4187 = vpop.f32.mrb[0].mxu0
        %v4188 = vpop.f32.mrb[0].mxu0
        %v4189 = vpop.f32.mrb[0].mxu0
        %4190 = vdwg.mxu0
        %v4191 = vadd.f32 %v4186, %v3907
        %v4192 = vmax.f32 %v4191, 0.0
        %4193 = vst.msk [vmem:[#allocation4 + $0x1] sm:$0x3] %vm3220, %v4192
        %4194 = vst [vmem:[#allocation4 + $0x3] sm:$0x1] 0.0
        %v4195 = vld [vmem:[#allocation4] sm:$0x3]
        %v4196 = vld [vmem:[#allocation4 + $0x1] sm:$0x3]
        %v4197 = vld [vmem:[#allocation4 + $0x2] sm:$0x3]
        %v4198 = vpack.c.bf16 %v4195, %v4195
        %v4199 = vpack.c.bf16 %v4196, %v4196
        %v4200 = vpack.c.bf16 %v4197, %v4197
        %v4201 = vld [vmem:[#allocation6 + $0xa40] sm:$0xf]
        %v4202 = vld [vmem:[#allocation6 + $0xa44] sm:$0xf]
        %v4203 = vld [vmem:[#allocation6 + $0xa48] sm:$0xf]
        %v4204 = vld [vmem:[#allocation6 + $0xa4c] sm:$0xf]
        %v4205 = vld [vmem:[#allocation6 + $0xa50] sm:$0xf]
        %v4206 = vld [vmem:[#allocation6 + $0xa54] sm:$0xf]
        %v4207 = vld [vmem:[#allocation6 + $0xa58] sm:$0xf]
        %v4208 = vld [vmem:[#allocation6 + $0xa5c] sm:$0xf]
        %v4209 = vld [vmem:[#allocation6 + $0xa60] sm:$0xf]
        %v4210 = vld [vmem:[#allocation6 + $0xa64] sm:$0xf]
        %v4211 = vld [vmem:[#allocation6 + $0xa68] sm:$0xf]
        %v4212 = vld [vmem:[#allocation6 + $0xa6c] sm:$0xf]
        %v4213 = vld [vmem:[#allocation6 + $0xa70] sm:$0xf]
        %v4214 = vld [vmem:[#allocation6 + $0xa74] sm:$0xf]
        %v4215 = vld [vmem:[#allocation6 + $0xa78] sm:$0xf]
        %v4216 = vld [vmem:[#allocation6 + $0xa7c] sm:$0xf]
        %v4217 = vld [vmem:[#allocation6 + $0xa80] sm:$0xf]
        %v4218 = vld [vmem:[#allocation6 + $0xa84] sm:$0xf]
        %v4219 = vld [vmem:[#allocation6 + $0xa88] sm:$0xf]
        %v4220 = vld [vmem:[#allocation6 + $0xa8c] sm:$0xf]
        %v4221 = vld [vmem:[#allocation6 + $0xa90] sm:$0xf]
        %v4222 = vld [vmem:[#allocation6 + $0xa94] sm:$0xf]
        %v4223 = vld [vmem:[#allocation6 + $0xa98] sm:$0xf]
        %v4224 = vld [vmem:[#allocation6 + $0xa9c] sm:$0xf]
        %v4225 = vld [vmem:[#allocation6 + $0xaa0] sm:$0xf]
        %v4226 = vld [vmem:[#allocation6 + $0xaa4] sm:$0xf]
        %v4227 = vld [vmem:[#allocation6 + $0xaa8] sm:$0xf]
        %v4228 = vld [vmem:[#allocation6 + $0xaac] sm:$0xf]
        %v4229 = vld [vmem:[#allocation6 + $0xab0] sm:$0xf]
        %v4230 = vld [vmem:[#allocation6 + $0xab4] sm:$0xf]
        %v4231 = vld [vmem:[#allocation6 + $0xab8] sm:$0xf]
        %v4232 = vld [vmem:[#allocation6 + $0xabc] sm:$0xf]
        %v4233 = vld [vmem:[#allocation6 + $0xac0] sm:$0xf]
        %v4234 = vld [vmem:[#allocation6 + $0xac4] sm:$0xf]
        %v4235 = vld [vmem:[#allocation6 + $0xac8] sm:$0xf]
        %v4236 = vld [vmem:[#allocation6 + $0xacc] sm:$0xf]
        %v4237 = vld [vmem:[#allocation6 + $0xad0] sm:$0xf]
        %v4238 = vld [vmem:[#allocation6 + $0xad4] sm:$0xf]
        %v4239 = vld [vmem:[#allocation6 + $0xad8] sm:$0xf]
        %v4240 = vld [vmem:[#allocation6 + $0xadc] sm:$0xf]
        %v4241 = vld [vmem:[#allocation6 + $0xae0] sm:$0xf]
        %v4242 = vld [vmem:[#allocation6 + $0xae4] sm:$0xf]
        %v4243 = vld [vmem:[#allocation6 + $0xae8] sm:$0xf]
        %v4244 = vld [vmem:[#allocation6 + $0xaec] sm:$0xf]
        %v4245 = vld [vmem:[#allocation6 + $0xaf0] sm:$0xf]
        %v4246 = vld [vmem:[#allocation6 + $0xaf4] sm:$0xf]
        %v4247 = vld [vmem:[#allocation6 + $0xaf8] sm:$0xf]
        %v4248 = vld [vmem:[#allocation6 + $0xafc] sm:$0xf]
        %v4249 = vld [vmem:[#allocation8 + $0xf] sm:$0x1]
        %v4250 = vlaneseq
        %v4251 = vshrl.u32 %v4250, 7
        %v4252 = vsub.s32 0, %v4251
        %v4253 = vrot.slane %v4249, %v4252
        %v4302 = vunpack.c.l.b16 %v4201
        %v4303 = vunpack.c.l.b16 %v4202
        %v4304 = vunpack.c.l.b16 %v4203
        %v4305 = vunpack.c.l.b16 %v4204
        %v4306 = vunpack.c.l.b16 %v4205
        %v4307 = vunpack.c.l.b16 %v4206
        %v4308 = vunpack.c.l.b16 %v4207
        %v4309 = vunpack.c.l.b16 %v4208
        %v4310 = vunpack.c.l.b16 %v4209
        %v4311 = vunpack.c.l.b16 %v4210
        %v4312 = vunpack.c.l.b16 %v4211
        %v4313 = vunpack.c.l.b16 %v4212
        %v4314 = vunpack.c.l.b16 %v4213
        %v4315 = vunpack.c.l.b16 %v4214
        %v4316 = vunpack.c.l.b16 %v4215
        %v4317 = vunpack.c.l.b16 %v4216
        %v4318 = vunpack.c.l.b16 %v4217
        %v4319 = vunpack.c.l.b16 %v4218
        %v4320 = vunpack.c.l.b16 %v4219
        %v4321 = vunpack.c.l.b16 %v4220
        %v4322 = vunpack.c.l.b16 %v4221
        %v4323 = vunpack.c.l.b16 %v4222
        %v4324 = vunpack.c.l.b16 %v4223
        %v4325 = vunpack.c.l.b16 %v4224
        %v4326 = vunpack.c.l.b16 %v4225
        %v4327 = vunpack.c.l.b16 %v4226
        %v4328 = vunpack.c.l.b16 %v4227
        %v4329 = vunpack.c.l.b16 %v4228
        %v4330 = vunpack.c.l.b16 %v4229
        %v4331 = vunpack.c.l.b16 %v4230
        %v4332 = vunpack.c.l.b16 %v4231
        %v4333 = vunpack.c.l.b16 %v4232
        %v4334 = vunpack.c.l.b16 %v4233
        %v4335 = vunpack.c.l.b16 %v4234
        %v4336 = vunpack.c.l.b16 %v4235
        %v4337 = vunpack.c.l.b16 %v4236
        %v4338 = vunpack.c.l.b16 %v4237
        %v4339 = vunpack.c.l.b16 %v4238
        %v4340 = vunpack.c.l.b16 %v4239
        %v4341 = vunpack.c.l.b16 %v4240
        %v4342 = vunpack.c.l.b16 %v4241
        %v4343 = vunpack.c.l.b16 %v4242
        %v4344 = vunpack.c.l.b16 %v4243
        %v4345 = vunpack.c.l.b16 %v4244
        %v4346 = vunpack.c.l.b16 %v4245
        %v4347 = vunpack.c.l.b16 %v4246
        %v4348 = vunpack.c.l.b16 %v4247
        %v4349 = vunpack.c.l.b16 %v4248
        %v4350 = vpack.c.b16 %v4303, %v4302
        %v4351 = vpack.c.b16 %v4305, %v4304
        %v4352 = vpack.c.b16 %v4307, %v4306
        %v4353 = vpack.c.b16 %v4309, %v4308
        %v4354 = vpack.c.b16 %v4311, %v4310
        %v4355 = vpack.c.b16 %v4313, %v4312
        %v4356 = vpack.c.b16 %v4315, %v4314
        %v4357 = vpack.c.b16 %v4317, %v4316
        %v4358 = vpack.c.b16 %v4319, %v4318
        %v4359 = vpack.c.b16 %v4321, %v4320
        %v4360 = vpack.c.b16 %v4323, %v4322
        %v4361 = vpack.c.b16 %v4325, %v4324
        %v4362 = vpack.c.b16 %v4327, %v4326
        %v4363 = vpack.c.b16 %v4329, %v4328
        %v4364 = vpack.c.b16 %v4331, %v4330
        %v4365 = vpack.c.b16 %v4333, %v4332
        %v4366 = vpack.c.b16 %v4335, %v4334
        %v4367 = vpack.c.b16 %v4337, %v4336
        %v4368 = vpack.c.b16 %v4339, %v4338
        %v4369 = vpack.c.b16 %v4341, %v4340
        %v4370 = vpack.c.b16 %v4343, %v4342
        %v4371 = vpack.c.b16 %v4345, %v4344
        %v4372 = vpack.c.b16 %v4347, %v4346
        %v4373 = vpack.c.b16 %v4349, %v4348
        %4398 = vmatprep.subr.bf16.mxu0 0
        %4399 = vmatpush1.bf16.msra.mxu0 %v4350
        %4400 = vmatprep.subr.bf16.mxu0 0
        %4401 = vmatpush1.bf16.msra.mxu0 %v4351
        %4402 = vmatprep.subr.bf16.mxu0 0
        %4403 = vmatpush1.bf16.msra.mxu0 %v4352
        %4404 = vmatprep.subr.bf16.mxu0 0
        %4405 = vmatpush1.bf16.msra.mxu0 %v4353
        %4406 = vmatprep.subr.bf16.mxu0 0
        %4407 = vmatpush1.bf16.msra.mxu0 %v4354
        %4408 = vmatprep.subr.bf16.mxu0 0
        %4409 = vmatpush1.bf16.msra.mxu0 %v4355
        %4410 = vmatprep.subr.bf16.mxu0 0
        %4411 = vmatpush1.bf16.msra.mxu0 %v4356
        %4412 = vmatprep.subr.bf16.mxu0 0
        %4413 = vmatpush1.bf16.msra.mxu0 %v4357
        %4414 = vmatprep.subr.bf16.mxu0 0
        %4415 = vmatpush1.bf16.msra.mxu0 %v4358
        %4416 = vmatprep.subr.bf16.mxu0 0
        %4417 = vmatpush1.bf16.msra.mxu0 %v4359
        %4418 = vmatprep.subr.bf16.mxu0 0
        %4419 = vmatpush1.bf16.msra.mxu0 %v4360
        %4420 = vmatprep.subr.bf16.mxu0 0
        %4421 = vmatpush1.bf16.msra.mxu0 %v4361
        %4422 = vmatprep.subr.bf16.mxu0 0
        %4423 = vmatpush1.bf16.msra.mxu0 %v4362
        %4424 = vmatprep.subr.bf16.mxu0 0
        %4425 = vmatpush1.bf16.msra.mxu0 %v4363
        %4426 = vmatprep.subr.bf16.mxu0 0
        %4427 = vmatpush1.bf16.msra.mxu0 %v4364
        %4428 = vmatprep.subr.bf16.mxu0 0
        %4429 = vmatpush1.bf16.msra.mxu0 %v4365
        %4430 = vmatprep.mubr.bf16.mxu0 %v4199
        %4431 = vmatmul.mubr.bf16.gmra.mrb[0].mxu0 %v4198
        %v4432 = vpop.f32.mrb[0].mxu0
        %v4433 = vadd.f32 %v4253, %v4432
        %v4434 = vpop.f32.mrb[0].mxu0
        %v4435 = vpop.f32.mrb[0].mxu0
        %v4436 = vpop.f32.mrb[0].mxu0
        %4437 = vdwg.mxu0
        %4438 = vmatprep.subr.bf16.mxu0 0
        %4439 = vmatpush1.bf16.msra.mxu0 %v4366
        %4440 = vmatprep.subr.bf16.mxu0 0
        %4441 = vmatpush1.bf16.msra.mxu0 %v4367
        %4442 = vmatprep.subr.bf16.mxu0 0
        %4443 = vmatpush1.bf16.msra.mxu0 %v4368
        %4444 = vmatprep.subr.bf16.mxu0 0
        %4445 = vmatpush1.bf16.msra.mxu0 %v4369
        %4446 = vmatprep.subr.bf16.mxu0 0
        %4447 = vmatpush1.bf16.msra.mxu0 %v4370
        %4448 = vmatprep.subr.bf16.mxu0 0
        %4449 = vmatpush1.bf16.msra.mxu0 %v4371
        %4450 = vmatprep.subr.bf16.mxu0 0
        %4451 = vmatpush1.bf16.msra.mxu0 %v4372
        %4452 = vmatprep.subr.bf16.mxu0 0
        %4453 = vmatpush1.bf16.msra.mxu0 %v4373
        %4454 = vmatprep.subr.bf16.mxu0 0
        %4455 = vmatpush1.bf16.msra.mxu0 0
        %4456 = vmatprep.subr.bf16.mxu0 0
        %4457 = vmatpush1.bf16.msra.mxu0 0
        %4458 = vmatprep.subr.bf16.mxu0 0
        %4459 = vmatpush1.bf16.msra.mxu0 0
        %4460 = vmatprep.subr.bf16.mxu0 0
        %4461 = vmatpush1.bf16.msra.mxu0 0
        %4462 = vmatprep.subr.bf16.mxu0 0
        %4463 = vmatpush1.bf16.msra.mxu0 0
        %4464 = vmatprep.subr.bf16.mxu0 0
        %4465 = vmatpush1.bf16.msra.mxu0 0
        %4466 = vmatprep.subr.bf16.mxu0 0
        %4467 = vmatpush1.bf16.msra.mxu0 0
        %4468 = vmatprep.subr.bf16.mxu0 0
        %4469 = vmatpush1.bf16.msra.mxu0 0
        %4470 = vmatprep.mubr.bf16.mxu0 0
        %4471 = vmatmul.mubr.bf16.gmra.mrb[0].mxu0 %v4200
        %v4472 = vpop.f32.mrb[0].mxu0
        %v4473 = vadd.f32 %v4433, %v4472
        %v4474 = vpop.f32.mrb[0].mxu0
        %v4475 = vpop.f32.mrb[0].mxu0
        %v4476 = vpop.f32.mrb[0].mxu0
        %4477 = vdwg.mxu0
        %v4478 = vmax.f32 %v4473, 0.0
        %4479 = vst.msk [vmem:[#allocation5 + $0x1] sm:$0x3] %vm3220, %v4478
        %4480 = vst [vmem:[#allocation5 + $0x3] sm:$0x1] 0.0
        %v4481 = vld [vmem:[#allocation4 + $0x1] sm:$0x3]
        %v4482 = vld [vmem:[#allocation5] sm:$0x3]
        %v4483 = vld [vmem:[#allocation5 + $0x1] sm:$0x3]
        %v4484 = vld [vmem:[#allocation5 + $0x2] sm:$0x3]
        %v4485 = vpack.c.bf16 %v4482, %v4482
        %v4486 = vpack.c.bf16 %v4483, %v4483
        %v4487 = vpack.c.bf16 %v4484, %v4484
        %v4488 = vld [vmem:[#allocation6 + $0xb00] sm:$0xf]
        %v4489 = vld [vmem:[#allocation6 + $0xb04] sm:$0xf]
        %v4490 = vld [vmem:[#allocation6 + $0xb08] sm:$0xf]
        %v4491 = vld [vmem:[#allocation6 + $0xb0c] sm:$0xf]
        %v4492 = vld [vmem:[#allocation6 + $0xb10] sm:$0xf]
        %v4493 = vld [vmem:[#allocation6 + $0xb14] sm:$0xf]
        %v4494 = vld [vmem:[#allocation6 + $0xb18] sm:$0xf]
        %v4495 = vld [vmem:[#allocation6 + $0xb1c] sm:$0xf]
        %v4496 = vld [vmem:[#allocation6 + $0xb20] sm:$0xf]
        %v4497 = vld [vmem:[#allocation6 + $0xb24] sm:$0xf]
        %v4498 = vld [vmem:[#allocation6 + $0xb28] sm:$0xf]
        %v4499 = vld [vmem:[#allocation6 + $0xb2c] sm:$0xf]
        %v4500 = vld [vmem:[#allocation6 + $0xb30] sm:$0xf]
        %v4501 = vld [vmem:[#allocation6 + $0xb34] sm:$0xf]
        %v4502 = vld [vmem:[#allocation6 + $0xb38] sm:$0xf]
        %v4503 = vld [vmem:[#allocation6 + $0xb3c] sm:$0xf]
        %v4504 = vld [vmem:[#allocation6 + $0xb40] sm:$0xf]
        %v4505 = vld [vmem:[#allocation6 + $0xb44] sm:$0xf]
        %v4506 = vld [vmem:[#allocation6 + $0xb48] sm:$0xf]
        %v4507 = vld [vmem:[#allocation6 + $0xb4c] sm:$0xf]
        %v4508 = vld [vmem:[#allocation6 + $0xb50] sm:$0xf]
        %v4509 = vld [vmem:[#allocation6 + $0xb54] sm:$0xf]
        %v4510 = vld [vmem:[#allocation6 + $0xb58] sm:$0xf]
        %v4511 = vld [vmem:[#allocation6 + $0xb5c] sm:$0xf]
        %v4512 = vld [vmem:[#allocation6 + $0xb60] sm:$0xf]
        %v4513 = vld [vmem:[#allocation6 + $0xb64] sm:$0xf]
        %v4514 = vld [vmem:[#allocation6 + $0xb68] sm:$0xf]
        %v4515 = vld [vmem:[#allocation6 + $0xb6c] sm:$0xf]
        %v4516 = vld [vmem:[#allocation6 + $0xb70] sm:$0xf]
        %v4517 = vld [vmem:[#allocation6 + $0xb74] sm:$0xf]
        %v4518 = vld [vmem:[#allocation6 + $0xb78] sm:$0xf]
        %v4519 = vld [vmem:[#allocation6 + $0xb7c] sm:$0xf]
        %v4520 = vld [vmem:[#allocation6 + $0xb80] sm:$0xf]
        %v4521 = vld [vmem:[#allocation6 + $0xb84] sm:$0xf]
        %v4522 = vld [vmem:[#allocation6 + $0xb88] sm:$0xf]
        %v4523 = vld [vmem:[#allocation6 + $0xb8c] sm:$0xf]
        %v4524 = vld [vmem:[#allocation6 + $0xb90] sm:$0xf]
        %v4525 = vld [vmem:[#allocation6 + $0xb94] sm:$0xf]
        %v4526 = vld [vmem:[#allocation6 + $0xb98] sm:$0xf]
        %v4527 = vld [vmem:[#allocation6 + $0xb9c] sm:$0xf]
        %v4528 = vld [vmem:[#allocation6 + $0xba0] sm:$0xf]
        %v4529 = vld [vmem:[#allocation6 + $0xba4] sm:$0xf]
        %v4530 = vld [vmem:[#allocation6 + $0xba8] sm:$0xf]
        %v4531 = vld [vmem:[#allocation6 + $0xbac] sm:$0xf]
        %v4532 = vld [vmem:[#allocation6 + $0xbb0] sm:$0xf]
        %v4533 = vld [vmem:[#allocation6 + $0xbb4] sm:$0xf]
        %v4534 = vld [vmem:[#allocation6 + $0xbb8] sm:$0xf]
        %v4535 = vld [vmem:[#allocation6 + $0xbbc] sm:$0xf]
        %v4536 = vld [vmem:[#allocation8 + $0x10] sm:$0x1]
        %v4537 = vlaneseq
        %v4538 = vshrl.u32 %v4537, 7
        %v4539 = vsub.s32 0, %v4538
        %v4540 = vrot.slane %v4536, %v4539
        %v4589 = vunpack.c.l.b16 %v4488
        %v4590 = vunpack.c.l.b16 %v4489
        %v4591 = vunpack.c.l.b16 %v4490
        %v4592 = vunpack.c.l.b16 %v4491
        %v4593 = vunpack.c.l.b16 %v4492
        %v4594 = vunpack.c.l.b16 %v4493
        %v4595 = vunpack.c.l.b16 %v4494
        %v4596 = vunpack.c.l.b16 %v4495
        %v4597 = vunpack.c.l.b16 %v4496
        %v4598 = vunpack.c.l.b16 %v4497
        %v4599 = vunpack.c.l.b16 %v4498
        %v4600 = vunpack.c.l.b16 %v4499
        %v4601 = vunpack.c.l.b16 %v4500
        %v4602 = vunpack.c.l.b16 %v4501
        %v4603 = vunpack.c.l.b16 %v4502
        %v4604 = vunpack.c.l.b16 %v4503
        %v4605 = vunpack.c.l.b16 %v4504
        %v4606 = vunpack.c.l.b16 %v4505
        %v4607 = vunpack.c.l.b16 %v4506
        %v4608 = vunpack.c.l.b16 %v4507
        %v4609 = vunpack.c.l.b16 %v4508
        %v4610 = vunpack.c.l.b16 %v4509
        %v4611 = vunpack.c.l.b16 %v4510
        %v4612 = vunpack.c.l.b16 %v4511
        %v4613 = vunpack.c.l.b16 %v4512
        %v4614 = vunpack.c.l.b16 %v4513
        %v4615 = vunpack.c.l.b16 %v4514
        %v4616 = vunpack.c.l.b16 %v4515
        %v4617 = vunpack.c.l.b16 %v4516
        %v4618 = vunpack.c.l.b16 %v4517
        %v4619 = vunpack.c.l.b16 %v4518
        %v4620 = vunpack.c.l.b16 %v4519
        %v4621 = vunpack.c.l.b16 %v4520
        %v4622 = vunpack.c.l.b16 %v4521
        %v4623 = vunpack.c.l.b16 %v4522
        %v4624 = vunpack.c.l.b16 %v4523
        %v4625 = vunpack.c.l.b16 %v4524
        %v4626 = vunpack.c.l.b16 %v4525
        %v4627 = vunpack.c.l.b16 %v4526
        %v4628 = vunpack.c.l.b16 %v4527
        %v4629 = vunpack.c.l.b16 %v4528
        %v4630 = vunpack.c.l.b16 %v4529
        %v4631 = vunpack.c.l.b16 %v4530
        %v4632 = vunpack.c.l.b16 %v4531
        %v4633 = vunpack.c.l.b16 %v4532
        %v4634 = vunpack.c.l.b16 %v4533
        %v4635 = vunpack.c.l.b16 %v4534
        %v4636 = vunpack.c.l.b16 %v4535
        %v4637 = vpack.c.b16 %v4590, %v4589
        %v4638 = vpack.c.b16 %v4592, %v4591
        %v4639 = vpack.c.b16 %v4594, %v4593
        %v4640 = vpack.c.b16 %v4596, %v4595
        %v4641 = vpack.c.b16 %v4598, %v4597
        %v4642 = vpack.c.b16 %v4600, %v4599
        %v4643 = vpack.c.b16 %v4602, %v4601
        %v4644 = vpack.c.b16 %v4604, %v4603
        %v4645 = vpack.c.b16 %v4606, %v4605
        %v4646 = vpack.c.b16 %v4608, %v4607
        %v4647 = vpack.c.b16 %v4610, %v4609
        %v4648 = vpack.c.b16 %v4612, %v4611
        %v4649 = vpack.c.b16 %v4614, %v4613
        %v4650 = vpack.c.b16 %v4616, %v4615
        %v4651 = vpack.c.b16 %v4618, %v4617
        %v4652 = vpack.c.b16 %v4620, %v4619
        %v4653 = vpack.c.b16 %v4622, %v4621
        %v4654 = vpack.c.b16 %v4624, %v4623
        %v4655 = vpack.c.b16 %v4626, %v4625
        %v4656 = vpack.c.b16 %v4628, %v4627
        %v4657 = vpack.c.b16 %v4630, %v4629
        %v4658 = vpack.c.b16 %v4632, %v4631
        %v4659 = vpack.c.b16 %v4634, %v4633
        %v4660 = vpack.c.b16 %v4636, %v4635
        %4685 = vmatprep.subr.bf16.mxu0 0
        %4686 = vmatpush1.bf16.msra.mxu0 %v4637
        %4687 = vmatprep.subr.bf16.mxu0 0
        %4688 = vmatpush1.bf16.msra.mxu0 %v4638
        %4689 = vmatprep.subr.bf16.mxu0 0
        %4690 = vmatpush1.bf16.msra.mxu0 %v4639
        %4691 = vmatprep.subr.bf16.mxu0 0
        %4692 = vmatpush1.bf16.msra.mxu0 %v4640
        %4693 = vmatprep.subr.bf16.mxu0 0
        %4694 = vmatpush1.bf16.msra.mxu0 %v4641
        %4695 = vmatprep.subr.bf16.mxu0 0
        %4696 = vmatpush1.bf16.msra.mxu0 %v4642
        %4697 = vmatprep.subr.bf16.mxu0 0
        %4698 = vmatpush1.bf16.msra.mxu0 %v4643
        %4699 = vmatprep.subr.bf16.mxu0 0
        %4700 = vmatpush1.bf16.msra.mxu0 %v4644
        %4701 = vmatprep.subr.bf16.mxu0 0
        %4702 = vmatpush1.bf16.msra.mxu0 %v4645
        %4703 = vmatprep.subr.bf16.mxu0 0
        %4704 = vmatpush1.bf16.msra.mxu0 %v4646
        %4705 = vmatprep.subr.bf16.mxu0 0
        %4706 = vmatpush1.bf16.msra.mxu0 %v4647
        %4707 = vmatprep.subr.bf16.mxu0 0
        %4708 = vmatpush1.bf16.msra.mxu0 %v4648
        %4709 = vmatprep.subr.bf16.mxu0 0
        %4710 = vmatpush1.bf16.msra.mxu0 %v4649
        %4711 = vmatprep.subr.bf16.mxu0 0
        %4712 = vmatpush1.bf16.msra.mxu0 %v4650
        %4713 = vmatprep.subr.bf16.mxu0 0
        %4714 = vmatpush1.bf16.msra.mxu0 %v4651
        %4715 = vmatprep.subr.bf16.mxu0 0
        %4716 = vmatpush1.bf16.msra.mxu0 %v4652
        %4717 = vmatprep.mubr.bf16.mxu0 %v4486
        %4718 = vmatmul.mubr.bf16.gmra.mrb[0].mxu0 %v4485
        %v4719 = vpop.f32.mrb[0].mxu0
        %v4720 = vadd.f32 %v4540, %v4719
        %v4721 = vpop.f32.mrb[0].mxu0
        %v4722 = vpop.f32.mrb[0].mxu0
        %v4723 = vpop.f32.mrb[0].mxu0
        %4724 = vdwg.mxu0
        %4725 = vmatprep.subr.bf16.mxu0 0
        %4726 = vmatpush1.bf16.msra.mxu0 %v4653
        %4727 = vmatprep.subr.bf16.mxu0 0
        %4728 = vmatpush1.bf16.msra.mxu0 %v4654
        %4729 = vmatprep.subr.bf16.mxu0 0
        %4730 = vmatpush1.bf16.msra.mxu0 %v4655
        %4731 = vmatprep.subr.bf16.mxu0 0
        %4732 = vmatpush1.bf16.msra.mxu0 %v4656
        %4733 = vmatprep.subr.bf16.mxu0 0
        %4734 = vmatpush1.bf16.msra.mxu0 %v4657
        %4735 = vmatprep.subr.bf16.mxu0 0
        %4736 = vmatpush1.bf16.msra.mxu0 %v4658
        %4737 = vmatprep.subr.bf16.mxu0 0
        %4738 = vmatpush1.bf16.msra.mxu0 %v4659
        %4739 = vmatprep.subr.bf16.mxu0 0
        %4740 = vmatpush1.bf16.msra.mxu0 %v4660
        %4741 = vmatprep.subr.bf16.mxu0 0
        %4742 = vmatpush1.bf16.msra.mxu0 0
        %4743 = vmatprep.subr.bf16.mxu0 0
        %4744 = vmatpush1.bf16.msra.mxu0 0
        %4745 = vmatprep.subr.bf16.mxu0 0
        %4746 = vmatpush1.bf16.msra.mxu0 0
        %4747 = vmatprep.subr.bf16.mxu0 0
        %4748 = vmatpush1.bf16.msra.mxu0 0
        %4749 = vmatprep.subr.bf16.mxu0 0
        %4750 = vmatpush1.bf16.msra.mxu0 0
        %4751 = vmatprep.subr.bf16.mxu0 0
        %4752 = vmatpush1.bf16.msra.mxu0 0
        %4753 = vmatprep.subr.bf16.mxu0 0
        %4754 = vmatpush1.bf16.msra.mxu0 0
        %4755 = vmatprep.subr.bf16.mxu0 0
        %4756 = vmatpush1.bf16.msra.mxu0 0
        %4757 = vmatprep.mubr.bf16.mxu0 0
        %4758 = vmatmul.mubr.bf16.gmra.mrb[0].mxu0 %v4487
        %v4759 = vpop.f32.mrb[0].mxu0
        %v4760 = vadd.f32 %v4720, %v4759
        %v4761 = vpop.f32.mrb[0].mxu0
        %v4762 = vpop.f32.mrb[0].mxu0
        %v4763 = vpop.f32.mrb[0].mxu0
        %4764 = vdwg.mxu0
        %v4765 = vadd.f32 %v4760, %v4481
        %v4766 = vmax.f32 %v4765, 0.0
        %4767 = vst.msk [vmem:[#allocation4 + $0x1] sm:$0x3] %vm3220, %v4766
        %4768 = vst [vmem:[#allocation4 + $0x3] sm:$0x1] 0.0
        %v4769 = vld [vmem:[#allocation4] sm:$0x3]
        %v4770 = vld [vmem:[#allocation4 + $0x1] sm:$0x3]
        %v4771 = vld [vmem:[#allocation4 + $0x2] sm:$0x3]
        %v4772 = vpack.c.bf16 %v4769, %v4769
        %v4773 = vpack.c.bf16 %v4770, %v4770
        %v4774 = vpack.c.bf16 %v4771, %v4771
        %v4775 = vld [vmem:[#allocation6 + $0xbc0] sm:$0xf]
        %v4776 = vld [vmem:[#allocation6 + $0xbc4] sm:$0xf]
        %v4777 = vld [vmem:[#allocation6 + $0xbc8] sm:$0xf]
        %v4778 = vld [vmem:[#allocation6 + $0xbcc] sm:$0xf]
        %v4779 = vld [vmem:[#allocation6 + $0xbd0] sm:$0xf]
        %v4780 = vld [vmem:[#allocation6 + $0xbd4] sm:$0xf]
        %v4781 = vld [vmem:[#allocation6 + $0xbd8] sm:$0xf]
        %v4782 = vld [vmem:[#allocation6 + $0xbdc] sm:$0xf]
        %v4783 = vld [vmem:[#allocation6 + $0xbe0] sm:$0xf]
        %v4784 = vld [vmem:[#allocation6 + $0xbe4] sm:$0xf]
        %v4785 = vld [vmem:[#allocation6 + $0xbe8] sm:$0xf]
        %v4786 = vld [vmem:[#allocation6 + $0xbec] sm:$0xf]
        %v4787 = vld [vmem:[#allocation6 + $0xbf0] sm:$0xf]
        %v4788 = vld [vmem:[#allocation6 + $0xbf4] sm:$0xf]
        %v4789 = vld [vmem:[#allocation6 + $0xbf8] sm:$0xf]
        %v4790 = vld [vmem:[#allocation6 + $0xbfc] sm:$0xf]
        %v4791 = vld [vmem:[#allocation6 + $0xc00] sm:$0xf]
        %v4792 = vld [vmem:[#allocation6 + $0xc04] sm:$0xf]
        %v4793 = vld [vmem:[#allocation6 + $0xc08] sm:$0xf]
        %v4794 = vld [vmem:[#allocation6 + $0xc0c] sm:$0xf]
        %v4795 = vld [vmem:[#allocation6 + $0xc10] sm:$0xf]
        %v4796 = vld [vmem:[#allocation6 + $0xc14] sm:$0xf]
        %v4797 = vld [vmem:[#allocation6 + $0xc18] sm:$0xf]
        %v4798 = vld [vmem:[#allocation6 + $0xc1c] sm:$0xf]
        %v4799 = vld [vmem:[#allocation6 + $0xc20] sm:$0xf]
        %v4800 = vld [vmem:[#allocation6 + $0xc24] sm:$0xf]
        %v4801 = vld [vmem:[#allocation6 + $0xc28] sm:$0xf]
        %v4802 = vld [vmem:[#allocation6 + $0xc2c] sm:$0xf]
        %v4803 = vld [vmem:[#allocation6 + $0xc30] sm:$0xf]
        %v4804 = vld [vmem:[#allocation6 + $0xc34] sm:$0xf]
        %v4805 = vld [vmem:[#allocation6 + $0xc38] sm:$0xf]
        %v4806 = vld [vmem:[#allocation6 + $0xc3c] sm:$0xf]
        %v4807 = vld [vmem:[#allocation6 + $0xc40] sm:$0xf]
        %v4808 = vld [vmem:[#allocation6 + $0xc44] sm:$0xf]
        %v4809 = vld [vmem:[#allocation6 + $0xc48] sm:$0xf]
        %v4810 = vld [vmem:[#allocation6 + $0xc4c] sm:$0xf]
        %v4811 = vld [vmem:[#allocation6 + $0xc50] sm:$0xf]
        %v4812 = vld [vmem:[#allocation6 + $0xc54] sm:$0xf]
        %v4813 = vld [vmem:[#allocation6 + $0xc58] sm:$0xf]
        %v4814 = vld [vmem:[#allocation6 + $0xc5c] sm:$0xf]
        %v4815 = vld [vmem:[#allocation6 + $0xc60] sm:$0xf]
        %v4816 = vld [vmem:[#allocation6 + $0xc64] sm:$0xf]
        %v4817 = vld [vmem:[#allocation6 + $0xc68] sm:$0xf]
        %v4818 = vld [vmem:[#allocation6 + $0xc6c] sm:$0xf]
        %v4819 = vld [vmem:[#allocation6 + $0xc70] sm:$0xf]
        %v4820 = vld [vmem:[#allocation6 + $0xc74] sm:$0xf]
        %v4821 = vld [vmem:[#allocation6 + $0xc78] sm:$0xf]
        %v4822 = vld [vmem:[#allocation6 + $0xc7c] sm:$0xf]
        %v4823 = vld [vmem:[#allocation8 + $0x11] sm:$0x1]
        %v4824 = vlaneseq
        %v4825 = vshrl.u32 %v4824, 7
        %v4826 = vsub.s32 0, %v4825
        %v4827 = vrot.slane %v4823, %v4826
        %v4876 = vunpack.c.l.b16 %v4775
        %v4877 = vunpack.c.l.b16 %v4776
        %v4878 = vunpack.c.l.b16 %v4777
        %v4879 = vunpack.c.l.b16 %v4778
        %v4880 = vunpack.c.l.b16 %v4779
        %v4881 = vunpack.c.l.b16 %v4780
        %v4882 = vunpack.c.l.b16 %v4781
        %v4883 = vunpack.c.l.b16 %v4782
        %v4884 = vunpack.c.l.b16 %v4783
        %v4885 = vunpack.c.l.b16 %v4784
        %v4886 = vunpack.c.l.b16 %v4785
        %v4887 = vunpack.c.l.b16 %v4786
        %v4888 = vunpack.c.l.b16 %v4787
        %v4889 = vunpack.c.l.b16 %v4788
        %v4890 = vunpack.c.l.b16 %v4789
        %v4891 = vunpack.c.l.b16 %v4790
        %v4892 = vunpack.c.l.b16 %v4791
        %v4893 = vunpack.c.l.b16 %v4792
        %v4894 = vunpack.c.l.b16 %v4793
        %v4895 = vunpack.c.l.b16 %v4794
        %v4896 = vunpack.c.l.b16 %v4795
        %v4897 = vunpack.c.l.b16 %v4796
        %v4898 = vunpack.c.l.b16 %v4797
        %v4899 = vunpack.c.l.b16 %v4798
        %v4900 = vunpack.c.l.b16 %v4799
        %v4901 = vunpack.c.l.b16 %v4800
        %v4902 = vunpack.c.l.b16 %v4801
        %v4903 = vunpack.c.l.b16 %v4802
        %v4904 = vunpack.c.l.b16 %v4803
        %v4905 = vunpack.c.l.b16 %v4804
        %v4906 = vunpack.c.l.b16 %v4805
        %v4907 = vunpack.c.l.b16 %v4806
        %v4908 = vunpack.c.l.b16 %v4807
        %v4909 = vunpack.c.l.b16 %v4808
        %v4910 = vunpack.c.l.b16 %v4809
        %v4911 = vunpack.c.l.b16 %v4810
        %v4912 = vunpack.c.l.b16 %v4811
        %v4913 = vunpack.c.l.b16 %v4812
        %v4914 = vunpack.c.l.b16 %v4813
        %v4915 = vunpack.c.l.b16 %v4814
        %v4916 = vunpack.c.l.b16 %v4815
        %v4917 = vunpack.c.l.b16 %v4816
        %v4918 = vunpack.c.l.b16 %v4817
        %v4919 = vunpack.c.l.b16 %v4818
        %v4920 = vunpack.c.l.b16 %v4819
        %v4921 = vunpack.c.l.b16 %v4820
        %v4922 = vunpack.c.l.b16 %v4821
        %v4923 = vunpack.c.l.b16 %v4822
        %v4924 = vpack.c.b16 %v4877, %v4876
        %v4925 = vpack.c.b16 %v4879, %v4878
        %v4926 = vpack.c.b16 %v4881, %v4880
        %v4927 = vpack.c.b16 %v4883, %v4882
        %v4928 = vpack.c.b16 %v4885, %v4884
        %v4929 = vpack.c.b16 %v4887, %v4886
        %v4930 = vpack.c.b16 %v4889, %v4888
        %v4931 = vpack.c.b16 %v4891, %v4890
        %v4932 = vpack.c.b16 %v4893, %v4892
        %v4933 = vpack.c.b16 %v4895, %v4894
        %v4934 = vpack.c.b16 %v4897, %v4896
        %v4935 = vpack.c.b16 %v4899, %v4898
        %v4936 = vpack.c.b16 %v4901, %v4900
        %v4937 = vpack.c.b16 %v4903, %v4902
        %v4938 = vpack.c.b16 %v4905, %v4904
        %v4939 = vpack.c.b16 %v4907, %v4906
        %v4940 = vpack.c.b16 %v4909, %v4908
        %v4941 = vpack.c.b16 %v4911, %v4910
        %v4942 = vpack.c.b16 %v4913, %v4912
        %v4943 = vpack.c.b16 %v4915, %v4914
        %v4944 = vpack.c.b16 %v4917, %v4916
        %v4945 = vpack.c.b16 %v4919, %v4918
        %v4946 = vpack.c.b16 %v4921, %v4920
        %v4947 = vpack.c.b16 %v4923, %v4922
        %4972 = vmatprep.subr.bf16.mxu0 0
        %4973 = vmatpush1.bf16.msra.mxu0 %v4924
        %4974 = vmatprep.subr.bf16.mxu0 0
        %4975 = vmatpush1.bf16.msra.mxu0 %v4925
        %4976 = vmatprep.subr.bf16.mxu0 0
        %4977 = vmatpush1.bf16.msra.mxu0 %v4926
        %4978 = vmatprep.subr.bf16.mxu0 0
        %4979 = vmatpush1.bf16.msra.mxu0 %v4927
        %4980 = vmatprep.subr.bf16.mxu0 0
        %4981 = vmatpush1.bf16.msra.mxu0 %v4928
        %4982 = vmatprep.subr.bf16.mxu0 0
        %4983 = vmatpush1.bf16.msra.mxu0 %v4929
        %4984 = vmatprep.subr.bf16.mxu0 0
        %4985 = vmatpush1.bf16.msra.mxu0 %v4930
        %4986 = vmatprep.subr.bf16.mxu0 0
        %4987 = vmatpush1.bf16.msra.mxu0 %v4931
        %4988 = vmatprep.subr.bf16.mxu0 0
        %4989 = vmatpush1.bf16.msra.mxu0 %v4932
        %4990 = vmatprep.subr.bf16.mxu0 0
        %4991 = vmatpush1.bf16.msra.mxu0 %v4933
        %4992 = vmatprep.subr.bf16.mxu0 0
        %4993 = vmatpush1.bf16.msra.mxu0 %v4934
        %4994 = vmatprep.subr.bf16.mxu0 0
        %4995 = vmatpush1.bf16.msra.mxu0 %v4935
        %4996 = vmatprep.subr.bf16.mxu0 0
        %4997 = vmatpush1.bf16.msra.mxu0 %v4936
        %4998 = vmatprep.subr.bf16.mxu0 0
        %4999 = vmatpush1.bf16.msra.mxu0 %v4937
        %5000 = vmatprep.subr.bf16.mxu0 0
        %5001 = vmatpush1.bf16.msra.mxu0 %v4938
        %5002 = vmatprep.subr.bf16.mxu0 0
        %5003 = vmatpush1.bf16.msra.mxu0 %v4939
        %5004 = vmatprep.mubr.bf16.mxu0 %v4773
        %5005 = vmatmul.mubr.bf16.gmra.mrb[0].mxu0 %v4772
        %v5006 = vpop.f32.mrb[0].mxu0
        %v5007 = vadd.f32 %v4827, %v5006
        %v5008 = vpop.f32.mrb[0].mxu0
        %v5009 = vpop.f32.mrb[0].mxu0
        %v5010 = vpop.f32.mrb[0].mxu0
        %5011 = vdwg.mxu0
        %5012 = vmatprep.subr.bf16.mxu0 0
        %5013 = vmatpush1.bf16.msra.mxu0 %v4940
        %5014 = vmatprep.subr.bf16.mxu0 0
        %5015 = vmatpush1.bf16.msra.mxu0 %v4941
        %5016 = vmatprep.subr.bf16.mxu0 0
        %5017 = vmatpush1.bf16.msra.mxu0 %v4942
        %5018 = vmatprep.subr.bf16.mxu0 0
        %5019 = vmatpush1.bf16.msra.mxu0 %v4943
        %5020 = vmatprep.subr.bf16.mxu0 0
        %5021 = vmatpush1.bf16.msra.mxu0 %v4944
        %5022 = vmatprep.subr.bf16.mxu0 0
        %5023 = vmatpush1.bf16.msra.mxu0 %v4945
        %5024 = vmatprep.subr.bf16.mxu0 0
        %5025 = vmatpush1.bf16.msra.mxu0 %v4946
        %5026 = vmatprep.subr.bf16.mxu0 0
        %5027 = vmatpush1.bf16.msra.mxu0 %v4947
        %5028 = vmatprep.subr.bf16.mxu0 0
        %5029 = vmatpush1.bf16.msra.mxu0 0
        %5030 = vmatprep.subr.bf16.mxu0 0
        %5031 = vmatpush1.bf16.msra.mxu0 0
        %5032 = vmatprep.subr.bf16.mxu0 0
        %5033 = vmatpush1.bf16.msra.mxu0 0
        %5034 = vmatprep.subr.bf16.mxu0 0
        %5035 = vmatpush1.bf16.msra.mxu0 0
        %5036 = vmatprep.subr.bf16.mxu0 0
        %5037 = vmatpush1.bf16.msra.mxu0 0
        %5038 = vmatprep.subr.bf16.mxu0 0
        %5039 = vmatpush1.bf16.msra.mxu0 0
        %5040 = vmatprep.subr.bf16.mxu0 0
        %5041 = vmatpush1.bf16.msra.mxu0 0
        %5042 = vmatprep.subr.bf16.mxu0 0
        %5043 = vmatpush1.bf16.msra.mxu0 0
        %5044 = vmatprep.mubr.bf16.mxu0 0
        %5045 = vmatmul.mubr.bf16.gmra.mrb[0].mxu0 %v4774
        %v5046 = vpop.f32.mrb[0].mxu0
        %v5047 = vadd.f32 %v5007, %v5046
        %v5048 = vpop.f32.mrb[0].mxu0
        %v5049 = vpop.f32.mrb[0].mxu0
        %v5050 = vpop.f32.mrb[0].mxu0
        %5051 = vdwg.mxu0
        %v5052 = vmax.f32 %v5047, 0.0
        %5053 = vst.msk [vmem:[#allocation5 + $0x1] sm:$0x3] %vm3220, %v5052
        %5054 = vst [vmem:[#allocation5 + $0x3] sm:$0x1] 0.0
        %v5055 = vld [vmem:[#allocation4 + $0x1] sm:$0x3]
        %v5056 = vld [vmem:[#allocation5] sm:$0x3]
        %v5057 = vld [vmem:[#allocation5 + $0x1] sm:$0x3]
        %v5058 = vld [vmem:[#allocation5 + $0x2] sm:$0x3]
        %v5059 = vpack.c.bf16 %v5056, %v5056
        %v5060 = vpack.c.bf16 %v5057, %v5057
        %v5061 = vpack.c.bf16 %v5058, %v5058
        %v5062 = vld [vmem:[#allocation6 + $0xc80] sm:$0xf]
        %v5063 = vld [vmem:[#allocation6 + $0xc84] sm:$0xf]
        %v5064 = vld [vmem:[#allocation6 + $0xc88] sm:$0xf]
        %v5065 = vld [vmem:[#allocation6 + $0xc8c] sm:$0xf]
        %v5066 = vld [vmem:[#allocation6 + $0xc90] sm:$0xf]
        %v5067 = vld [vmem:[#allocation6 + $0xc94] sm:$0xf]
        %v5068 = vld [vmem:[#allocation6 + $0xc98] sm:$0xf]
        %v5069 = vld [vmem:[#allocation6 + $0xc9c] sm:$0xf]
        %v5070 = vld [vmem:[#allocation6 + $0xca0] sm:$0xf]
        %v5071 = vld [vmem:[#allocation6 + $0xca4] sm:$0xf]
        %v5072 = vld [vmem:[#allocation6 + $0xca8] sm:$0xf]
        %v5073 = vld [vmem:[#allocation6 + $0xcac] sm:$0xf]
        %v5074 = vld [vmem:[#allocation6 + $0xcb0] sm:$0xf]
        %v5075 = vld [vmem:[#allocation6 + $0xcb4] sm:$0xf]
        %v5076 = vld [vmem:[#allocation6 + $0xcb8] sm:$0xf]
        %v5077 = vld [vmem:[#allocation6 + $0xcbc] sm:$0xf]
        %v5078 = vld [vmem:[#allocation6 + $0xcc0] sm:$0xf]
        %v5079 = vld [vmem:[#allocation6 + $0xcc4] sm:$0xf]
        %v5080 = vld [vmem:[#allocation6 + $0xcc8] sm:$0xf]
        %v5081 = vld [vmem:[#allocation6 + $0xccc] sm:$0xf]
        %v5082 = vld [vmem:[#allocation6 + $0xcd0] sm:$0xf]
        %v5083 = vld [vmem:[#allocation6 + $0xcd4] sm:$0xf]
        %v5084 = vld [vmem:[#allocation6 + $0xcd8] sm:$0xf]
        %v5085 = vld [vmem:[#allocation6 + $0xcdc] sm:$0xf]
        %v5086 = vld [vmem:[#allocation6 + $0xce0] sm:$0xf]
        %v5087 = vld [vmem:[#allocation6 + $0xce4] sm:$0xf]
        %v5088 = vld [vmem:[#allocation6 + $0xce8] sm:$0xf]
        %v5089 = vld [vmem:[#allocation6 + $0xcec] sm:$0xf]
        %v5090 = vld [vmem:[#allocation6 + $0xcf0] sm:$0xf]
        %v5091 = vld [vmem:[#allocation6 + $0xcf4] sm:$0xf]
        %v5092 = vld [vmem:[#allocation6 + $0xcf8] sm:$0xf]
        %v5093 = vld [vmem:[#allocation6 + $0xcfc] sm:$0xf]
        %v5094 = vld [vmem:[#allocation6 + $0xd00] sm:$0xf]
        %v5095 = vld [vmem:[#allocation6 + $0xd04] sm:$0xf]
        %v5096 = vld [vmem:[#allocation6 + $0xd08] sm:$0xf]
        %v5097 = vld [vmem:[#allocation6 + $0xd0c] sm:$0xf]
        %v5098 = vld [vmem:[#allocation6 + $0xd10] sm:$0xf]
        %v5099 = vld [vmem:[#allocation6 + $0xd14] sm:$0xf]
        %v5100 = vld [vmem:[#allocation6 + $0xd18] sm:$0xf]
        %v5101 = vld [vmem:[#allocation6 + $0xd1c] sm:$0xf]
        %v5102 = vld [vmem:[#allocation6 + $0xd20] sm:$0xf]
        %v5103 = vld [vmem:[#allocation6 + $0xd24] sm:$0xf]
        %v5104 = vld [vmem:[#allocation6 + $0xd28] sm:$0xf]
        %v5105 = vld [vmem:[#allocation6 + $0xd2c] sm:$0xf]
        %v5106 = vld [vmem:[#allocation6 + $0xd30] sm:$0xf]
        %v5107 = vld [vmem:[#allocation6 + $0xd34] sm:$0xf]
        %v5108 = vld [vmem:[#allocation6 + $0xd38] sm:$0xf]
        %v5109 = vld [vmem:[#allocation6 + $0xd3c] sm:$0xf]
        %v5110 = vld [vmem:[#allocation8 + $0x12] sm:$0x1]
        %v5111 = vlaneseq
        %v5112 = vshrl.u32 %v5111, 7
        %v5113 = vsub.s32 0, %v5112
        %v5114 = vrot.slane %v5110, %v5113
        %v5163 = vunpack.c.l.b16 %v5062
        %v5164 = vunpack.c.l.b16 %v5063
        %v5165 = vunpack.c.l.b16 %v5064
        %v5166 = vunpack.c.l.b16 %v5065
        %v5167 = vunpack.c.l.b16 %v5066
        %v5168 = vunpack.c.l.b16 %v5067
        %v5169 = vunpack.c.l.b16 %v5068
        %v5170 = vunpack.c.l.b16 %v5069
        %v5171 = vunpack.c.l.b16 %v5070
        %v5172 = vunpack.c.l.b16 %v5071
        %v5173 = vunpack.c.l.b16 %v5072
        %v5174 = vunpack.c.l.b16 %v5073
        %v5175 = vunpack.c.l.b16 %v5074
        %v5176 = vunpack.c.l.b16 %v5075
        %v5177 = vunpack.c.l.b16 %v5076
        %v5178 = vunpack.c.l.b16 %v5077
        %v5179 = vunpack.c.l.b16 %v5078
        %v5180 = vunpack.c.l.b16 %v5079
        %v5181 = vunpack.c.l.b16 %v5080
        %v5182 = vunpack.c.l.b16 %v5081
        %v5183 = vunpack.c.l.b16 %v5082
        %v5184 = vunpack.c.l.b16 %v5083
        %v5185 = vunpack.c.l.b16 %v5084
        %v5186 = vunpack.c.l.b16 %v5085
        %v5187 = vunpack.c.l.b16 %v5086
        %v5188 = vunpack.c.l.b16 %v5087
        %v5189 = vunpack.c.l.b16 %v5088
        %v5190 = vunpack.c.l.b16 %v5089
        %v5191 = vunpack.c.l.b16 %v5090
        %v5192 = vunpack.c.l.b16 %v5091
        %v5193 = vunpack.c.l.b16 %v5092
        %v5194 = vunpack.c.l.b16 %v5093
        %v5195 = vunpack.c.l.b16 %v5094
        %v5196 = vunpack.c.l.b16 %v5095
        %v5197 = vunpack.c.l.b16 %v5096
        %v5198 = vunpack.c.l.b16 %v5097
        %v5199 = vunpack.c.l.b16 %v5098
        %v5200 = vunpack.c.l.b16 %v5099
        %v5201 = vunpack.c.l.b16 %v5100
        %v5202 = vunpack.c.l.b16 %v5101
        %v5203 = vunpack.c.l.b16 %v5102
        %v5204 = vunpack.c.l.b16 %v5103
        %v5205 = vunpack.c.l.b16 %v5104
        %v5206 = vunpack.c.l.b16 %v5105
        %v5207 = vunpack.c.l.b16 %v5106
        %v5208 = vunpack.c.l.b16 %v5107
        %v5209 = vunpack.c.l.b16 %v5108
        %v5210 = vunpack.c.l.b16 %v5109
        %v5211 = vpack.c.b16 %v5164, %v5163
        %v5212 = vpack.c.b16 %v5166, %v5165
        %v5213 = vpack.c.b16 %v5168, %v5167
        %v5214 = vpack.c.b16 %v5170, %v5169
        %v5215 = vpack.c.b16 %v5172, %v5171
        %v5216 = vpack.c.b16 %v5174, %v5173
        %v5217 = vpack.c.b16 %v5176, %v5175
        %v5218 = vpack.c.b16 %v5178, %v5177
        %v5219 = vpack.c.b16 %v5180, %v5179
        %v5220 = vpack.c.b16 %v5182, %v5181
        %v5221 = vpack.c.b16 %v5184, %v5183
        %v5222 = vpack.c.b16 %v5186, %v5185
        %v5223 = vpack.c.b16 %v5188, %v5187
        %v5224 = vpack.c.b16 %v5190, %v5189
        %v5225 = vpack.c.b16 %v5192, %v5191
        %v5226 = vpack.c.b16 %v5194, %v5193
        %v5227 = vpack.c.b16 %v5196, %v5195
        %v5228 = vpack.c.b16 %v5198, %v5197
        %v5229 = vpack.c.b16 %v5200, %v5199
        %v5230 = vpack.c.b16 %v5202, %v5201
        %v5231 = vpack.c.b16 %v5204, %v5203
        %v5232 = vpack.c.b16 %v5206, %v5205
        %v5233 = vpack.c.b16 %v5208, %v5207
        %v5234 = vpack.c.b16 %v5210, %v5209
        %5259 = vmatprep.subr.bf16.mxu0 0
        %5260 = vmatpush1.bf16.msra.mxu0 %v5211
        %5261 = vmatprep.subr.bf16.mxu0 0
        %5262 = vmatpush1.bf16.msra.mxu0 %v5212
        %5263 = vmatprep.subr.bf16.mxu0 0
        %5264 = vmatpush1.bf16.msra.mxu0 %v5213
        %5265 = vmatprep.subr.bf16.mxu0 0
        %5266 = vmatpush1.bf16.msra.mxu0 %v5214
        %5267 = vmatprep.subr.bf16.mxu0 0
        %5268 = vmatpush1.bf16.msra.mxu0 %v5215
        %5269 = vmatprep.subr.bf16.mxu0 0
        %5270 = vmatpush1.bf16.msra.mxu0 %v5216
        %5271 = vmatprep.subr.bf16.mxu0 0
        %5272 = vmatpush1.bf16.msra.mxu0 %v5217
        %5273 = vmatprep.subr.bf16.mxu0 0
        %5274 = vmatpush1.bf16.msra.mxu0 %v5218
        %5275 = vmatprep.subr.bf16.mxu0 0
        %5276 = vmatpush1.bf16.msra.mxu0 %v5219
        %5277 = vmatprep.subr.bf16.mxu0 0
        %5278 = vmatpush1.bf16.msra.mxu0 %v5220
        %5279 = vmatprep.subr.bf16.mxu0 0
        %5280 = vmatpush1.bf16.msra.mxu0 %v5221
        %5281 = vmatprep.subr.bf16.mxu0 0
        %5282 = vmatpush1.bf16.msra.mxu0 %v5222
        %5283 = vmatprep.subr.bf16.mxu0 0
        %5284 = vmatpush1.bf16.msra.mxu0 %v5223
        %5285 = vmatprep.subr.bf16.mxu0 0
        %5286 = vmatpush1.bf16.msra.mxu0 %v5224
        %5287 = vmatprep.subr.bf16.mxu0 0
        %5288 = vmatpush1.bf16.msra.mxu0 %v5225
        %5289 = vmatprep.subr.bf16.mxu0 0
        %5290 = vmatpush1.bf16.msra.mxu0 %v5226
        %5291 = vmatprep.mubr.bf16.mxu0 %v5060
        %5292 = vmatmul.mubr.bf16.gmra.mrb[0].mxu0 %v5059
        %v5293 = vpop.f32.mrb[0].mxu0
        %v5294 = vadd.f32 %v5114, %v5293
        %v5295 = vpop.f32.mrb[0].mxu0
        %v5296 = vpop.f32.mrb[0].mxu0
        %v5297 = vpop.f32.mrb[0].mxu0
        %5298 = vdwg.mxu0
        %5299 = vmatprep.subr.bf16.mxu0 0
        %5300 = vmatpush1.bf16.msra.mxu0 %v5227
        %5301 = vmatprep.subr.bf16.mxu0 0
        %5302 = vmatpush1.bf16.msra.mxu0 %v5228
        %5303 = vmatprep.subr.bf16.mxu0 0
        %5304 = vmatpush1.bf16.msra.mxu0 %v5229
        %5305 = vmatprep.subr.bf16.mxu0 0
        %5306 = vmatpush1.bf16.msra.mxu0 %v5230
        %5307 = vmatprep.subr.bf16.mxu0 0
        %5308 = vmatpush1.bf16.msra.mxu0 %v5231
        %5309 = vmatprep.subr.bf16.mxu0 0
        %5310 = vmatpush1.bf16.msra.mxu0 %v5232
        %5311 = vmatprep.subr.bf16.mxu0 0
        %5312 = vmatpush1.bf16.msra.mxu0 %v5233
        %5313 = vmatprep.subr.bf16.mxu0 0
        %5314 = vmatpush1.bf16.msra.mxu0 %v5234
        %5315 = vmatprep.subr.bf16.mxu0 0
        %5316 = vmatpush1.bf16.msra.mxu0 0
        %5317 = vmatprep.subr.bf16.mxu0 0
        %5318 = vmatpush1.bf16.msra.mxu0 0
        %5319 = vmatprep.subr.bf16.mxu0 0
        %5320 = vmatpush1.bf16.msra.mxu0 0
        %5321 = vmatprep.subr.bf16.mxu0 0
        %5322 = vmatpush1.bf16.msra.mxu0 0
        %5323 = vmatprep.subr.bf16.mxu0 0
        %5324 = vmatpush1.bf16.msra.mxu0 0
        %5325 = vmatprep.subr.bf16.mxu0 0
        %5326 = vmatpush1.bf16.msra.mxu0 0
        %5327 = vmatprep.subr.bf16.mxu0 0
        %5328 = vmatpush1.bf16.msra.mxu0 0
        %5329 = vmatprep.subr.bf16.mxu0 0
        %5330 = vmatpush1.bf16.msra.mxu0 0
        %5331 = vmatprep.mubr.bf16.mxu0 0
        %5332 = vmatmul.mubr.bf16.gmra.mrb[0].mxu0 %v5061
        %v5333 = vpop.f32.mrb[0].mxu0
        %v5334 = vadd.f32 %v5294, %v5333
        %v5335 = vpop.f32.mrb[0].mxu0
        %v5336 = vpop.f32.mrb[0].mxu0
        %v5337 = vpop.f32.mrb[0].mxu0
        %5338 = vdwg.mxu0
        %v5339 = vadd.f32 %v5334, %v5055
        %v5340 = vmax.f32 %v5339, 0.0
        %5341 = vst.msk [vmem:[#allocation4 + $0x1] sm:$0x3] %vm3220, %v5340
        %5342 = vst [vmem:[#allocation4 + $0x3] sm:$0x1] 0.0
        %v5343 = vld [vmem:[#allocation4] sm:$0x3]
        %v5344 = vld [vmem:[#allocation4 + $0x1] sm:$0x3]
        %v5345 = vld [vmem:[#allocation4 + $0x2] sm:$0x3]
        %v5346 = vpack.c.bf16 %v5343, %v5343
        %v5347 = vpack.c.bf16 %v5344, %v5344
        %v5348 = vpack.c.bf16 %v5345, %v5345
        %v5349 = vld [vmem:[#allocation6 + $0xd40] sm:$0xf]
        %v5350 = vld [vmem:[#allocation6 + $0xd44] sm:$0xf]
        %v5351 = vld [vmem:[#allocation6 + $0xd48] sm:$0xf]
        %v5352 = vld [vmem:[#allocation6 + $0xd4c] sm:$0xf]
        %v5353 = vld [vmem:[#allocation6 + $0xd50] sm:$0xf]
        %v5354 = vld [vmem:[#allocation6 + $0xd54] sm:$0xf]
        %v5355 = vld [vmem:[#allocation6 + $0xd58] sm:$0xf]
        %v5356 = vld [vmem:[#allocation6 + $0xd5c] sm:$0xf]
        %v5357 = vld [vmem:[#allocation6 + $0xd60] sm:$0xf]
        %v5358 = vld [vmem:[#allocation6 + $0xd64] sm:$0xf]
        %v5359 = vld [vmem:[#allocation6 + $0xd68] sm:$0xf]
        %v5360 = vld [vmem:[#allocation6 + $0xd6c] sm:$0xf]
        %v5361 = vld [vmem:[#allocation6 + $0xd70] sm:$0xf]
        %v5362 = vld [vmem:[#allocation6 + $0xd74] sm:$0xf]
        %v5363 = vld [vmem:[#allocation6 + $0xd78] sm:$0xf]
        %v5364 = vld [vmem:[#allocation6 + $0xd7c] sm:$0xf]
        %v5365 = vld [vmem:[#allocation6 + $0xd80] sm:$0xf]
        %v5366 = vld [vmem:[#allocation6 + $0xd84] sm:$0xf]
        %v5367 = vld [vmem:[#allocation6 + $0xd88] sm:$0xf]
        %v5368 = vld [vmem:[#allocation6 + $0xd8c] sm:$0xf]
        %v5369 = vld [vmem:[#allocation6 + $0xd90] sm:$0xf]
        %v5370 = vld [vmem:[#allocation6 + $0xd94] sm:$0xf]
        %v5371 = vld [vmem:[#allocation6 + $0xd98] sm:$0xf]
        %v5372 = vld [vmem:[#allocation6 + $0xd9c] sm:$0xf]
        %v5373 = vld [vmem:[#allocation6 + $0xda0] sm:$0xf]
        %v5374 = vld [vmem:[#allocation6 + $0xda4] sm:$0xf]
        %v5375 = vld [vmem:[#allocation6 + $0xda8] sm:$0xf]
        %v5376 = vld [vmem:[#allocation6 + $0xdac] sm:$0xf]
        %v5377 = vld [vmem:[#allocation6 + $0xdb0] sm:$0xf]
        %v5378 = vld [vmem:[#allocation6 + $0xdb4] sm:$0xf]
        %v5379 = vld [vmem:[#allocation6 + $0xdb8] sm:$0xf]
        %v5380 = vld [vmem:[#allocation6 + $0xdbc] sm:$0xf]
        %v5381 = vld [vmem:[#allocation6 + $0xdc0] sm:$0xf]
        %v5382 = vld [vmem:[#allocation6 + $0xdc4] sm:$0xf]
        %v5383 = vld [vmem:[#allocation6 + $0xdc8] sm:$0xf]
        %v5384 = vld [vmem:[#allocation6 + $0xdcc] sm:$0xf]
        %v5385 = vld [vmem:[#allocation6 + $0xdd0] sm:$0xf]
        %v5386 = vld [vmem:[#allocation6 + $0xdd4] sm:$0xf]
        %v5387 = vld [vmem:[#allocation6 + $0xdd8] sm:$0xf]
        %v5388 = vld [vmem:[#allocation6 + $0xddc] sm:$0xf]
        %v5389 = vld [vmem:[#allocation6 + $0xde0] sm:$0xf]
        %v5390 = vld [vmem:[#allocation6 + $0xde4] sm:$0xf]
        %v5391 = vld [vmem:[#allocation6 + $0xde8] sm:$0xf]
        %v5392 = vld [vmem:[#allocation6 + $0xdec] sm:$0xf]
        %v5393 = vld [vmem:[#allocation6 + $0xdf0] sm:$0xf]
        %v5394 = vld [vmem:[#allocation6 + $0xdf4] sm:$0xf]
        %v5395 = vld [vmem:[#allocation6 + $0xdf8] sm:$0xf]
        %v5396 = vld [vmem:[#allocation6 + $0xdfc] sm:$0xf]
        %v5397 = vld [vmem:[#allocation8 + $0x13] sm:$0x1]
        %v5398 = vlaneseq
        %v5399 = vshrl.u32 %v5398, 7
        %v5400 = vsub.s32 0, %v5399
        %v5401 = vrot.slane %v5397, %v5400
        %v5450 = vunpack.c.l.b16 %v5349
        %v5451 = vunpack.c.l.b16 %v5350
        %v5452 = vunpack.c.l.b16 %v5351
        %v5453 = vunpack.c.l.b16 %v5352
        %v5454 = vunpack.c.l.b16 %v5353
        %v5455 = vunpack.c.l.b16 %v5354
        %v5456 = vunpack.c.l.b16 %v5355
        %v5457 = vunpack.c.l.b16 %v5356
        %v5458 = vunpack.c.l.b16 %v5357
        %v5459 = vunpack.c.l.b16 %v5358
        %v5460 = vunpack.c.l.b16 %v5359
        %v5461 = vunpack.c.l.b16 %v5360
        %v5462 = vunpack.c.l.b16 %v5361
        %v5463 = vunpack.c.l.b16 %v5362
        %v5464 = vunpack.c.l.b16 %v5363
        %v5465 = vunpack.c.l.b16 %v5364
        %v5466 = vunpack.c.l.b16 %v5365
        %v5467 = vunpack.c.l.b16 %v5366
        %v5468 = vunpack.c.l.b16 %v5367
        %v5469 = vunpack.c.l.b16 %v5368
        %v5470 = vunpack.c.l.b16 %v5369
        %v5471 = vunpack.c.l.b16 %v5370
        %v5472 = vunpack.c.l.b16 %v5371
        %v5473 = vunpack.c.l.b16 %v5372
        %v5474 = vunpack.c.l.b16 %v5373
        %v5475 = vunpack.c.l.b16 %v5374
        %v5476 = vunpack.c.l.b16 %v5375
        %v5477 = vunpack.c.l.b16 %v5376
        %v5478 = vunpack.c.l.b16 %v5377
        %v5479 = vunpack.c.l.b16 %v5378
        %v5480 = vunpack.c.l.b16 %v5379
        %v5481 = vunpack.c.l.b16 %v5380
        %v5482 = vunpack.c.l.b16 %v5381
        %v5483 = vunpack.c.l.b16 %v5382
        %v5484 = vunpack.c.l.b16 %v5383
        %v5485 = vunpack.c.l.b16 %v5384
        %v5486 = vunpack.c.l.b16 %v5385
        %v5487 = vunpack.c.l.b16 %v5386
        %v5488 = vunpack.c.l.b16 %v5387
        %v5489 = vunpack.c.l.b16 %v5388
        %v5490 = vunpack.c.l.b16 %v5389
        %v5491 = vunpack.c.l.b16 %v5390
        %v5492 = vunpack.c.l.b16 %v5391
        %v5493 = vunpack.c.l.b16 %v5392
        %v5494 = vunpack.c.l.b16 %v5393
        %v5495 = vunpack.c.l.b16 %v5394
        %v5496 = vunpack.c.l.b16 %v5395
        %v5497 = vunpack.c.l.b16 %v5396
        %v5498 = vpack.c.b16 %v5451, %v5450
        %v5499 = vpack.c.b16 %v5453, %v5452
        %v5500 = vpack.c.b16 %v5455, %v5454
        %v5501 = vpack.c.b16 %v5457, %v5456
        %v5502 = vpack.c.b16 %v5459, %v5458
        %v5503 = vpack.c.b16 %v5461, %v5460
        %v5504 = vpack.c.b16 %v5463, %v5462
        %v5505 = vpack.c.b16 %v5465, %v5464
        %v5506 = vpack.c.b16 %v5467, %v5466
        %v5507 = vpack.c.b16 %v5469, %v5468
        %v5508 = vpack.c.b16 %v5471, %v5470
        %v5509 = vpack.c.b16 %v5473, %v5472
        %v5510 = vpack.c.b16 %v5475, %v5474
        %v5511 = vpack.c.b16 %v5477, %v5476
        %v5512 = vpack.c.b16 %v5479, %v5478
        %v5513 = vpack.c.b16 %v5481, %v5480
        %v5514 = vpack.c.b16 %v5483, %v5482
        %v5515 = vpack.c.b16 %v5485, %v5484
        %v5516 = vpack.c.b16 %v5487, %v5486
        %v5517 = vpack.c.b16 %v5489, %v5488
        %v5518 = vpack.c.b16 %v5491, %v5490
        %v5519 = vpack.c.b16 %v5493, %v5492
        %v5520 = vpack.c.b16 %v5495, %v5494
        %v5521 = vpack.c.b16 %v5497, %v5496
        %5546 = vmatprep.subr.bf16.mxu0 0
        %5547 = vmatpush1.bf16.msra.mxu0 %v5498
        %5548 = vmatprep.subr.bf16.mxu0 0
        %5549 = vmatpush1.bf16.msra.mxu0 %v5499
        %5550 = vmatprep.subr.bf16.mxu0 0
        %5551 = vmatpush1.bf16.msra.mxu0 %v5500
        %5552 = vmatprep.subr.bf16.mxu0 0
        %5553 = vmatpush1.bf16.msra.mxu0 %v5501
        %5554 = vmatprep.subr.bf16.mxu0 0
        %5555 = vmatpush1.bf16.msra.mxu0 %v5502
        %5556 = vmatprep.subr.bf16.mxu0 0
        %5557 = vmatpush1.bf16.msra.mxu0 %v5503
        %5558 = vmatprep.subr.bf16.mxu0 0
        %5559 = vmatpush1.bf16.msra.mxu0 %v5504
        %5560 = vmatprep.subr.bf16.mxu0 0
        %5561 = vmatpush1.bf16.msra.mxu0 %v5505
        %5562 = vmatprep.subr.bf16.mxu0 0
        %5563 = vmatpush1.bf16.msra.mxu0 %v5506
        %5564 = vmatprep.subr.bf16.mxu0 0
        %5565 = vmatpush1.bf16.msra.mxu0 %v5507
        %5566 = vmatprep.subr.bf16.mxu0 0
        %5567 = vmatpush1.bf16.msra.mxu0 %v5508
        %5568 = vmatprep.subr.bf16.mxu0 0
        %5569 = vmatpush1.bf16.msra.mxu0 %v5509
        %5570 = vmatprep.subr.bf16.mxu0 0
        %5571 = vmatpush1.bf16.msra.mxu0 %v5510
        %5572 = vmatprep.subr.bf16.mxu0 0
        %5573 = vmatpush1.bf16.msra.mxu0 %v5511
        %5574 = vmatprep.subr.bf16.mxu0 0
        %5575 = vmatpush1.bf16.msra.mxu0 %v5512
        %5576 = vmatprep.subr.bf16.mxu0 0
        %5577 = vmatpush1.bf16.msra.mxu0 %v5513
        %5578 = vmatprep.mubr.bf16.mxu0 %v5347
        %5579 = vmatmul.mubr.bf16.gmra.mrb[0].mxu0 %v5346
        %v5580 = vpop.f32.mrb[0].mxu0
        %v5581 = vadd.f32 %v5401, %v5580
        %v5582 = vpop.f32.mrb[0].mxu0
        %v5583 = vpop.f32.mrb[0].mxu0
        %v5584 = vpop.f32.mrb[0].mxu0
        %5585 = vdwg.mxu0
        %5586 = vmatprep.subr.bf16.mxu0 0
        %5587 = vmatpush1.bf16.msra.mxu0 %v5514
        %5588 = vmatprep.subr.bf16.mxu0 0
        %5589 = vmatpush1.bf16.msra.mxu0 %v5515
        %5590 = vmatprep.subr.bf16.mxu0 0
        %5591 = vmatpush1.bf16.msra.mxu0 %v5516
        %5592 = vmatprep.subr.bf16.mxu0 0
        %5593 = vmatpush1.bf16.msra.mxu0 %v5517
        %5594 = vmatprep.subr.bf16.mxu0 0
        %5595 = vmatpush1.bf16.msra.mxu0 %v5518
        %5596 = vmatprep.subr.bf16.mxu0 0
        %5597 = vmatpush1.bf16.msra.mxu0 %v5519
        %5598 = vmatprep.subr.bf16.mxu0 0
        %5599 = vmatpush1.bf16.msra.mxu0 %v5520
        %5600 = vmatprep.subr.bf16.mxu0 0
        %5601 = vmatpush1.bf16.msra.mxu0 %v5521
        %5602 = vmatprep.subr.bf16.mxu0 0
        %5603 = vmatpush1.bf16.msra.mxu0 0
        %5604 = vmatprep.subr.bf16.mxu0 0
        %5605 = vmatpush1.bf16.msra.mxu0 0
        %5606 = vmatprep.subr.bf16.mxu0 0
        %5607 = vmatpush1.bf16.msra.mxu0 0
        %5608 = vmatprep.subr.bf16.mxu0 0
        %5609 = vmatpush1.bf16.msra.mxu0 0
        %5610 = vmatprep.subr.bf16.mxu0 0
        %5611 = vmatpush1.bf16.msra.mxu0 0
        %5612 = vmatprep.subr.bf16.mxu0 0
        %5613 = vmatpush1.bf16.msra.mxu0 0
        %5614 = vmatprep.subr.bf16.mxu0 0
        %5615 = vmatpush1.bf16.msra.mxu0 0
        %5616 = vmatprep.subr.bf16.mxu0 0
        %5617 = vmatpush1.bf16.msra.mxu0 0
        %5618 = vmatprep.mubr.bf16.mxu0 0
        %5619 = vmatmul.mubr.bf16.gmra.mrb[0].mxu0 %v5348
        %v5620 = vpop.f32.mrb[0].mxu0
        %v5621 = vadd.f32 %v5581, %v5620
        %v5622 = vpop.f32.mrb[0].mxu0
        %v5623 = vpop.f32.mrb[0].mxu0
        %v5624 = vpop.f32.mrb[0].mxu0
        %5625 = vdwg.mxu0
        %v5626 = vmax.f32 %v5621, 0.0
        %5627 = vst.msk [vmem:[#allocation5 + $0x1] sm:$0x3] %vm3220, %v5626
        %5628 = vst [vmem:[#allocation5 + $0x3] sm:$0x1] 0.0
        %v5629 = vld [vmem:[#allocation4 + $0x1] sm:$0x3]
        %v5630 = vld [vmem:[#allocation5] sm:$0x3]
        %v5631 = vld [vmem:[#allocation5 + $0x1] sm:$0x3]
        %v5632 = vld [vmem:[#allocation5 + $0x2] sm:$0x3]
        %v5633 = vpack.c.bf16 %v5630, %v5630
        %v5634 = vpack.c.bf16 %v5631, %v5631
        %v5635 = vpack.c.bf16 %v5632, %v5632
        %v5636 = vld [vmem:[#allocation6 + $0xe00] sm:$0xf]
        %v5637 = vld [vmem:[#allocation6 + $0xe04] sm:$0xf]
        %v5638 = vld [vmem:[#allocation6 + $0xe08] sm:$0xf]
        %v5639 = vld [vmem:[#allocation6 + $0xe0c] sm:$0xf]
        %v5640 = vld [vmem:[#allocation6 + $0xe10] sm:$0xf]
        %v5641 = vld [vmem:[#allocation6 + $0xe14] sm:$0xf]
        %v5642 = vld [vmem:[#allocation6 + $0xe18] sm:$0xf]
        %v5643 = vld [vmem:[#allocation6 + $0xe1c] sm:$0xf]
        %v5644 = vld [vmem:[#allocation6 + $0xe20] sm:$0xf]
        %v5645 = vld [vmem:[#allocation6 + $0xe24] sm:$0xf]
        %v5646 = vld [vmem:[#allocation6 + $0xe28] sm:$0xf]
        %v5647 = vld [vmem:[#allocation6 + $0xe2c] sm:$0xf]
        %v5648 = vld [vmem:[#allocation6 + $0xe30] sm:$0xf]
        %v5649 = vld [vmem:[#allocation6 + $0xe34] sm:$0xf]
        %v5650 = vld [vmem:[#allocation6 + $0xe38] sm:$0xf]
        %v5651 = vld [vmem:[#allocation6 + $0xe3c] sm:$0xf]
        %v5652 = vld [vmem:[#allocation6 + $0xe40] sm:$0xf]
        %v5653 = vld [vmem:[#allocation6 + $0xe44] sm:$0xf]
        %v5654 = vld [vmem:[#allocation6 + $0xe48] sm:$0xf]
        %v5655 = vld [vmem:[#allocation6 + $0xe4c] sm:$0xf]
        %v5656 = vld [vmem:[#allocation6 + $0xe50] sm:$0xf]
        %v5657 = vld [vmem:[#allocation6 + $0xe54] sm:$0xf]
        %v5658 = vld [vmem:[#allocation6 + $0xe58] sm:$0xf]
        %v5659 = vld [vmem:[#allocation6 + $0xe5c] sm:$0xf]
        %v5660 = vld [vmem:[#allocation6 + $0xe60] sm:$0xf]
        %v5661 = vld [vmem:[#allocation6 + $0xe64] sm:$0xf]
        %v5662 = vld [vmem:[#allocation6 + $0xe68] sm:$0xf]
        %v5663 = vld [vmem:[#allocation6 + $0xe6c] sm:$0xf]
        %v5664 = vld [vmem:[#allocation6 + $0xe70] sm:$0xf]
        %v5665 = vld [vmem:[#allocation6 + $0xe74] sm:$0xf]
        %v5666 = vld [vmem:[#allocation6 + $0xe78] sm:$0xf]
        %v5667 = vld [vmem:[#allocation6 + $0xe7c] sm:$0xf]
        %v5668 = vld [vmem:[#allocation6 + $0xe80] sm:$0xf]
        %v5669 = vld [vmem:[#allocation6 + $0xe84] sm:$0xf]
        %v5670 = vld [vmem:[#allocation6 + $0xe88] sm:$0xf]
        %v5671 = vld [vmem:[#allocation6 + $0xe8c] sm:$0xf]
        %v5672 = vld [vmem:[#allocation6 + $0xe90] sm:$0xf]
        %v5673 = vld [vmem:[#allocation6 + $0xe94] sm:$0xf]
        %v5674 = vld [vmem:[#allocation6 + $0xe98] sm:$0xf]
        %v5675 = vld [vmem:[#allocation6 + $0xe9c] sm:$0xf]
        %v5676 = vld [vmem:[#allocation6 + $0xea0] sm:$0xf]
        %v5677 = vld [vmem:[#allocation6 + $0xea4] sm:$0xf]
        %v5678 = vld [vmem:[#allocation6 + $0xea8] sm:$0xf]
        %v5679 = vld [vmem:[#allocation6 + $0xeac] sm:$0xf]
        %v5680 = vld [vmem:[#allocation6 + $0xeb0] sm:$0xf]
        %v5681 = vld [vmem:[#allocation6 + $0xeb4] sm:$0xf]
        %v5682 = vld [vmem:[#allocation6 + $0xeb8] sm:$0xf]
        %v5683 = vld [vmem:[#allocation6 + $0xebc] sm:$0xf]
        %v5684 = vld [vmem:[#allocation8 + $0x14] sm:$0x1]
        %v5685 = vlaneseq
        %v5686 = vshrl.u32 %v5685, 7
        %v5687 = vsub.s32 0, %v5686
        %v5688 = vrot.slane %v5684, %v5687
        %v5737 = vunpack.c.l.b16 %v5636
        %v5738 = vunpack.c.l.b16 %v5637
        %v5739 = vunpack.c.l.b16 %v5638
        %v5740 = vunpack.c.l.b16 %v5639
        %v5741 = vunpack.c.l.b16 %v5640
        %v5742 = vunpack.c.l.b16 %v5641
        %v5743 = vunpack.c.l.b16 %v5642
        %v5744 = vunpack.c.l.b16 %v5643
        %v5745 = vunpack.c.l.b16 %v5644
        %v5746 = vunpack.c.l.b16 %v5645
        %v5747 = vunpack.c.l.b16 %v5646
        %v5748 = vunpack.c.l.b16 %v5647
        %v5749 = vunpack.c.l.b16 %v5648
        %v5750 = vunpack.c.l.b16 %v5649
        %v5751 = vunpack.c.l.b16 %v5650
        %v5752 = vunpack.c.l.b16 %v5651
        %v5753 = vunpack.c.l.b16 %v5652
        %v5754 = vunpack.c.l.b16 %v5653
        %v5755 = vunpack.c.l.b16 %v5654
        %v5756 = vunpack.c.l.b16 %v5655
        %v5757 = vunpack.c.l.b16 %v5656
        %v5758 = vunpack.c.l.b16 %v5657
        %v5759 = vunpack.c.l.b16 %v5658
        %v5760 = vunpack.c.l.b16 %v5659
        %v5761 = vunpack.c.l.b16 %v5660
        %v5762 = vunpack.c.l.b16 %v5661
        %v5763 = vunpack.c.l.b16 %v5662
        %v5764 = vunpack.c.l.b16 %v5663
        %v5765 = vunpack.c.l.b16 %v5664
        %v5766 = vunpack.c.l.b16 %v5665
        %v5767 = vunpack.c.l.b16 %v5666
        %v5768 = vunpack.c.l.b16 %v5667
        %v5769 = vunpack.c.l.b16 %v5668
        %v5770 = vunpack.c.l.b16 %v5669
        %v5771 = vunpack.c.l.b16 %v5670
        %v5772 = vunpack.c.l.b16 %v5671
        %v5773 = vunpack.c.l.b16 %v5672
        %v5774 = vunpack.c.l.b16 %v5673
        %v5775 = vunpack.c.l.b16 %v5674
        %v5776 = vunpack.c.l.b16 %v5675
        %v5777 = vunpack.c.l.b16 %v5676
        %v5778 = vunpack.c.l.b16 %v5677
        %v5779 = vunpack.c.l.b16 %v5678
        %v5780 = vunpack.c.l.b16 %v5679
        %v5781 = vunpack.c.l.b16 %v5680
        %v5782 = vunpack.c.l.b16 %v5681
        %v5783 = vunpack.c.l.b16 %v5682
        %v5784 = vunpack.c.l.b16 %v5683
        %v5785 = vpack.c.b16 %v5738, %v5737
        %v5786 = vpack.c.b16 %v5740, %v5739
        %v5787 = vpack.c.b16 %v5742, %v5741
        %v5788 = vpack.c.b16 %v5744, %v5743
        %v5789 = vpack.c.b16 %v5746, %v5745
        %v5790 = vpack.c.b16 %v5748, %v5747
        %v5791 = vpack.c.b16 %v5750, %v5749
        %v5792 = vpack.c.b16 %v5752, %v5751
        %v5793 = vpack.c.b16 %v5754, %v5753
        %v5794 = vpack.c.b16 %v5756, %v5755
        %v5795 = vpack.c.b16 %v5758, %v5757
        %v5796 = vpack.c.b16 %v5760, %v5759
        %v5797 = vpack.c.b16 %v5762, %v5761
        %v5798 = vpack.c.b16 %v5764, %v5763
        %v5799 = vpack.c.b16 %v5766, %v5765
        %v5800 = vpack.c.b16 %v5768, %v5767
        %v5801 = vpack.c.b16 %v5770, %v5769
        %v5802 = vpack.c.b16 %v5772, %v5771
        %v5803 = vpack.c.b16 %v5774, %v5773
        %v5804 = vpack.c.b16 %v5776, %v5775
        %v5805 = vpack.c.b16 %v5778, %v5777
        %v5806 = vpack.c.b16 %v5780, %v5779
        %v5807 = vpack.c.b16 %v5782, %v5781
        %v5808 = vpack.c.b16 %v5784, %v5783
        %5833 = vmatprep.subr.bf16.mxu0 0
        %5834 = vmatpush1.bf16.msra.mxu0 %v5785
        %5835 = vmatprep.subr.bf16.mxu0 0
        %5836 = vmatpush1.bf16.msra.mxu0 %v5786
        %5837 = vmatprep.subr.bf16.mxu0 0
        %5838 = vmatpush1.bf16.msra.mxu0 %v5787
        %5839 = vmatprep.subr.bf16.mxu0 0
        %5840 = vmatpush1.bf16.msra.mxu0 %v5788
        %5841 = vmatprep.subr.bf16.mxu0 0
        %5842 = vmatpush1.bf16.msra.mxu0 %v5789
        %5843 = vmatprep.subr.bf16.mxu0 0
        %5844 = vmatpush1.bf16.msra.mxu0 %v5790
        %5845 = vmatprep.subr.bf16.mxu0 0
        %5846 = vmatpush1.bf16.msra.mxu0 %v5791
        %5847 = vmatprep.subr.bf16.mxu0 0
        %5848 = vmatpush1.bf16.msra.mxu0 %v5792
        %5849 = vmatprep.subr.bf16.mxu0 0
        %5850 = vmatpush1.bf16.msra.mxu0 %v5793
        %5851 = vmatprep.subr.bf16.mxu0 0
        %5852 = vmatpush1.bf16.msra.mxu0 %v5794
        %5853 = vmatprep.subr.bf16.mxu0 0
        %5854 = vmatpush1.bf16.msra.mxu0 %v5795
        %5855 = vmatprep.subr.bf16.mxu0 0
        %5856 = vmatpush1.bf16.msra.mxu0 %v5796
        %5857 = vmatprep.subr.bf16.mxu0 0
        %5858 = vmatpush1.bf16.msra.mxu0 %v5797
        %5859 = vmatprep.subr.bf16.mxu0 0
        %5860 = vmatpush1.bf16.msra.mxu0 %v5798
        %5861 = vmatprep.subr.bf16.mxu0 0
        %5862 = vmatpush1.bf16.msra.mxu0 %v5799
        %5863 = vmatprep.subr.bf16.mxu0 0
        %5864 = vmatpush1.bf16.msra.mxu0 %v5800
        %5865 = vmatprep.mubr.bf16.mxu0 %v5634
        %5866 = vmatmul.mubr.bf16.gmra.mrb[0].mxu0 %v5633
        %v5867 = vpop.f32.mrb[0].mxu0
        %v5868 = vadd.f32 %v5688, %v5867
        %v5869 = vpop.f32.mrb[0].mxu0
        %v5870 = vpop.f32.mrb[0].mxu0
        %v5871 = vpop.f32.mrb[0].mxu0
        %5872 = vdwg.mxu0
        %5873 = vmatprep.subr.bf16.mxu0 0
        %5874 = vmatpush1.bf16.msra.mxu0 %v5801
        %5875 = vmatprep.subr.bf16.mxu0 0
        %5876 = vmatpush1.bf16.msra.mxu0 %v5802
        %5877 = vmatprep.subr.bf16.mxu0 0
        %5878 = vmatpush1.bf16.msra.mxu0 %v5803
        %5879 = vmatprep.subr.bf16.mxu0 0
        %5880 = vmatpush1.bf16.msra.mxu0 %v5804
        %5881 = vmatprep.subr.bf16.mxu0 0
        %5882 = vmatpush1.bf16.msra.mxu0 %v5805
        %5883 = vmatprep.subr.bf16.mxu0 0
        %5884 = vmatpush1.bf16.msra.mxu0 %v5806
        %5885 = vmatprep.subr.bf16.mxu0 0
        %5886 = vmatpush1.bf16.msra.mxu0 %v5807
        %5887 = vmatprep.subr.bf16.mxu0 0
        %5888 = vmatpush1.bf16.msra.mxu0 %v5808
        %5889 = vmatprep.subr.bf16.mxu0 0
        %5890 = vmatpush1.bf16.msra.mxu0 0
        %5891 = vmatprep.subr.bf16.mxu0 0
        %5892 = vmatpush1.bf16.msra.mxu0 0
        %5893 = vmatprep.subr.bf16.mxu0 0
        %5894 = vmatpush1.bf16.msra.mxu0 0
        %5895 = vmatprep.subr.bf16.mxu0 0
        %5896 = vmatpush1.bf16.msra.mxu0 0
        %5897 = vmatprep.subr.bf16.mxu0 0
        %5898 = vmatpush1.bf16.msra.mxu0 0
        %5899 = vmatprep.subr.bf16.mxu0 0
        %5900 = vmatpush1.bf16.msra.mxu0 0
        %5901 = vmatprep.subr.bf16.mxu0 0
        %5902 = vmatpush1.bf16.msra.mxu0 0
        %5903 = vmatprep.subr.bf16.mxu0 0
        %5904 = vmatpush1.bf16.msra.mxu0 0
        %5905 = vmatprep.mubr.bf16.mxu0 0
        %5906 = vmatmul.mubr.bf16.gmra.mrb[0].mxu0 %v5635
        %v5907 = vpop.f32.mrb[0].mxu0
        %v5908 = vadd.f32 %v5868, %v5907
        %v5909 = vpop.f32.mrb[0].mxu0
        %v5910 = vpop.f32.mrb[0].mxu0
        %v5911 = vpop.f32.mrb[0].mxu0
        %5912 = vdwg.mxu0
        %v5913 = vadd.f32 %v5908, %v5629
        %v5914 = vmax.f32 %v5913, 0.0
        %5915 = vst.msk [vmem:[#allocation4 + $0x1] sm:$0x3] %vm3220, %v5914
        %5916 = vst [vmem:[#allocation4 + $0x3] sm:$0x1] 0.0
        %v5917 = vld [vmem:[#allocation4 + $0x1] sm:$0x3]
        %5918 = vst.msk [vmem:[%s198] sm:$0x3] %vm3220, %v5917
        %p5919 = scmp.lt.s32.totalorder %s16, 1
        %s5920 = scalar_select %p5919, %s16, 1
        %s5921 = smul.addr %s5920, 2
        %s5922 = scalar_lea.vmem %s3, %s5921
        // Predicated region
        $region41: #{forward.1} parent=31 // pred_check
          %p5923 = pneg %p102
        $region42: #{forward.1} parent=31 // pred_check_branch
          %5925 = sbr.rel (%p5923) target = $region44
        $region43: #{forward.1} parent=31 // pred_region
          _
        $region44: #{forward.1} parent=31 // pred_fallthru
          _
      $region32: #{forward.1} parent=5 // pred_fallthru
        _
      %p5926 = scmp.le.s32.totalorder 2, %s11
      // Predicated region
      $region45: #{forward.1} parent=5 // pred_check
        %p5927 = pneg %p5926
      $region46: #{forward.1} parent=5 // pred_check_branch
        %5929 = sbr.rel (%p5927) target = $region48
      $region47: #{forward.1} parent=5 // pred_region
        %s5930 = ssub.s32 %s11, 2
        // Predicated region
        $region49: #{forward.1} parent=47 // pred_check
          %p5931 = pneg %p108
        $region50: #{forward.1} parent=47 // pred_check_branch
          %5933 = sbr.rel (%p5931) target = $region52
        $region51: #{forward.1} parent=47 // pred_region
          %p5934 = scmp.lt.s32.totalorder %s17, 1
          %s5935 = scalar_select %p5934, %s17, 1
          %s5936 = smul.addr %s5935, 2
          %s5937 = scalar_lea.vmem %s3, %s5936
        $region52: #{forward.1} parent=47 // pred_fallthru
          _
      $region48: #{forward.1} parent=5 // pred_fallthru
        _
    $region6: #{forward.1} parent=1 // loop_footer
      %s15 = sadd.s32 1, %s11
    $region7: #{forward.1} parent=1 // loop_footer_branch
      %10 = sbr.rel target = $region3
    $region8: #{forward.1} parent=1 // loop_exit
      _
    %5938 = vsyncpa [#allocation7], 1
    %s5939 = scalar_lea.sflag [#allocation7], 1
    %5940 = vsyncpa %s5939, 1
    %5941 = vsyncpa [#allocation9], 1

</llo_original>
